<compile_context>
chip_gen: v7x
topology: tpu7x:2x2x1
jax: 0.10.0
libtpu: 0.0.40
codegen_flags: <defaults>
</compile_context>

<pallas_src>
import jax
import jax.numpy as jnp
from jax.experimental import pallas as pl
from jax.experimental.pallas import tpu as pltpu

_EPS = 1e-5


def _bn_scale_offset(bn, eps=_EPS):
    scale = bn['gamma'] * jax.lax.rsqrt(bn['var'] + eps)
    offset = bn['beta'] - bn['mean'] * scale
    return scale, offset


# ----------------------------------------------------------------------------
# In-kernel helpers: all operate on (HW, C) f32 values of one image.
# ----------------------------------------------------------------------------

def _col_index(HW, W):
    """Column index (x coordinate) of each flattened spatial position."""
    it = jax.lax.broadcasted_iota(jnp.int32, (HW, 1), 0)
    if W & (W - 1) == 0:                      # power of two (true at CIFAR sizes)
        return jnp.bitwise_and(it, W - 1)
    return it % W


def _shift_rows(a, s):
    """shifted[p] = a[p + s]; zero where p + s falls outside [0, rows)."""
    rows, c = a.shape
    if s == 0:
        return a
    if s > 0:
        return jnp.concatenate(
            [a[s:, :], jnp.zeros((s, c), a.dtype)], axis=0)
    return jnp.concatenate(
        [jnp.zeros((-s, c), a.dtype), a[:rows + s, :]], axis=0)


def _tap_value(a, colp, W, dy, dx, dil):
    """Shifted-window tap for a same-size 3x3 conv (pad = dil), zero-padded
    semantics enforced by the row shift + column mask."""
    s = dil * ((dy - 1) * W + (dx - 1))
    sh = _shift_rows(a, s)
    dxo = dil * (dx - 1)
    if dxo != 0:
        cm = jnp.logical_and(colp + dxo >= 0, colp + dxo < W)
        sh = jnp.where(cm, sh, 0.0)
    return sh


def _conv3x3_into(acc_ref, a, w_ref, colp, W, dil=1):
    """Dense (or block-diag-expanded grouped) 3x3 conv: 9 shifted-window bf16
    matmuls accumulated into the VMEM scratch acc_ref.  w_ref: (9, Cin, Cout)."""
    acc_ref[...] = jnp.dot(a.astype(jnp.bfloat16), w_ref[4],
                           preferred_element_type=jnp.float32)
    for t in range(9):
        if t == 4:
            continue
        dy, dx = divmod(t, 3)
        sh = _tap_value(a, colp, W, dy, dx, dil)
        acc_ref[...] += jnp.dot(sh.astype(jnp.bfloat16), w_ref[t],
                                preferred_element_type=jnp.float32)


def _depthwise3x3(a, w_taps, colp, W, dil):
    """Depthwise 3x3 (optionally dilated) conv, pure VPU. w_taps: (9, C) value."""
    acc = a * w_taps[4:5, :]
    for t in range(9):
        if t == 4:
            continue
        dy, dx = divmod(t, 3)
        sh = _tap_value(a, colp, W, dy, dx, dil)
        acc = acc + sh * w_taps[t:t + 1, :]
    return acc


def _ctx_softmax_pool(v, w_row):
    """1x1 (C->1) context projection + spatial softmax + weighted pool.
    The 1x1 conv bias is dropped: softmax over HW is shift invariant."""
    lg = jnp.sum(v * w_row, axis=1, keepdims=True)                 # (HW, 1)
    m = jnp.max(lg, axis=0, keepdims=True)
    e = jnp.exp(lg - m)
    inv = pl.reciprocal(jnp.sum(e, axis=0, keepdims=True), approx=True)
    wgt = e * inv
    return jnp.sum(v * wgt, axis=0, keepdims=True)                 # (1, C)


def _attention_pools_from(feat, bn_val, dw_val, cw_val, colp, W):
    """Forget-gate pool + the two depthwise-branch pools, from the feature map
    held in VMEM.  Returns a (3, C) value: [forget, 3x3, 5x5]."""
    pf = _ctx_softmax_pool(feat, cw_val[0:1, :])
    a3 = jnp.maximum(feat * bn_val[0:1, :] + bn_val[1:2, :], 0.0)
    p3 = _ctx_softmax_pool(_depthwise3x3(a3, dw_val[0:9, :], colp, W, 1),
                           cw_val[1:2, :])
    a5 = jnp.maximum(feat * bn_val[2:3, :] + bn_val[3:4, :], 0.0)
    p5 = _ctx_softmax_pool(_depthwise3x3(a5, dw_val[9:18, :], colp, W, 2),
                           cw_val[2:3, :])
    return jnp.concatenate([pf, p3, p5], axis=0)


# ----------------------------------------------------------------------------
# Kernel factories
# ----------------------------------------------------------------------------

def _make_conv0_kernel(HW, W):
    def kernel(x_ref, w_ref, o_ref, acc_ref):
        colp = _col_index(HW, W)
        _conv3x3_into(acc_ref, x_ref[0], w_ref, colp, W, dil=1)
        o_ref[0] = acc_ref[...]
    return kernel


def _make_main_kernel(HW, W, with_pools):
    """BN+ReLU + 1x1 conv + BN+ReLU + 3x3 conv (stride handled outside),
    optionally fused with the forget/3x3/5x5 context pools (_SMG path)."""
    if with_pools:
        def kernel(x_ref, s1_ref, o1_ref, w1_ref, s2_ref, o2_ref, w2_ref,
                   bn_ref, dw_ref, cw_ref, feat_ref, pool_ref, acc_ref):
            colp = _col_index(HW, W)
            x = jnp.maximum(x_ref[0] * s1_ref[...] + o1_ref[...], 0.0)
            y1 = jnp.dot(x.astype(jnp.bfloat16), w1_ref[...],
                         preferred_element_type=jnp.float32)
            a = jnp.maximum(y1 * s2_ref[...] + o2_ref[...], 0.0)
            _conv3x3_into(acc_ref, a, w2_ref, colp, W, dil=1)
            feat = acc_ref[...]
            feat_ref[0] = feat
            pool_ref[0] = _attention_pools_from(
                feat, bn_ref[...], dw_ref[...], cw_ref[...], colp, W)
        return kernel

    def kernel(x_ref, s1_ref, o1_ref, w1_ref, s2_ref, o2_ref, w2_ref,
               feat_ref, acc_ref):
        colp = _col_index(HW, W)
        x = jnp.maximum(x_ref[0] * s1_ref[...] + o1_ref[...], 0.0)
        y1 = jnp.dot(x.astype(jnp.bfloat16), w1_ref[...],
                     preferred_element_type=jnp.float32)
        a = jnp.maximum(y1 * s2_ref[...] + o2_ref[...], 0.0)
        _conv3x3_into(acc_ref, a, w2_ref, colp, W, dil=1)
        feat_ref[0] = acc_ref[...]
    return kernel


def _make_attn_pool_kernel(HW, W):
    def kernel(x_ref, bn_ref, dw_ref, cw_ref, pool_ref):
        colp = _col_index(HW, W)
        pool_ref[0] = _attention_pools_from(
            x_ref[0], bn_ref[...], dw_ref[...], cw_ref[...], colp, W)
    return kernel


def _make_head_kernel(HW):
    inv = 1.0 / HW

    def kernel(x_ref, sc_ref, of_ref, wc_ref, bc_ref, emb_ref, log_ref):
        x = jnp.maximum(x_ref[0] * sc_ref[...] + of_ref[...], 0.0)   # (HW, C)
        emb = jnp.sum(x, axis=0, keepdims=True) * inv                # (1, C)
        emb_ref[0] = emb
        log_ref[0] = jnp.dot(emb, wc_ref[...],
                             preferred_element_type=jnp.float32) + bc_ref[...]
    return kernel


# ----------------------------------------------------------------------------
# Wrappers / operand packing
# ----------------------------------------------------------------------------

def _parallel():
    return pltpu.CompilerParams(dimension_semantics=("parallel",))


def _expand_grouped_weight(w, groups):
    cout, cin_g, k, _ = w.shape
    cout_g = cout // groups
    w_g = w.reshape(groups, cout_g, cin_g, k, k)
    eye = jnp.eye(groups, dtype=w.dtype)
    wd = jnp.einsum('gh,goikl->gohikl', eye, w_g)
    return wd.reshape(cout, groups * cin_g, k, k)


def _conv12_operands(p1, p2):
    """Pack operands for the fused BN+ReLU+1x1 + BN+ReLU+3x3 kernel."""
    s1, o1 = _bn_scale_offset(p1['bn'])
    w1 = p1['conv']['w']                               # (Cmid, Cin, 1, 1)
    Cmid, Cin = w1.shape[0], w1.shape[1]
    w1m = jnp.transpose(w1.reshape(Cmid, Cin)).astype(jnp.bfloat16)   # (Cin,Cmid)
    s2, o2 = _bn_scale_offset(p2['bn'])
    w2 = p2['conv']['w']                               # (Cout, Cmid/g, 3, 3)
    Cout = w2.shape[0]
    if p2['conv']['groups'] > 1:
        w2 = _expand_grouped_weight(w2, p2['conv']['groups'])
    w2t = jnp.transpose(w2, (2, 3, 1, 0)).reshape(9, Cmid, Cout)
    w2t = w2t.astype(jnp.bfloat16)
    return (s1.reshape(1, Cin), o1.reshape(1, Cin), w1m,
            s2.reshape(1, Cmid), o2.reshape(1, Cmid), w2t, Cin, Cmid, Cout)


def _attention_operands(p, C):
    """Pack operands of the fused forget/3x3/5x5 pooling stage."""
    s3, o3 = _bn_scale_offset(p['conv_3x3']['bn'])
    s5, o5 = _bn_scale_offset(p['conv_5x5']['bn'])
    bnp = jnp.stack([s3, o3, s5, o5], axis=0)                         # (4, C)
    w3 = jnp.transpose(p['conv_3x3']['conv']['w'][:, 0], (1, 2, 0)).reshape(9, C)
    w5 = jnp.transpose(p['conv_5x5']['conv']['w'][:, 0], (1, 2, 0)).reshape(9, C)
    dww = jnp.concatenate([w3, w5], axis=0)                           # (18, C)
    cw = jnp.concatenate([p['global_forget_context']['w'].reshape(1, C),
                          p['global_context3x3']['w'].reshape(1, C),
                          p['global_context5x5']['w'].reshape(1, C)], axis=0)
    return bnp, dww, cw


def conv0_forward(x_nhwc, conv):
    """Plain 3x3 conv (pad 1, stride 1, bias=False) — one fused kernel."""
    N, H, W, Cin = x_nhwc.shape
    HW = H * W
    w = conv['w']
    Cout = w.shape[0]
    w_taps = jnp.transpose(w, (2, 3, 1, 0)).reshape(9, Cin, Cout)
    w_taps = w_taps.astype(jnp.bfloat16)
    y = pl.pallas_call(
        _make_conv0_kernel(HW, W),
        out_shape=jax.ShapeDtypeStruct((N, HW, Cout), jnp.float32),
        grid=(N,),
        in_specs=[pl.BlockSpec((1, HW, Cin), lambda n: (n, 0, 0)),
                  pl.BlockSpec((9, Cin, Cout), lambda n: (0, 0, 0))],
        out_specs=pl.BlockSpec((1, HW, Cout), lambda n: (n, 0, 0)),
        scratch_shapes=[pltpu.VMEM((HW, Cout), jnp.float32)],
        compiler_params=_parallel(),
    )(x_nhwc.reshape(N, HW, Cin), w_taps)
    return y.reshape(N, H, W, Cout)


def smg_main(x_nhwc, p):
    """Fused _SMG main path: conv1_1x1 + conv2_3x3 + forget/3x3/5x5 pools."""
    N, H, W, Cin = x_nhwc.shape
    HW = H * W
    (s1, o1, w1m, s2, o2, w2t, _, Cmid, Cout) = _conv12_operands(
        p['conv1_1x1'], p['conv2_3x3'])
    bnp, dww, cw = _attention_operands(p, Cout)
    feat, pools = pl.pallas_call(
        _make_main_kernel(HW, W, with_pools=True),
        out_shape=(jax.ShapeDtypeStruct((N, HW, Cout), jnp.float32),
                   jax.ShapeDtypeStruct((N, 3, Cout), jnp.float32)),
        grid=(N,),
        in_specs=[pl.BlockSpec((1, HW, Cin), lambda n: (n, 0, 0)),
                  pl.BlockSpec((1, Cin), lambda n: (0, 0)),
                  pl.BlockSpec((1, Cin), lambda n: (0, 0)),
                  pl.BlockSpec((Cin, Cmid), lambda n: (0, 0)),
                  pl.BlockSpec((1, Cmid), lambda n: (0, 0)),
                  pl.BlockSpec((1, Cmid), lambda n: (0, 0)),
                  pl.BlockSpec((9, Cmid, Cout), lambda n: (0, 0, 0)),
                  pl.BlockSpec((4, Cout), lambda n: (0, 0)),
                  pl.BlockSpec((18, Cout), lambda n: (0, 0)),
                  pl.BlockSpec((3, Cout), lambda n: (0, 0))],
        out_specs=(pl.BlockSpec((1, HW, Cout), lambda n: (n, 0, 0)),
                   pl.BlockSpec((1, 3, Cout), lambda n: (n, 0, 0))),
        scratch_shapes=[pltpu.VMEM((HW, Cout), jnp.float32)],
        compiler_params=_parallel(),
    )(x_nhwc.reshape(N, HW, Cin), s1, o1, w1m, s2, o2, w2t, bnp, dww, cw)
    return feat.reshape(N, H, W, Cout), pools


def transition_conv(x_nhwc, p1, p2):
    """Fused conv1_1x1 + conv2_3x3 for _Transition (stride-2 handled by
    subsampling the mathematically identical stride-1 output)."""
    N, H, W, Cin = x_nhwc.shape
    HW = H * W
    (s1, o1, w1m, s2, o2, w2t, _, Cmid, Cout) = _conv12_operands(p1, p2)
    stride = p2['conv']['stride']
    y = pl.pallas_call(
        _make_main_kernel(HW, W, with_pools=False),
        out_shape=jax.ShapeDtypeStruct((N, HW, Cout), jnp.float32),
        grid=(N,),
        in_specs=[pl.BlockSpec((1, HW, Cin), lambda n: (n, 0, 0)),
                  pl.BlockSpec((1, Cin), lambda n: (0, 0)),
                  pl.BlockSpec((1, Cin), lambda n: (0, 0)),
                  pl.BlockSpec((Cin, Cmid), lambda n: (0, 0)),
                  pl.BlockSpec((1, Cmid), lambda n: (0, 0)),
                  pl.BlockSpec((1, Cmid), lambda n: (0, 0)),
                  pl.BlockSpec((9, Cmid, Cout), lambda n: (0, 0, 0))],
        out_specs=pl.BlockSpec((1, HW, Cout), lambda n: (n, 0, 0)),
        scratch_shapes=[pltpu.VMEM((HW, Cout), jnp.float32)],
        compiler_params=_parallel(),
    )(x_nhwc.reshape(N, HW, Cin), s1, o1, w1m, s2, o2, w2t)
    y = y.reshape(N, H, W, Cout)
    if stride > 1:
        y = y[:, ::stride, ::stride, :]
    return y


def attention_pools(x_nhwc, p):
    """Fused forget-gate + 3x3 + 5x5 branch pooling (used by _Transition)."""
    N, H, W, C = x_nhwc.shape
    HW = H * W
    bnp, dww, cw = _attention_operands(p, C)
    return pl.pallas_call(
        _make_attn_pool_kernel(HW, W),
        out_shape=jax.ShapeDtypeStruct((N, 3, C), jnp.float32),
        grid=(N,),
        in_specs=[pl.BlockSpec((1, HW, C), lambda n: (n, 0, 0)),
                  pl.BlockSpec((4, C), lambda n: (0, 0)),
                  pl.BlockSpec((18, C), lambda n: (0, 0)),
                  pl.BlockSpec((3, C), lambda n: (0, 0))],
        out_specs=pl.BlockSpec((1, 3, C), lambda n: (n, 0, 0)),
        compiler_params=_parallel(),
    )(x_nhwc.reshape(N, HW, C), bnp, dww, cw)


def head(x_nhwc, bn, cls):
    """norm5 + ReLU + global mean pool + classifier, fused in one kernel."""
    N, H, W, C = x_nhwc.shape
    HW = H * W
    scale, offset = _bn_scale_offset(bn)
    wc = jnp.transpose(cls['w'])                        # (C, num_classes)
    nc = wc.shape[1]
    emb, logits = pl.pallas_call(
        _make_head_kernel(HW),
        out_shape=(jax.ShapeDtypeStruct((N, 1, C), jnp.float32),
                   jax.ShapeDtypeStruct((N, 1, nc), jnp.float32)),
        grid=(N,),
        in_specs=[pl.BlockSpec((1, HW, C), lambda n: (n, 0, 0)),
                  pl.BlockSpec((1, C), lambda n: (0, 0)),
                  pl.BlockSpec((1, C), lambda n: (0, 0)),
                  pl.BlockSpec((C, nc), lambda n: (0, 0)),
                  pl.BlockSpec((1, nc), lambda n: (0, 0))],
        out_specs=(pl.BlockSpec((1, 1, C), lambda n: (n, 0, 0)),
                   pl.BlockSpec((1, 1, nc), lambda n: (n, 0, 0))),
        compiler_params=_parallel(),
    )(x_nhwc.reshape(N, HW, C), scale.reshape(1, C), offset.reshape(1, C),
      wc, cls['b'].reshape(1, nc))
    return emb.reshape(N, C), logits.reshape(N, nc)


# ----------------------------------------------------------------------------
# Tiny (N,C)-vector gate / FC math and the final broadcast combine stay in
# jnp/XLA — a padded Pallas launch there is pure overhead at these sizes.
# ----------------------------------------------------------------------------

def _fc(v, p):
    w = p['w'].reshape(p['w'].shape[0], p['w'].shape[1])      # (Cout, Cin)
    y = v @ w.T
    if p['b'] is not None:
        y = y + p['b']
    return y


def _bn1d(v, bn, eps=_EPS):
    scale = bn['gamma'] * jax.lax.rsqrt(bn['var'] + eps)
    return v * scale + (bn['beta'] - bn['mean'] * scale)


def attention_combine(x_shortcut, pools, p):
    """Gate / attention vector math + x*gate + new_x broadcast combine."""
    pf, p3, p5 = pools[:, 0, :], pools[:, 1, :], pools[:, 2, :]
    t = jnp.tanh(_bn1d(_fc(pf, p['fc1']), p['bn_forget']))
    gate = jax.nn.sigmoid(_fc(t, p['fc2']))                          # (N, C)
    att = jnp.tanh(_bn1d(_fc(jnp.concatenate([p3, p5], axis=1), p['fcall']),
                         p['bn_attention']))
    w3 = _fc(att, p['fc3x3'])
    w5 = _fc(att, p['fc5x5'])
    wa = jax.nn.softmax(jnp.stack([w3, w5], axis=1), axis=1)
    new_x = wa[:, 0, :] * p3 + wa[:, 1, :] * p5                      # (N, C)
    return x_shortcut * gate[:, None, None, :] + new_x[:, None, None, :]


def smg_forward(x, p):
    x_dense = x
    feat, pools = smg_main(x, p)
    comb = attention_combine(feat, pools, p)
    return jnp.concatenate([x_dense, comb], axis=-1)     # channel concat (NHWC)


def transition_forward(x, p):
    y = transition_conv(x, p['conv1_1x1'], p['conv2_3x3'])
    pools = attention_pools(y, p)
    return attention_combine(y, pools, p)


def hcgnet_forward(params, x_nchw):
    x = jnp.transpose(x_nchw, (0, 2, 3, 1)).astype(jnp.float32)  # -> NHWC
    feats = []
    x = conv0_forward(x, params['conv0'])
    for lyr in params['HybridBlock1']:
        x = smg_forward(x, lyr)
    x = transition_forward(x, params['Transition1'])
    feats.append(jnp.transpose(x, (0, 3, 1, 2)))                 # NCHW feat
    for lyr in params['HybridBlock2']:
        x = smg_forward(x, lyr)
    x = transition_forward(x, params['Transition2'])
    feats.append(jnp.transpose(x, (0, 3, 1, 2)))                 # NCHW feat
    for lyr in params['HybridBlock3']:
        x = smg_forward(x, lyr)
    embedding, logits = head(x, params['norm5'], params['classifier'])
    feats.append(embedding)
    return feats, logits


# ----------------------------------------------------------------------------
# Deterministic parameter initialization (mirrors the module's __init__ shapes)
# ----------------------------------------------------------------------------

class KeyGen:
    def __init__(self, key):
        self.key = key

    def __call__(self):
        self.key, k = jax.random.split(self.key)
        return k


def init_conv(kg, cin, cout, k, stride=1, padding=0, dilation=1, groups=1,
              bias=True):
    return {
        'w': 0.1 * jax.random.normal(kg(), (cout, cin // groups, k, k),
                                     jnp.float32),
        'b': (0.05 * jax.random.normal(kg(), (cout,), jnp.float32)
              if bias else None),
        'stride': stride, 'padding': padding, 'dilation': dilation,
        'groups': groups,
    }


def init_bn(kg, c):
    return {
        'gamma': 1.0 + 0.1 * jax.random.normal(kg(), (c,), jnp.float32),
        'beta': 0.1 * jax.random.normal(kg(), (c,), jnp.float32),
        'mean': 0.1 * jax.random.normal(kg(), (c,), jnp.float32),
        'var': 0.5 + jax.random.uniform(kg(), (c,), jnp.float32),
    }


def init_basic_conv(kg, cin, cout, k, stride=1, padding=0, dilation=1,
                    groups=1):
    return {'bn': init_bn(kg, cin),
            'conv': init_conv(kg, cin, cout, k, stride, padding, dilation,
                              groups, bias=False)}


def _init_attention_tail(kg, c, rf, ff):
    return {
        'conv_3x3': init_basic_conv(kg, c, c, 3, padding=1, groups=c),
        'conv_5x5': init_basic_conv(kg, c, c, 3, padding=2, dilation=2,
                                    groups=c),
        'global_context3x3': init_conv(kg, c, 1, 1),
        'global_context5x5': init_conv(kg, c, 1, 1),
        'fcall': init_conv(kg, 2 * c, 2 * c // rf, 1),
        'bn_attention': init_bn(kg, 2 * c // rf),
        'fc3x3': init_conv(kg, 2 * c // rf, c, 1),
        'fc5x5': init_conv(kg, 2 * c // rf, c, 1),
        'global_forget_context': init_conv(kg, c, 1, 1),
        'bn_forget': init_bn(kg, c // ff),
        'fc1': init_conv(kg, c, c // ff, 1),
        'fc2': init_conv(kg, c // ff, c, 1),
    }


def init_smg(kg, in_ch, growth, bn_size=4, groups=4, rf=2, ff=2):
    p = {
        'conv1_1x1': init_basic_conv(kg, in_ch, bn_size * growth, 1),
        'conv2_3x3': init_basic_conv(kg, bn_size * growth, growth, 3,
                                     padding=1, groups=groups),
    }
    p.update(_init_attention_tail(kg, growth, rf, ff))
    return p


def init_transition(kg, in_ch, out_ch, rf=4, ff=4):
    reduce_ch = (in_ch - out_ch) // 2
    p = {
        'conv1_1x1': init_basic_conv(kg, in_ch, in_ch - reduce_ch, 1),
        'conv2_3x3': init_basic_conv(kg, in_ch - reduce_ch, out_ch, 3,
                                     stride=2, padding=1),
    }
    p.update(_init_attention_tail(kg, out_ch, rf, ff))
    return p


def init_hcgnet_params(key, growth_rate=(4, 4, 8), block_config=(1, 1, 1),
                       bn_size=4, theta=0.5, num_classes=10):
    kg = KeyGen(key)
    params = {}
    num_init = 2 * growth_rate[0]
    params['conv0'] = init_conv(kg, 3, num_init, 3, padding=1, bias=False)
    num_feature = num_init
    for i, num_layers in enumerate(block_config):
        layers = []
        for j in range(num_layers):
            layers.append(init_smg(kg, num_feature + growth_rate[i] * j,
                                   growth_rate[i], bn_size))
        params['HybridBlock%d' % (i + 1)] = layers
        num_feature += growth_rate[i] * num_layers
        if i != len(block_config) - 1:
            out_ch = int(num_feature * theta)
            params['Transition%d' % (i + 1)] = init_transition(kg, num_feature,
                                                               out_ch)
            num_feature = out_ch
    params['norm5'] = init_bn(kg, num_feature)
    params['classifier'] = {
        'w': 0.1 * jax.random.normal(kg(), (num_classes, num_feature),
                                     jnp.float32),
        'b': 0.05 * jax.random.normal(kg(), (num_classes,), jnp.float32),
    }
    return params


# ----------------------------------------------------------------------------

if __name__ == "__main__":
    key = jax.random.PRNGKey(0)
    pkey, xkey = jax.random.split(key)
    # Small HCGNet: growth_rate=(4,4,8), one SMG per hybrid block, 16x16 input.
    params = init_hcgnet_params(pkey, growth_rate=(4, 4, 8),
                                block_config=(1, 1, 1), bn_size=4,
                                theta=0.5, num_classes=10)
    x = jax.random.normal(xkey, (2, 3, 16, 16), jnp.float32)   # NCHW input

    feats, logits = hcgnet_forward(params, x)
    jax.block_until_ready(logits)
    for f in feats:
        jax.block_until_ready(f)

    assert logits.shape == (2, 10)
    assert feats[0].shape == (2, 6, 8, 8)     # after Transition1
    assert feats[1].shape == (2, 5, 4, 4)     # after Transition2
    assert feats[2].shape == (2, 13)          # embedding
    print("KERNEL_OK")
</pallas_src>

<mosaic_0001>
module attributes {stable_mosaic.version = 11 : i64} {
  func.func @kernel(%arg0: i32, %arg1: memref<1x256x3xf32, #tpu.memory_space<vmem>>, %arg2: memref<9x3x8xbf16, #tpu.memory_space<vmem>>, %arg3: memref<1x256x8xf32, #tpu.memory_space<vmem>>, %arg4: memref<256x8xf32, #tpu.memory_space<vmem>>) attributes {dimension_semantics = [#tpu.dimension_semantics<parallel>], iteration_bounds = array<i64: 2>, scalar_prefetch = 0 : i64, scratch_operands = 1 : i64, tpu.core_type = #tpu.core_type<tc>, window_params = [{transform_indices = @transform_0, window_bounds = array<i64: 1, 256, 3>}, {pipeline_mode = #tpu.pipeline_mode<synchronous>, transform_indices = @transform_1, window_bounds = array<i64: 9, 3, 8>}, {transform_indices = @transform_2, window_bounds = array<i64: 1, 256, 8>}]} {
    %0 = tpu.iota {dimensions = array<i32: 0>} : vector<256x1xi32>
    %c15_i32 = arith.constant 15 : i32
    %1 = vector.broadcast %c15_i32 : i32 to vector<256x1xi32>
    %2 = arith.andi %0, %1 : vector<256x1xi32>
    %c0 = arith.constant 0 : index
    %c0_0 = arith.constant 0 : index
    %c0_1 = arith.constant 0 : index
    %3 = vector.load %arg1[%c0, %c0_0, %c0_1] : memref<1x256x3xf32, #tpu.memory_space<vmem>>, vector<1x256x3xf32>
    %4 = vector.shape_cast %3 : vector<1x256x3xf32> to vector<256x3xf32>
    %5 = arith.truncf %4 : vector<256x3xf32> to vector<256x3xbf16>
    %c4 = arith.constant 4 : index
    %c0_2 = arith.constant 0 : index
    %c0_3 = arith.constant 0 : index
    %6 = vector.load %arg2[%c4, %c0_2, %c0_3] : memref<9x3x8xbf16, #tpu.memory_space<vmem>>, vector<1x3x8xbf16>
    %7 = vector.shape_cast %6 : vector<1x3x8xbf16> to vector<3x8xbf16>
    %cst = arith.constant dense<0.000000e+00> : vector<256x8xf32>
    %8 = tpu.matmul %5, %7, %cst {dimension_numbers = #tpu.dot_dimension_numbers<[1], [0], [0], [1], [0, 0, 1, 1], [], []>} : vector<256x3xbf16>, vector<3x8xbf16>, vector<256x8xf32> -> vector<256x8xf32>
    %c0_4 = arith.constant 0 : index
    %c0_5 = arith.constant 0 : index
    %9 = vector.load %arg4[%c0_4, %c0_5] : memref<256x8xf32, #tpu.memory_space<vmem>>, vector<256x8xf32>
    tpu.vector_store %arg4[%c0_4, %c0_5], %8 {strides = array<i32>} : memref<256x8xf32, #tpu.memory_space<vmem>>, vector<256x8xf32>,
    %cst_6 = arith.constant 0.000000e+00 : f32
    %10 = vector.broadcast %cst_6 : f32 to vector<17x3xf32>
    %11 = vector.extract_strided_slice %4 {offsets = [0, 0], sizes = [239, 3], strides = [1, 1]} : vector<256x3xf32> to vector<239x3xf32>
    %12 = tpu.concatenate %10, %11 in 0 : vector<17x3xf32>, vector<239x3xf32> -> vector<256x3xf32>
    %c-1_i32 = arith.constant -1 : i32
    %13 = vector.broadcast %c-1_i32 : i32 to vector<256x1xi32>
    %14 = arith.addi %2, %13 : vector<256x1xi32>
    %c0_i32 = arith.constant 0 : i32
    %15 = vector.broadcast %c0_i32 : i32 to vector<256x1xi32>
    %16 = arith.cmpi sge, %14, %15 : vector<256x1xi32>
    %c-1_i32_7 = arith.constant -1 : i32
    %17 = vector.broadcast %c-1_i32_7 : i32 to vector<256x1xi32>
    %18 = arith.addi %2, %17 : vector<256x1xi32>
    %c16_i32 = arith.constant 16 : i32
    %19 = vector.broadcast %c16_i32 : i32 to vector<256x1xi32>
    %20 = arith.cmpi slt, %18, %19 : vector<256x1xi32>
    %21 = arith.andi %16, %20 : vector<256x1xi1>
    %cst_8 = arith.constant 0.000000e+00 : f32
    %22 = vector.shape_cast %21 : vector<256x1xi1> to vector<256x1xi1>
    %23 = vector.broadcast %22 : vector<256x1xi1> to vector<256x3xi1>
    %24 = vector.broadcast %cst_8 : f32 to vector<256x3xf32>
    %25 = arith.select %23, %12, %24 : vector<256x3xi1>, vector<256x3xf32>
    %c0_9 = arith.constant 0 : index
    %c0_10 = arith.constant 0 : index
    %26 = vector.load %arg4[%c0_9, %c0_10] : memref<256x8xf32, #tpu.memory_space<vmem>>, vector<256x8xf32>
    %27 = arith.truncf %25 : vector<256x3xf32> to vector<256x3xbf16>
    %c0_11 = arith.constant 0 : index
    %c0_12 = arith.constant 0 : index
    %c0_13 = arith.constant 0 : index
    %28 = vector.load %arg2[%c0_11, %c0_12, %c0_13] : memref<9x3x8xbf16, #tpu.memory_space<vmem>>, vector<1x3x8xbf16>
    %29 = vector.shape_cast %28 : vector<1x3x8xbf16> to vector<3x8xbf16>
    %cst_14 = arith.constant dense<0.000000e+00> : vector<256x8xf32>
    %30 = tpu.matmul %27, %29, %cst_14 {dimension_numbers = #tpu.dot_dimension_numbers<[1], [0], [0], [1], [0, 0, 1, 1], [], []>} : vector<256x3xbf16>, vector<3x8xbf16>, vector<256x8xf32> -> vector<256x8xf32>
    %31 = arith.addf %26, %30 : vector<256x8xf32>
    %c0_15 = arith.constant 0 : index
    %c0_16 = arith.constant 0 : index
    %32 = vector.load %arg4[%c0_15, %c0_16] : memref<256x8xf32, #tpu.memory_space<vmem>>, vector<256x8xf32>
    tpu.vector_store %arg4[%c0_15, %c0_16], %31 {strides = array<i32>} : memref<256x8xf32, #tpu.memory_space<vmem>>, vector<256x8xf32>,
    %cst_17 = arith.constant 0.000000e+00 : f32
    %33 = vector.broadcast %cst_17 : f32 to vector<16x3xf32>
    %34 = vector.extract_strided_slice %4 {offsets = [0, 0], sizes = [240, 3], strides = [1, 1]} : vector<256x3xf32> to vector<240x3xf32>
    %35 = tpu.concatenate %33, %34 in 0 : vector<16x3xf32>, vector<240x3xf32> -> vector<256x3xf32>
    %c0_18 = arith.constant 0 : index
    %c0_19 = arith.constant 0 : index
    %36 = vector.load %arg4[%c0_18, %c0_19] : memref<256x8xf32, #tpu.memory_space<vmem>>, vector<256x8xf32>
    %37 = arith.truncf %35 : vector<256x3xf32> to vector<256x3xbf16>
    %c1 = arith.constant 1 : index
    %c0_20 = arith.constant 0 : index
    %c0_21 = arith.constant 0 : index
    %38 = vector.load %arg2[%c1, %c0_20, %c0_21] : memref<9x3x8xbf16, #tpu.memory_space<vmem>>, vector<1x3x8xbf16>
    %39 = vector.shape_cast %38 : vector<1x3x8xbf16> to vector<3x8xbf16>
    %cst_22 = arith.constant dense<0.000000e+00> : vector<256x8xf32>
    %40 = tpu.matmul %37, %39, %cst_22 {dimension_numbers = #tpu.dot_dimension_numbers<[1], [0], [0], [1], [0, 0, 1, 1], [], []>} : vector<256x3xbf16>, vector<3x8xbf16>, vector<256x8xf32> -> vector<256x8xf32>
    %41 = arith.addf %36, %40 : vector<256x8xf32>
    %c0_23 = arith.constant 0 : index
    %c0_24 = arith.constant 0 : index
    %42 = vector.load %arg4[%c0_23, %c0_24] : memref<256x8xf32, #tpu.memory_space<vmem>>, vector<256x8xf32>
    tpu.vector_store %arg4[%c0_23, %c0_24], %41 {strides = array<i32>} : memref<256x8xf32, #tpu.memory_space<vmem>>, vector<256x8xf32>,
    %cst_25 = arith.constant 0.000000e+00 : f32
    %43 = vector.broadcast %cst_25 : f32 to vector<15x3xf32>
    %44 = vector.extract_strided_slice %4 {offsets = [0, 0], sizes = [241, 3], strides = [1, 1]} : vector<256x3xf32> to vector<241x3xf32>
    %45 = tpu.concatenate %43, %44 in 0 : vector<15x3xf32>, vector<241x3xf32> -> vector<256x3xf32>
    %c1_i32 = arith.constant 1 : i32
    %46 = vector.broadcast %c1_i32 : i32 to vector<256x1xi32>
    %47 = arith.addi %2, %46 : vector<256x1xi32>
    %c0_i32_26 = arith.constant 0 : i32
    %48 = vector.broadcast %c0_i32_26 : i32 to vector<256x1xi32>
    %49 = arith.cmpi sge, %47, %48 : vector<256x1xi32>
    %c1_i32_27 = arith.constant 1 : i32
    %50 = vector.broadcast %c1_i32_27 : i32 to vector<256x1xi32>
    %51 = arith.addi %2, %50 : vector<256x1xi32>
    %c16_i32_28 = arith.constant 16 : i32
    %52 = vector.broadcast %c16_i32_28 : i32 to vector<256x1xi32>
    %53 = arith.cmpi slt, %51, %52 : vector<256x1xi32>
    %54 = arith.andi %49, %53 : vector<256x1xi1>
    %cst_29 = arith.constant 0.000000e+00 : f32
    %55 = vector.shape_cast %54 : vector<256x1xi1> to vector<256x1xi1>
    %56 = vector.broadcast %55 : vector<256x1xi1> to vector<256x3xi1>
    %57 = vector.broadcast %cst_29 : f32 to vector<256x3xf32>
    %58 = arith.select %56, %45, %57 : vector<256x3xi1>, vector<256x3xf32>
    %c0_30 = arith.constant 0 : index
    %c0_31 = arith.constant 0 : index
    %59 = vector.load %arg4[%c0_30, %c0_31] : memref<256x8xf32, #tpu.memory_space<vmem>>, vector<256x8xf32>
    %60 = arith.truncf %58 : vector<256x3xf32> to vector<256x3xbf16>
    %c2 = arith.constant 2 : index
    %c0_32 = arith.constant 0 : index
    %c0_33 = arith.constant 0 : index
    %61 = vector.load %arg2[%c2, %c0_32, %c0_33] : memref<9x3x8xbf16, #tpu.memory_space<vmem>>, vector<1x3x8xbf16>
    %62 = vector.shape_cast %61 : vector<1x3x8xbf16> to vector<3x8xbf16>
    %cst_34 = arith.constant dense<0.000000e+00> : vector<256x8xf32>
    %63 = tpu.matmul %60, %62, %cst_34 {dimension_numbers = #tpu.dot_dimension_numbers<[1], [0], [0], [1], [0, 0, 1, 1], [], []>} : vector<256x3xbf16>, vector<3x8xbf16>, vector<256x8xf32> -> vector<256x8xf32>
    %64 = arith.addf %59, %63 : vector<256x8xf32>
    %c0_35 = arith.constant 0 : index
    %c0_36 = arith.constant 0 : index
    %65 = vector.load %arg4[%c0_35, %c0_36] : memref<256x8xf32, #tpu.memory_space<vmem>>, vector<256x8xf32>
    tpu.vector_store %arg4[%c0_35, %c0_36], %64 {strides = array<i32>} : memref<256x8xf32, #tpu.memory_space<vmem>>, vector<256x8xf32>,
    %cst_37 = arith.constant 0.000000e+00 : f32
    %66 = vector.broadcast %cst_37 : f32 to vector<1x3xf32>
    %67 = vector.extract_strided_slice %4 {offsets = [0, 0], sizes = [255, 3], strides = [1, 1]} : vector<256x3xf32> to vector<255x3xf32>
    %68 = tpu.concatenate %66, %67 in 0 : vector<1x3xf32>, vector<255x3xf32> -> vector<256x3xf32>
    %c-1_i32_38 = arith.constant -1 : i32
    %69 = vector.broadcast %c-1_i32_38 : i32 to vector<256x1xi32>
    %70 = arith.addi %2, %69 : vector<256x1xi32>
    %c0_i32_39 = arith.constant 0 : i32
    %71 = vector.broadcast %c0_i32_39 : i32 to vector<256x1xi32>
    %72 = arith.cmpi sge, %70, %71 : vector<256x1xi32>
    %c-1_i32_40 = arith.constant -1 : i32
    %73 = vector.broadcast %c-1_i32_40 : i32 to vector<256x1xi32>
    %74 = arith.addi %2, %73 : vector<256x1xi32>
    %c16_i32_41 = arith.constant 16 : i32
    %75 = vector.broadcast %c16_i32_41 : i32 to vector<256x1xi32>
    %76 = arith.cmpi slt, %74, %75 : vector<256x1xi32>
    %77 = arith.andi %72, %76 : vector<256x1xi1>
    %cst_42 = arith.constant 0.000000e+00 : f32
    %78 = vector.shape_cast %77 : vector<256x1xi1> to vector<256x1xi1>
    %79 = vector.broadcast %78 : vector<256x1xi1> to vector<256x3xi1>
    %80 = vector.broadcast %cst_42 : f32 to vector<256x3xf32>
    %81 = arith.select %79, %68, %80 : vector<256x3xi1>, vector<256x3xf32>
    %c0_43 = arith.constant 0 : index
    %c0_44 = arith.constant 0 : index
    %82 = vector.load %arg4[%c0_43, %c0_44] : memref<256x8xf32, #tpu.memory_space<vmem>>, vector<256x8xf32>
    %83 = arith.truncf %81 : vector<256x3xf32> to vector<256x3xbf16>
    %c3 = arith.constant 3 : index
    %c0_45 = arith.constant 0 : index
    %c0_46 = arith.constant 0 : index
    %84 = vector.load %arg2[%c3, %c0_45, %c0_46] : memref<9x3x8xbf16, #tpu.memory_space<vmem>>, vector<1x3x8xbf16>
    %85 = vector.shape_cast %84 : vector<1x3x8xbf16> to vector<3x8xbf16>
    %cst_47 = arith.constant dense<0.000000e+00> : vector<256x8xf32>
    %86 = tpu.matmul %83, %85, %cst_47 {dimension_numbers = #tpu.dot_dimension_numbers<[1], [0], [0], [1], [0, 0, 1, 1], [], []>} : vector<256x3xbf16>, vector<3x8xbf16>, vector<256x8xf32> -> vector<256x8xf32>
    %87 = arith.addf %82, %86 : vector<256x8xf32>
    %c0_48 = arith.constant 0 : index
    %c0_49 = arith.constant 0 : index
    %88 = vector.load %arg4[%c0_48, %c0_49] : memref<256x8xf32, #tpu.memory_space<vmem>>, vector<256x8xf32>
    tpu.vector_store %arg4[%c0_48, %c0_49], %87 {strides = array<i32>} : memref<256x8xf32, #tpu.memory_space<vmem>>, vector<256x8xf32>,
    %89 = vector.extract_strided_slice %4 {offsets = [1, 0], sizes = [255, 3], strides = [1, 1]} : vector<256x3xf32> to vector<255x3xf32>
    %cst_50 = arith.constant 0.000000e+00 : f32
    %90 = vector.broadcast %cst_50 : f32 to vector<1x3xf32>
    %91 = tpu.concatenate %89, %90 in 0 : vector<255x3xf32>, vector<1x3xf32> -> vector<256x3xf32>
    %c1_i32_51 = arith.constant 1 : i32
    %92 = vector.broadcast %c1_i32_51 : i32 to vector<256x1xi32>
    %93 = arith.addi %2, %92 : vector<256x1xi32>
    %c0_i32_52 = arith.constant 0 : i32
    %94 = vector.broadcast %c0_i32_52 : i32 to vector<256x1xi32>
    %95 = arith.cmpi sge, %93, %94 : vector<256x1xi32>
    %c1_i32_53 = arith.constant 1 : i32
    %96 = vector.broadcast %c1_i32_53 : i32 to vector<256x1xi32>
    %97 = arith.addi %2, %96 : vector<256x1xi32>
    %c16_i32_54 = arith.constant 16 : i32
    %98 = vector.broadcast %c16_i32_54 : i32 to vector<256x1xi32>
    %99 = arith.cmpi slt, %97, %98 : vector<256x1xi32>
    %100 = arith.andi %95, %99 : vector<256x1xi1>
    %cst_55 = arith.constant 0.000000e+00 : f32
    %101 = vector.shape_cast %100 : vector<256x1xi1> to vector<256x1xi1>
    %102 = vector.broadcast %101 : vector<256x1xi1> to vector<256x3xi1>
    %103 = vector.broadcast %cst_55 : f32 to vector<256x3xf32>
    %104 = arith.select %102, %91, %103 : vector<256x3xi1>, vector<256x3xf32>
    %c0_56 = arith.constant 0 : index
    %c0_57 = arith.constant 0 : index
    %105 = vector.load %arg4[%c0_56, %c0_57] : memref<256x8xf32, #tpu.memory_space<vmem>>, vector<256x8xf32>
    %106 = arith.truncf %104 : vector<256x3xf32> to vector<256x3xbf16>
    %c5 = arith.constant 5 : index
    %c0_58 = arith.constant 0 : index
    %c0_59 = arith.constant 0 : index
    %107 = vector.load %arg2[%c5, %c0_58, %c0_59] : memref<9x3x8xbf16, #tpu.memory_space<vmem>>, vector<1x3x8xbf16>
    %108 = vector.shape_cast %107 : vector<1x3x8xbf16> to vector<3x8xbf16>
    %cst_60 = arith.constant dense<0.000000e+00> : vector<256x8xf32>
    %109 = tpu.matmul %106, %108, %cst_60 {dimension_numbers = #tpu.dot_dimension_numbers<[1], [0], [0], [1], [0, 0, 1, 1], [], []>} : vector<256x3xbf16>, vector<3x8xbf16>, vector<256x8xf32> -> vector<256x8xf32>
    %110 = arith.addf %105, %109 : vector<256x8xf32>
    %c0_61 = arith.constant 0 : index
    %c0_62 = arith.constant 0 : index
    %111 = vector.load %arg4[%c0_61, %c0_62] : memref<256x8xf32, #tpu.memory_space<vmem>>, vector<256x8xf32>
    tpu.vector_store %arg4[%c0_61, %c0_62], %110 {strides = array<i32>} : memref<256x8xf32, #tpu.memory_space<vmem>>, vector<256x8xf32>,
    %112 = vector.extract_strided_slice %4 {offsets = [15, 0], sizes = [241, 3], strides = [1, 1]} : vector<256x3xf32> to vector<241x3xf32>
    %cst_63 = arith.constant 0.000000e+00 : f32
    %113 = vector.broadcast %cst_63 : f32 to vector<15x3xf32>
    %114 = tpu.concatenate %112, %113 in 0 : vector<241x3xf32>, vector<15x3xf32> -> vector<256x3xf32>
    %c-1_i32_64 = arith.constant -1 : i32
    %115 = vector.broadcast %c-1_i32_64 : i32 to vector<256x1xi32>
    %116 = arith.addi %2, %115 : vector<256x1xi32>
    %c0_i32_65 = arith.constant 0 : i32
    %117 = vector.broadcast %c0_i32_65 : i32 to vector<256x1xi32>
    %118 = arith.cmpi sge, %116, %117 : vector<256x1xi32>
    %c-1_i32_66 = arith.constant -1 : i32
    %119 = vector.broadcast %c-1_i32_66 : i32 to vector<256x1xi32>
    %120 = arith.addi %2, %119 : vector<256x1xi32>
    %c16_i32_67 = arith.constant 16 : i32
    %121 = vector.broadcast %c16_i32_67 : i32 to vector<256x1xi32>
    %122 = arith.cmpi slt, %120, %121 : vector<256x1xi32>
    %123 = arith.andi %118, %122 : vector<256x1xi1>
    %cst_68 = arith.constant 0.000000e+00 : f32
    %124 = vector.shape_cast %123 : vector<256x1xi1> to vector<256x1xi1>
    %125 = vector.broadcast %124 : vector<256x1xi1> to vector<256x3xi1>
    %126 = vector.broadcast %cst_68 : f32 to vector<256x3xf32>
    %127 = arith.select %125, %114, %126 : vector<256x3xi1>, vector<256x3xf32>
    %c0_69 = arith.constant 0 : index
    %c0_70 = arith.constant 0 : index
    %128 = vector.load %arg4[%c0_69, %c0_70] : memref<256x8xf32, #tpu.memory_space<vmem>>, vector<256x8xf32>
    %129 = arith.truncf %127 : vector<256x3xf32> to vector<256x3xbf16>
    %c6 = arith.constant 6 : index
    %c0_71 = arith.constant 0 : index
    %c0_72 = arith.constant 0 : index
    %130 = vector.load %arg2[%c6, %c0_71, %c0_72] : memref<9x3x8xbf16, #tpu.memory_space<vmem>>, vector<1x3x8xbf16>
    %131 = vector.shape_cast %130 : vector<1x3x8xbf16> to vector<3x8xbf16>
    %cst_73 = arith.constant dense<0.000000e+00> : vector<256x8xf32>
    %132 = tpu.matmul %129, %131, %cst_73 {dimension_numbers = #tpu.dot_dimension_numbers<[1], [0], [0], [1], [0, 0, 1, 1], [], []>} : vector<256x3xbf16>, vector<3x8xbf16>, vector<256x8xf32> -> vector<256x8xf32>
    %133 = arith.addf %128, %132 : vector<256x8xf32>
    %c0_74 = arith.constant 0 : index
    %c0_75 = arith.constant 0 : index
    %134 = vector.load %arg4[%c0_74, %c0_75] : memref<256x8xf32, #tpu.memory_space<vmem>>, vector<256x8xf32>
    tpu.vector_store %arg4[%c0_74, %c0_75], %133 {strides = array<i32>} : memref<256x8xf32, #tpu.memory_space<vmem>>, vector<256x8xf32>,
    %135 = vector.extract_strided_slice %4 {offsets = [16, 0], sizes = [240, 3], strides = [1, 1]} : vector<256x3xf32> to vector<240x3xf32>
    %cst_76 = arith.constant 0.000000e+00 : f32
    %136 = vector.broadcast %cst_76 : f32 to vector<16x3xf32>
    %137 = tpu.concatenate %135, %136 in 0 : vector<240x3xf32>, vector<16x3xf32> -> vector<256x3xf32>
    %c0_77 = arith.constant 0 : index
    %c0_78 = arith.constant 0 : index
    %138 = vector.load %arg4[%c0_77, %c0_78] : memref<256x8xf32, #tpu.memory_space<vmem>>, vector<256x8xf32>
    %139 = arith.truncf %137 : vector<256x3xf32> to vector<256x3xbf16>
    %c7 = arith.constant 7 : index
    %c0_79 = arith.constant 0 : index
    %c0_80 = arith.constant 0 : index
    %140 = vector.load %arg2[%c7, %c0_79, %c0_80] : memref<9x3x8xbf16, #tpu.memory_space<vmem>>, vector<1x3x8xbf16>
    %141 = vector.shape_cast %140 : vector<1x3x8xbf16> to vector<3x8xbf16>
    %cst_81 = arith.constant dense<0.000000e+00> : vector<256x8xf32>
    %142 = tpu.matmul %139, %141, %cst_81 {dimension_numbers = #tpu.dot_dimension_numbers<[1], [0], [0], [1], [0, 0, 1, 1], [], []>} : vector<256x3xbf16>, vector<3x8xbf16>, vector<256x8xf32> -> vector<256x8xf32>
    %143 = arith.addf %138, %142 : vector<256x8xf32>
    %c0_82 = arith.constant 0 : index
    %c0_83 = arith.constant 0 : index
    %144 = vector.load %arg4[%c0_82, %c0_83] : memref<256x8xf32, #tpu.memory_space<vmem>>, vector<256x8xf32>
    tpu.vector_store %arg4[%c0_82, %c0_83], %143 {strides = array<i32>} : memref<256x8xf32, #tpu.memory_space<vmem>>, vector<256x8xf32>,
    %145 = vector.extract_strided_slice %4 {offsets = [17, 0], sizes = [239, 3], strides = [1, 1]} : vector<256x3xf32> to vector<239x3xf32>
    %cst_84 = arith.constant 0.000000e+00 : f32
    %146 = vector.broadcast %cst_84 : f32 to vector<17x3xf32>
    %147 = tpu.concatenate %145, %146 in 0 : vector<239x3xf32>, vector<17x3xf32> -> vector<256x3xf32>
    %c1_i32_85 = arith.constant 1 : i32
    %148 = vector.broadcast %c1_i32_85 : i32 to vector<256x1xi32>
    %149 = arith.addi %2, %148 : vector<256x1xi32>
    %c0_i32_86 = arith.constant 0 : i32
    %150 = vector.broadcast %c0_i32_86 : i32 to vector<256x1xi32>
    %151 = arith.cmpi sge, %149, %150 : vector<256x1xi32>
    %c1_i32_87 = arith.constant 1 : i32
    %152 = vector.broadcast %c1_i32_87 : i32 to vector<256x1xi32>
    %153 = arith.addi %2, %152 : vector<256x1xi32>
    %c16_i32_88 = arith.constant 16 : i32
    %154 = vector.broadcast %c16_i32_88 : i32 to vector<256x1xi32>
    %155 = arith.cmpi slt, %153, %154 : vector<256x1xi32>
    %156 = arith.andi %151, %155 : vector<256x1xi1>
    %cst_89 = arith.constant 0.000000e+00 : f32
    %157 = vector.shape_cast %156 : vector<256x1xi1> to vector<256x1xi1>
    %158 = vector.broadcast %157 : vector<256x1xi1> to vector<256x3xi1>
    %159 = vector.broadcast %cst_89 : f32 to vector<256x3xf32>
    %160 = arith.select %158, %147, %159 : vector<256x3xi1>, vector<256x3xf32>
    %c0_90 = arith.constant 0 : index
    %c0_91 = arith.constant 0 : index
    %161 = vector.load %arg4[%c0_90, %c0_91] : memref<256x8xf32, #tpu.memory_space<vmem>>, vector<256x8xf32>
    %162 = arith.truncf %160 : vector<256x3xf32> to vector<256x3xbf16>
    %c8 = arith.constant 8 : index
    %c0_92 = arith.constant 0 : index
    %c0_93 = arith.constant 0 : index
    %163 = vector.load %arg2[%c8, %c0_92, %c0_93] : memref<9x3x8xbf16, #tpu.memory_space<vmem>>, vector<1x3x8xbf16>
    %164 = vector.shape_cast %163 : vector<1x3x8xbf16> to vector<3x8xbf16>
    %cst_94 = arith.constant dense<0.000000e+00> : vector<256x8xf32>
    %165 = tpu.matmul %162, %164, %cst_94 {dimension_numbers = #tpu.dot_dimension_numbers<[1], [0], [0], [1], [0, 0, 1, 1], [], []>} : vector<256x3xbf16>, vector<3x8xbf16>, vector<256x8xf32> -> vector<256x8xf32>
    %166 = arith.addf %161, %165 : vector<256x8xf32>
    %c0_95 = arith.constant 0 : index
    %c0_96 = arith.constant 0 : index
    %167 = vector.load %arg4[%c0_95, %c0_96] : memref<256x8xf32, #tpu.memory_space<vmem>>, vector<256x8xf32>
    tpu.vector_store %arg4[%c0_95, %c0_96], %166 {strides = array<i32>} : memref<256x8xf32, #tpu.memory_space<vmem>>, vector<256x8xf32>,
    %c0_97 = arith.constant 0 : index
    %c0_98 = arith.constant 0 : index
    %168 = vector.load %arg4[%c0_97, %c0_98] : memref<256x8xf32, #tpu.memory_space<vmem>>, vector<256x8xf32>
    %c0_99 = arith.constant 0 : index
    %c0_100 = arith.constant 0 : index
    %c0_101 = arith.constant 0 : index
    %169 = vector.load %arg3[%c0_99, %c0_100, %c0_101] : memref<1x256x8xf32, #tpu.memory_space<vmem>>, vector<1x256x8xf32>
    %170 = vector.shape_cast %169 : vector<1x256x8xf32> to vector<256x8xf32>
    %171 = vector.shape_cast %168 : vector<256x8xf32> to vector<1x256x8xf32>
    tpu.vector_store %arg3[%c0_99, %c0_100, %c0_101], %171 {strides = array<i32>} : memref<1x256x8xf32, #tpu.memory_space<vmem>>, vector<1x256x8xf32>,
    return
  }
  func.func @transform_0(%arg0: i32) -> (i32, i32, i32) {
    %c0_i32 = arith.constant 0 : i32
    %c0_i32_0 = arith.constant 0 : i32
    %c0_i32_1 = arith.constant 0 : i32
    return %arg0, %c0_i32, %c0_i32_0 : i32, i32, i32
  }
  func.func @transform_1(%arg0: i32) -> (i32, i32, i32) {
    %c0_i32 = arith.constant 0 : i32
    %c0_i32_0 = arith.constant 0 : i32
    %c0_i32_1 = arith.constant 0 : i32
    %c0_i32_2 = arith.constant 0 : i32
    return %c0_i32, %c0_i32_0, %c0_i32_1 : i32, i32, i32
  }
  func.func @transform_2(%arg0: i32) -> (i32, i32, i32) {
    %c0_i32 = arith.constant 0 : i32
    %c0_i32_0 = arith.constant 0 : i32
    %c0_i32_1 = arith.constant 0 : i32
    return %arg0, %c0_i32, %c0_i32_0 : i32, i32, i32
  }
}

</mosaic_0001>

<llo_original>
// kernel: tpu_custom_call.1
$region0: #{tpu_custom_call.1}
  #allocation0 [shape = 'u32[]', space=smem, size = 0x4, offset = 0x4, fixed_abs, tag = 'smem constant byte address 0x4 - core index']
  #allocation1 [shape = 'u32[144,128]{1,0:T(1,128)}', space=vmem, size = 0x12000, scoped, tag = 'internal scratch']
  #allocation2 [shape = 'f32[256,8]{1,0:T(8,128)}', space=vmem, size = 0x20000, scoped, tag = 'scratch operand']
  %s0 = inlined_call_operand.vmem [shape: f32[2,256,3], index: 0, kind: input, shape index: {}]
  %s1 = inlined_call_operand.vmem [shape: bf16[9,3,8], index: 1, kind: input, shape index: {}]
  %s2 = inlined_call_operand.vmem [shape: f32[2,256,8], index: 2, kind: output, shape index: {}]
  %s3 = sld [smem:[#allocation0]]
  $region41: #{tpu_custom_call.1} parent=0
    _
  %s5 = ssub.s32 1, %s3
  %s6 = scalar_select 0, %s5, %s3
  loop: start=0, step=1, limit=4
  $region2: #{tpu_custom_call.1} parent=0 // loop_pre_header
    _
  $region3: #{tpu_custom_call.1} parent=0 // loop_header
    %s8 = sphi 0, %s12
    %p9 = scmp.ge.s32.totalorder %s8, 4
    %s18 = sphi 0, %s20
    %s21 = sphi 0, %s18
    %s22 = sphi 0, %s21
    %s38 = sphi 0, %s22
    %s42 = sphi 0, %s42
    %s44 = sphi 0, %s42
    %s45 = sphi 0, %s44
    %s59 = sphi 0, %s45
    %s65 = sphi 0, %s67
    %s68 = sphi 0, %s65
    %s69 = sphi 0, %s68
    %s85 = sphi 0, %s69
  $region4: #{tpu_custom_call.1} parent=0 // loop_header_branch
    %11 = sbr.rel (%p9) target = $region8
  $region5: #{tpu_custom_call.1} parent=0 // loop_body
    %s13 = ssub.s32 %s8, 1
    %s14 = ssub.s32 %s8, 2
    %s15 = sadd.s32 %s8, 1
    %s16 = ssub.s32 %s8, %s15
    %p17 = scmp.eq.s32.totalorder %s16, 0
    %s19 = sadd.s32 %s18, 1
    %s20 = scalar_select %p17, %s18, %s19
    %p23 = pneg %p17
    %p24 = scmp.eq.s32.totalorder %s8, 1
    %p25 = por %p23, %p24
    %p26 = scmp.ne.s32.totalorder %s18, %s21
    %p27 = scmp.eq.s32.totalorder %s8, 0
    %p28 = por %p26, %p27
    %p29 = scmp.ne.s32.totalorder %s18, %s21
    %p30 = scmp.eq.s32.totalorder %s13, 1
    %p31 = por %p29, %p30
    %p32 = scmp.ne.s32.totalorder %s21, %s22
    %p33 = scmp.eq.s32.totalorder %s13, 0
    %p34 = por %p32, %p33
    %p35 = scmp.ne.s32.totalorder %s21, %s22
    %p36 = scmp.eq.s32.totalorder %s14, 1
    %p37 = por %p35, %p36
    %p39 = scmp.ne.s32.totalorder %s22, %s38
    %p40 = scmp.eq.s32.totalorder %s14, 0
    %p41 = por %p39, %p40
    %s43 = sadd.s32 %s42, 1
    %p46 = scmp.eq.s32.totalorder %s8, 1
    %p47 = scmp.ne.s32.totalorder %s42, %s44
    %p48 = scmp.eq.s32.totalorder %s8, 0
    %p49 = por %p47, %p48
    %p50 = scmp.ne.s32.totalorder %s42, %s44
    %p51 = scmp.eq.s32.totalorder %s13, 1
    %p52 = por %p50, %p51
    %p53 = scmp.ne.s32.totalorder %s44, %s45
    %p54 = scmp.eq.s32.totalorder %s13, 0
    %p55 = por %p53, %p54
    %p56 = scmp.ne.s32.totalorder %s44, %s45
    %p57 = scmp.eq.s32.totalorder %s14, 1
    %p58 = por %p56, %p57
    %p60 = scmp.ne.s32.totalorder %s45, %s59
    %p61 = scmp.eq.s32.totalorder %s14, 0
    %p62 = por %p60, %p61
    %s63 = ssub.s32 %s8, %s15
    %p64 = scmp.eq.s32.totalorder %s63, 0
    %s66 = sadd.s32 %s65, 1
    %s67 = scalar_select %p64, %s65, %s66
    %p70 = pneg %p64
    %p71 = scmp.eq.s32.totalorder %s8, 1
    %p72 = por %p70, %p71
    %p73 = scmp.ne.s32.totalorder %s65, %s68
    %p74 = scmp.eq.s32.totalorder %s8, 0
    %p75 = por %p73, %p74
    %p76 = scmp.ne.s32.totalorder %s65, %s68
    %p77 = scmp.eq.s32.totalorder %s13, 1
    %p78 = por %p76, %p77
    %p79 = scmp.ne.s32.totalorder %s68, %s69
    %p80 = scmp.eq.s32.totalorder %s13, 0
    %p81 = por %p79, %p80
    %p82 = scmp.ne.s32.totalorder %s68, %s69
    %p83 = scmp.eq.s32.totalorder %s14, 1
    %p84 = por %p82, %p83
    %p86 = scmp.ne.s32.totalorder %s69, %s85
    %p87 = scmp.eq.s32.totalorder %s14, 0
    %p88 = por %p86, %p87
    %p89 = scmp.le.s32.totalorder 1, %s8
    %p90 = scmp.lt.s32.totalorder %s8, 3
    %p91 = pnand %p89, %p90
    %p92 = pneg %p91
    // Predicated region
    $region9: #{tpu_custom_call.1} parent=5 // pred_check
      _
    $region10: #{tpu_custom_call.1} parent=5 // pred_check_branch
      %94 = sbr.rel (%p91) target = $region12
    $region11: #{tpu_custom_call.1} parent=5 // pred_region
      %s95 = ssub.s32 %s8, 1
      // Predicated region
      $region13: #{tpu_custom_call.1} parent=11 // pred_check
        %p96 = pneg %p55
      $region14: #{tpu_custom_call.1} parent=11 // pred_check_branch
        %98 = sbr.rel (%p96) target = $region16
      $region15: #{tpu_custom_call.1} parent=11 // pred_region
        _
      $region16: #{tpu_custom_call.1} parent=11 // pred_fallthru
        _
    $region12: #{tpu_custom_call.1} parent=5 // pred_fallthru
      _
    %p99 = scmp.lt.s32.totalorder %s8, 2
    // Predicated region
    $region17: #{tpu_custom_call.1} parent=5 // pred_check
      %p100 = pneg %p99
    $region18: #{tpu_custom_call.1} parent=5 // pred_check_branch
      %102 = sbr.rel (%p100) target = $region20
    $region19: #{tpu_custom_call.1} parent=5 // pred_region
      // Predicated region
      $region21: #{tpu_custom_call.1} parent=19 // pred_check
        %p103 = pneg %p28
      $region22: #{tpu_custom_call.1} parent=19 // pred_check_branch
        %105 = sbr.rel (%p103) target = $region24
      $region23: #{tpu_custom_call.1} parent=19 // pred_region
        %p106 = scmp.lt.s32.totalorder %s8, 1
        %s107 = scalar_select %p106, %s8, 1
        %s108 = smul.addr %s107, 32
        %s109 = smul.addr %s108, 8
        %s110 = scalar_lea.vmem %s0, %s109
      $region24: #{tpu_custom_call.1} parent=19 // pred_fallthru
        _
    $region20: #{tpu_custom_call.1} parent=5 // pred_fallthru
      _
    %p111 = scmp.le.s32.totalorder 1, %s8
    %p112 = scmp.lt.s32.totalorder %s8, 3
    %p113 = pnand %p111, %p112
    %p114 = pneg %p113
    // Predicated region
    $region25: #{tpu_custom_call.1} parent=5 // pred_check
      _
    $region26: #{tpu_custom_call.1} parent=5 // pred_check_branch
      %116 = sbr.rel (%p113) target = $region28
    $region27: #{tpu_custom_call.1} parent=5 // pred_region
      %s117 = ssub.s32 %s8, 1
      %p118 = scmp.lt.s32.totalorder %s13, 1
      %s119 = scalar_select %p118, %s13, 1
      %s120 = smul.addr %s119, 32
      %s121 = smul.addr %s120, 8
      %s122 = scalar_lea.vmem %s0, %s121
      %p123 = pneg %p34
      %p124 = pneg %p31
      %p125 = pneg %p55
      %p126 = pneg %p52
      %p127 = pneg %p81
      %p128 = pneg %p78
      %p129 = scmp.lt.s32.totalorder %s13, 1
      %s130 = scalar_select %p129, %s13, 1
      %s131 = smul.addr %s130, 32
      %s132 = smul.addr %s131, 8
      %s133 = scalar_lea.vmem %s2, %s132
      %p134 = scmp.lt.s32.totalorder %s13, 1
      %s135 = scalar_select %p134, %s13, 1
      %s136 = smul.addr %s135, 32
      %s137 = smul.addr %s136, 8
      %s138 = scalar_lea.vmem %s0, %s137
      %p139 = scmp.lt.s32.totalorder %s13, 1
      %s140 = scalar_select %p139, %s13, 1
      %s141 = smul.addr %s140, 32
      %s142 = smul.addr %s141, 8
      %s143 = scalar_lea.vmem %s2, %s142
      %v145 = vlaneseq
      %v146 = vshrl.u32 %v145, 7
      %v147 = vadd.s32 %v146, 8
      %v148 = vadd.s32 %v146, 16
      %v149 = vadd.s32 %v146, 24
      %v150 = vadd.s32 %v146, 32
      %v151 = vadd.s32 %v146, 40
      %v152 = vadd.s32 %v146, 48
      %v153 = vadd.s32 %v146, 56
      %v154 = vadd.s32 %v146, 64
      %v155 = vadd.s32 %v146, 72
      %v156 = vadd.s32 %v146, 80
      %v157 = vadd.s32 %v146, 88
      %v158 = vadd.s32 %v146, 96
      %v159 = vadd.s32 %v146, 104
      %v160 = vadd.s32 %v146, 112
      %v161 = vadd.s32 %v146, 120
      %v162 = vadd.s32 %v146, 128
      %v163 = vadd.s32 %v146, 136
      %v164 = vadd.s32 %v146, 144
      %v165 = vadd.s32 %v146, 152
      %v166 = vadd.s32 %v146, 160
      %v167 = vadd.s32 %v146, 168
      %v168 = vadd.s32 %v146, 176
      %v169 = vadd.s32 %v146, 184
      %v170 = vadd.s32 %v146, 192
      %v171 = vadd.s32 %v146, 200
      %v172 = vadd.s32 %v146, 208
      %v173 = vadd.s32 %v146, 216
      %v174 = vadd.s32 %v146, 224
      %v175 = vadd.s32 %v146, 232
      %v176 = vadd.s32 %v146, 240
      %v177 = vadd.s32 %v146, 248
      %v178 = vand.u32 %v146, 15
      %v179 = vand.u32 %v147, 15
      %v180 = vand.u32 %v148, 15
      %v181 = vand.u32 %v149, 15
      %v182 = vand.u32 %v150, 15
      %v183 = vand.u32 %v151, 15
      %v184 = vand.u32 %v152, 15
      %v185 = vand.u32 %v153, 15
      %v186 = vand.u32 %v154, 15
      %v187 = vand.u32 %v155, 15
      %v188 = vand.u32 %v156, 15
      %v189 = vand.u32 %v157, 15
      %v190 = vand.u32 %v158, 15
      %v191 = vand.u32 %v159, 15
      %v192 = vand.u32 %v160, 15
      %v193 = vand.u32 %v161, 15
      %v194 = vand.u32 %v162, 15
      %v195 = vand.u32 %v163, 15
      %v196 = vand.u32 %v164, 15
      %v197 = vand.u32 %v165, 15
      %v198 = vand.u32 %v166, 15
      %v199 = vand.u32 %v167, 15
      %v200 = vand.u32 %v168, 15
      %v201 = vand.u32 %v169, 15
      %v202 = vand.u32 %v170, 15
      %v203 = vand.u32 %v171, 15
      %v204 = vand.u32 %v172, 15
      %v205 = vand.u32 %v173, 15
      %v206 = vand.u32 %v174, 15
      %v207 = vand.u32 %v175, 15
      %v208 = vand.u32 %v176, 15
      %v209 = vand.u32 %v177, 15
      %v210 = vld [vmem:[%s138] sm:$0xff]
      %v211 = vld [vmem:[%s138 + $0x8] sm:$0xff]
      %v212 = vld [vmem:[%s138 + $0x10] sm:$0xff]
      %v213 = vld [vmem:[%s138 + $0x18] sm:$0xff]
      %v214 = vld [vmem:[%s138 + $0x20] sm:$0xff]
      %v215 = vld [vmem:[%s138 + $0x28] sm:$0xff]
      %v216 = vld [vmem:[%s138 + $0x30] sm:$0xff]
      %v217 = vld [vmem:[%s138 + $0x38] sm:$0xff]
      %v218 = vld [vmem:[%s138 + $0x40] sm:$0xff]
      %v219 = vld [vmem:[%s138 + $0x48] sm:$0xff]
      %v220 = vld [vmem:[%s138 + $0x50] sm:$0xff]
      %v221 = vld [vmem:[%s138 + $0x58] sm:$0xff]
      %v222 = vld [vmem:[%s138 + $0x60] sm:$0xff]
      %v223 = vld [vmem:[%s138 + $0x68] sm:$0xff]
      %v224 = vld [vmem:[%s138 + $0x70] sm:$0xff]
      %v225 = vld [vmem:[%s138 + $0x78] sm:$0xff]
      %v226 = vld [vmem:[%s138 + $0x80] sm:$0xff]
      %v227 = vld [vmem:[%s138 + $0x88] sm:$0xff]
      %v228 = vld [vmem:[%s138 + $0x90] sm:$0xff]
      %v229 = vld [vmem:[%s138 + $0x98] sm:$0xff]
      %v230 = vld [vmem:[%s138 + $0xa0] sm:$0xff]
      %v231 = vld [vmem:[%s138 + $0xa8] sm:$0xff]
      %v232 = vld [vmem:[%s138 + $0xb0] sm:$0xff]
      %v233 = vld [vmem:[%s138 + $0xb8] sm:$0xff]
      %v234 = vld [vmem:[%s138 + $0xc0] sm:$0xff]
      %v235 = vld [vmem:[%s138 + $0xc8] sm:$0xff]
      %v236 = vld [vmem:[%s138 + $0xd0] sm:$0xff]
      %v237 = vld [vmem:[%s138 + $0xd8] sm:$0xff]
      %v238 = vld [vmem:[%s138 + $0xe0] sm:$0xff]
      %v239 = vld [vmem:[%s138 + $0xe8] sm:$0xff]
      %v240 = vld [vmem:[%s138 + $0xf0] sm:$0xff]
      %v241 = vld [vmem:[%s138 + $0xf8] sm:$0xff]
      %v242 = vpack.c.bf16 %v211, %v210
      %v243 = vpack.c.bf16 %v213, %v212
      %v244 = vpack.c.bf16 %v215, %v214
      %v245 = vpack.c.bf16 %v217, %v216
      %v246 = vpack.c.bf16 %v219, %v218
      %v247 = vpack.c.bf16 %v221, %v220
      %v248 = vpack.c.bf16 %v223, %v222
      %v249 = vpack.c.bf16 %v225, %v224
      %v250 = vpack.c.bf16 %v227, %v226
      %v251 = vpack.c.bf16 %v229, %v228
      %v252 = vpack.c.bf16 %v231, %v230
      %v253 = vpack.c.bf16 %v233, %v232
      %v254 = vpack.c.bf16 %v235, %v234
      %v255 = vpack.c.bf16 %v237, %v236
      %v256 = vpack.c.bf16 %v239, %v238
      %v257 = vpack.c.bf16 %v241, %v240
      %s258 = scalar_lea.vmem %s1, 8
      %v259 = vld [vmem:[%s258] sm:$0x3]
      %vm260 = vcmask 23552
      %v262 = vsel %vm260, %v242, 0
      %v265 = vsel %vm260, %v243, 0
      %v268 = vsel %vm260, %v244, 0
      %v271 = vsel %vm260, %v245, 0
      %v274 = vsel %vm260, %v246, 0
      %v277 = vsel %vm260, %v247, 0
      %v280 = vsel %vm260, %v248, 0
      %v283 = vsel %vm260, %v249, 0
      %v286 = vsel %vm260, %v250, 0
      %v289 = vsel %vm260, %v251, 0
      %v292 = vsel %vm260, %v252, 0
      %v295 = vsel %vm260, %v253, 0
      %v298 = vsel %vm260, %v254, 0
      %v301 = vsel %vm260, %v255, 0
      %v304 = vsel %vm260, %v256, 0
      %v307 = vsel %vm260, %v257, 0
      %vm309 = vcmask 1040384
      %vm310 = vcmask 1041408
      %v311 = vsel %vm309, 4294967295, 65535
      %v312 = vsel %vm310, %v311, 0
      %v314 = vand.u32 %v259, %v312
      %316 = vmatprep.subr.bf16.mxu0 0
      %317 = vmatpush1.bf16.msra.mxu0 %v314
      %318 = vmatprep.subr.bf16.mxu0 0
      %319 = vmatpush1.bf16.msra.mxu0 0
      %320 = vmatprep.subr.bf16.mxu0 0
      %321 = vmatpush1.bf16.msra.mxu0 0
      %322 = vmatprep.subr.bf16.mxu0 0
      %323 = vmatpush1.bf16.msra.mxu0 0
      %324 = vmatprep.subr.bf16.mxu0 0
      %325 = vmatpush1.bf16.msra.mxu0 0
      %326 = vmatprep.subr.bf16.mxu0 0
      %327 = vmatpush1.bf16.msra.mxu0 0
      %328 = vmatprep.subr.bf16.mxu0 0
      %329 = vmatpush1.bf16.msra.mxu0 0
      %330 = vmatprep.subr.bf16.mxu0 0
      %331 = vmatpush1.bf16.msra.mxu0 0
      %332 = vmatprep.subr.bf16.mxu0 0
      %333 = vmatpush1.bf16.msra.mxu0 0
      %334 = vmatprep.subr.bf16.mxu0 0
      %335 = vmatpush1.bf16.msra.mxu0 0
      %336 = vmatprep.subr.bf16.mxu0 0
      %337 = vmatpush1.bf16.msra.mxu0 0
      %338 = vmatprep.subr.bf16.mxu0 0
      %339 = vmatpush1.bf16.msra.mxu0 0
      %340 = vmatprep.subr.bf16.mxu0 0
      %341 = vmatpush1.bf16.msra.mxu0 0
      %342 = vmatprep.subr.bf16.mxu0 0
      %343 = vmatpush1.bf16.msra.mxu0 0
      %344 = vmatprep.subr.bf16.mxu0 0
      %345 = vmatpush1.bf16.msra.mxu0 0
      %346 = vmatprep.subr.bf16.mxu0 0
      %347 = vmatpush1.bf16.msra.mxu0 0
      %348 = vmatprep.mubr.bf16.mxu0 0
      %349 = vmatmul.mubr.bf16.gmra.mrb[0].mxu0 %v262
      %v350 = vpop.f32.mrb[0].mxu0
      %v351 = vadd.f32 0.0, %v350
      %v352 = vpop.f32.mrb[0].mxu0
      %v353 = vpop.f32.mrb[0].mxu0
      %v354 = vadd.f32 0.0, %v353
      %v355 = vpop.f32.mrb[0].mxu0
      %356 = vmatprep.mubr.bf16.mxu0 0
      %357 = vmatmul.mubr.bf16.gmra.mrb[0].mxu0 %v265
      %v358 = vpop.f32.mrb[0].mxu0
      %v359 = vadd.f32 0.0, %v358
      %v360 = vpop.f32.mrb[0].mxu0
      %v361 = vpop.f32.mrb[0].mxu0
      %v362 = vadd.f32 0.0, %v361
      %v363 = vpop.f32.mrb[0].mxu0
      %364 = vmatprep.mubr.bf16.mxu0 0
      %365 = vmatmul.mubr.bf16.gmra.mrb[0].mxu0 %v268
      %v366 = vpop.f32.mrb[0].mxu0
      %v367 = vadd.f32 0.0, %v366
      %v368 = vpop.f32.mrb[0].mxu0
      %v369 = vpop.f32.mrb[0].mxu0
      %v370 = vadd.f32 0.0, %v369
      %v371 = vpop.f32.mrb[0].mxu0
      %372 = vmatprep.mubr.bf16.mxu0 0
      %373 = vmatmul.mubr.bf16.gmra.mrb[0].mxu0 %v271
      %v374 = vpop.f32.mrb[0].mxu0
      %v375 = vadd.f32 0.0, %v374
      %v376 = vpop.f32.mrb[0].mxu0
      %v377 = vpop.f32.mrb[0].mxu0
      %v378 = vadd.f32 0.0, %v377
      %v379 = vpop.f32.mrb[0].mxu0
      %380 = vmatprep.mubr.bf16.mxu0 0
      %381 = vmatmul.mubr.bf16.gmra.mrb[0].mxu0 %v274
      %v382 = vpop.f32.mrb[0].mxu0
      %v383 = vadd.f32 0.0, %v382
      %v384 = vpop.f32.mrb[0].mxu0
      %v385 = vpop.f32.mrb[0].mxu0
      %v386 = vadd.f32 0.0, %v385
      %v387 = vpop.f32.mrb[0].mxu0
      %388 = vmatprep.mubr.bf16.mxu0 0
      %389 = vmatmul.mubr.bf16.gmra.mrb[0].mxu0 %v277
      %v390 = vpop.f32.mrb[0].mxu0
      %v391 = vadd.f32 0.0, %v390
      %v392 = vpop.f32.mrb[0].mxu0
      %v393 = vpop.f32.mrb[0].mxu0
      %v394 = vadd.f32 0.0, %v393
      %v395 = vpop.f32.mrb[0].mxu0
      %396 = vmatprep.mubr.bf16.mxu0 0
      %397 = vmatmul.mubr.bf16.gmra.mrb[0].mxu0 %v280
      %v398 = vpop.f32.mrb[0].mxu0
      %v399 = vadd.f32 0.0, %v398
      %v400 = vpop.f32.mrb[0].mxu0
      %v401 = vpop.f32.mrb[0].mxu0
      %v402 = vadd.f32 0.0, %v401
      %v403 = vpop.f32.mrb[0].mxu0
      %404 = vmatprep.mubr.bf16.mxu0 0
      %405 = vmatmul.mubr.bf16.gmra.mrb[0].mxu0 %v283
      %v406 = vpop.f32.mrb[0].mxu0
      %v407 = vadd.f32 0.0, %v406
      %v408 = vpop.f32.mrb[0].mxu0
      %v409 = vpop.f32.mrb[0].mxu0
      %v410 = vadd.f32 0.0, %v409
      %v411 = vpop.f32.mrb[0].mxu0
      %412 = vmatprep.mubr.bf16.mxu0 0
      %413 = vmatmul.mubr.bf16.gmra.mrb[0].mxu0 %v286
      %v414 = vpop.f32.mrb[0].mxu0
      %v415 = vadd.f32 0.0, %v414
      %v416 = vpop.f32.mrb[0].mxu0
      %v417 = vpop.f32.mrb[0].mxu0
      %v418 = vadd.f32 0.0, %v417
      %v419 = vpop.f32.mrb[0].mxu0
      %420 = vmatprep.mubr.bf16.mxu0 0
      %421 = vmatmul.mubr.bf16.gmra.mrb[0].mxu0 %v289
      %v422 = vpop.f32.mrb[0].mxu0
      %v423 = vadd.f32 0.0, %v422
      %v424 = vpop.f32.mrb[0].mxu0
      %v425 = vpop.f32.mrb[0].mxu0
      %v426 = vadd.f32 0.0, %v425
      %v427 = vpop.f32.mrb[0].mxu0
      %428 = vmatprep.mubr.bf16.mxu0 0
      %429 = vmatmul.mubr.bf16.gmra.mrb[0].mxu0 %v292
      %v430 = vpop.f32.mrb[0].mxu0
      %v431 = vadd.f32 0.0, %v430
      %v432 = vpop.f32.mrb[0].mxu0
      %v433 = vpop.f32.mrb[0].mxu0
      %v434 = vadd.f32 0.0, %v433
      %v435 = vpop.f32.mrb[0].mxu0
      %436 = vmatprep.mubr.bf16.mxu0 0
      %437 = vmatmul.mubr.bf16.gmra.mrb[0].mxu0 %v295
      %v438 = vpop.f32.mrb[0].mxu0
      %v439 = vadd.f32 0.0, %v438
      %v440 = vpop.f32.mrb[0].mxu0
      %v441 = vpop.f32.mrb[0].mxu0
      %v442 = vadd.f32 0.0, %v441
      %v443 = vpop.f32.mrb[0].mxu0
      %444 = vmatprep.mubr.bf16.mxu0 0
      %445 = vmatmul.mubr.bf16.gmra.mrb[0].mxu0 %v298
      %v446 = vpop.f32.mrb[0].mxu0
      %v447 = vadd.f32 0.0, %v446
      %v448 = vpop.f32.mrb[0].mxu0
      %v449 = vpop.f32.mrb[0].mxu0
      %v450 = vadd.f32 0.0, %v449
      %v451 = vpop.f32.mrb[0].mxu0
      %452 = vmatprep.mubr.bf16.mxu0 0
      %453 = vmatmul.mubr.bf16.gmra.mrb[0].mxu0 %v301
      %v454 = vpop.f32.mrb[0].mxu0
      %v455 = vadd.f32 0.0, %v454
      %v456 = vpop.f32.mrb[0].mxu0
      %v457 = vpop.f32.mrb[0].mxu0
      %v458 = vadd.f32 0.0, %v457
      %v459 = vpop.f32.mrb[0].mxu0
      %460 = vmatprep.mubr.bf16.mxu0 0
      %461 = vmatmul.mubr.bf16.gmra.mrb[0].mxu0 %v304
      %v462 = vpop.f32.mrb[0].mxu0
      %v463 = vadd.f32 0.0, %v462
      %v464 = vpop.f32.mrb[0].mxu0
      %v465 = vpop.f32.mrb[0].mxu0
      %v466 = vadd.f32 0.0, %v465
      %v467 = vpop.f32.mrb[0].mxu0
      %468 = vmatprep.mubr.bf16.mxu0 0
      %469 = vmatmul.mubr.bf16.gmra.mrb[0].mxu0 %v307
      %v470 = vpop.f32.mrb[0].mxu0
      %v471 = vadd.f32 0.0, %v470
      %v472 = vpop.f32.mrb[0].mxu0
      %v473 = vpop.f32.mrb[0].mxu0
      %v474 = vadd.f32 0.0, %v473
      %v475 = vpop.f32.mrb[0].mxu0
      %476 = vdwg.mxu0
      %vm477 = vcmask 64512
      %478 = vst.msk [vmem:[#allocation2] sm:$0xff] %vm477, %v351
      %479 = vst.msk [vmem:[#allocation2 + $0x8] sm:$0xff] %vm477, %v354
      %480 = vst.msk [vmem:[#allocation2 + $0x10] sm:$0xff] %vm477, %v359
      %481 = vst.msk [vmem:[#allocation2 + $0x18] sm:$0xff] %vm477, %v362
      %482 = vst.msk [vmem:[#allocation2 + $0x20] sm:$0xff] %vm477, %v367
      %483 = vst.msk [vmem:[#allocation2 + $0x28] sm:$0xff] %vm477, %v370
      %484 = vst.msk [vmem:[#allocation2 + $0x30] sm:$0xff] %vm477, %v375
      %485 = vst.msk [vmem:[#allocation2 + $0x38] sm:$0xff] %vm477, %v378
      %486 = vst.msk [vmem:[#allocation2 + $0x40] sm:$0xff] %vm477, %v383
      %487 = vst.msk [vmem:[#allocation2 + $0x48] sm:$0xff] %vm477, %v386
      %488 = vst.msk [vmem:[#allocation2 + $0x50] sm:$0xff] %vm477, %v391
      %489 = vst.msk [vmem:[#allocation2 + $0x58] sm:$0xff] %vm477, %v394
      %490 = vst.msk [vmem:[#allocation2 + $0x60] sm:$0xff] %vm477, %v399
      %491 = vst.msk [vmem:[#allocation2 + $0x68] sm:$0xff] %vm477, %v402
      %492 = vst.msk [vmem:[#allocation2 + $0x70] sm:$0xff] %vm477, %v407
      %493 = vst.msk [vmem:[#allocation2 + $0x78] sm:$0xff] %vm477, %v410
      %494 = vst.msk [vmem:[#allocation2 + $0x80] sm:$0xff] %vm477, %v415
      %495 = vst.msk [vmem:[#allocation2 + $0x88] sm:$0xff] %vm477, %v418
      %496 = vst.msk [vmem:[#allocation2 + $0x90] sm:$0xff] %vm477, %v423
      %497 = vst.msk [vmem:[#allocation2 + $0x98] sm:$0xff] %vm477, %v426
      %498 = vst.msk [vmem:[#allocation2 + $0xa0] sm:$0xff] %vm477, %v431
      %499 = vst.msk [vmem:[#allocation2 + $0xa8] sm:$0xff] %vm477, %v434
      %500 = vst.msk [vmem:[#allocation2 + $0xb0] sm:$0xff] %vm477, %v439
      %501 = vst.msk [vmem:[#allocation2 + $0xb8] sm:$0xff] %vm477, %v442
      %502 = vst.msk [vmem:[#allocation2 + $0xc0] sm:$0xff] %vm477, %v447
      %503 = vst.msk [vmem:[#allocation2 + $0xc8] sm:$0xff] %vm477, %v450
      %504 = vst.msk [vmem:[#allocation2 + $0xd0] sm:$0xff] %vm477, %v455
      %505 = vst.msk [vmem:[#allocation2 + $0xd8] sm:$0xff] %vm477, %v458
      %506 = vst.msk [vmem:[#allocation2 + $0xe0] sm:$0xff] %vm477, %v463
      %507 = vst.msk [vmem:[#allocation2 + $0xe8] sm:$0xff] %vm477, %v466
      %508 = vst.msk [vmem:[#allocation2 + $0xf0] sm:$0xff] %vm477, %v471
      %509 = vst.msk [vmem:[#allocation2 + $0xf8] sm:$0xff] %vm477, %v474
      %v540 = vrot.slane %v210, 7
      %v541 = vrot.slane %v211, 7
      %v542 = vsel %vm309, %v540, %v541
      %v543 = vrot.slane %v212, 7
      %v544 = vsel %vm309, %v541, %v543
      %v545 = vrot.slane %v213, 7
      %v546 = vsel %vm309, %v543, %v545
      %v547 = vrot.slane %v214, 7
      %v548 = vsel %vm309, %v545, %v547
      %v549 = vrot.slane %v215, 7
      %v550 = vsel %vm309, %v547, %v549
      %v551 = vrot.slane %v216, 7
      %v552 = vsel %vm309, %v549, %v551
      %v553 = vrot.slane %v217, 7
      %v554 = vsel %vm309, %v551, %v553
      %v555 = vrot.slane %v218, 7
      %v556 = vsel %vm309, %v553, %v555
      %v557 = vrot.slane %v219, 7
      %v558 = vsel %vm309, %v555, %v557
      %v559 = vrot.slane %v220, 7
      %v560 = vsel %vm309, %v557, %v559
      %v561 = vrot.slane %v221, 7
      %v562 = vsel %vm309, %v559, %v561
      %v563 = vrot.slane %v222, 7
      %v564 = vsel %vm309, %v561, %v563
      %v565 = vrot.slane %v223, 7
      %v566 = vsel %vm309, %v563, %v565
      %v567 = vrot.slane %v224, 7
      %v568 = vsel %vm309, %v565, %v567
      %v569 = vrot.slane %v225, 7
      %v570 = vsel %vm309, %v567, %v569
      %v571 = vrot.slane %v226, 7
      %v572 = vsel %vm309, %v569, %v571
      %v573 = vrot.slane %v227, 7
      %v574 = vsel %vm309, %v571, %v573
      %v575 = vrot.slane %v228, 7
      %v576 = vsel %vm309, %v573, %v575
      %v577 = vrot.slane %v229, 7
      %v578 = vsel %vm309, %v575, %v577
      %v579 = vrot.slane %v230, 7
      %v580 = vsel %vm309, %v577, %v579
      %v581 = vrot.slane %v231, 7
      %v582 = vsel %vm309, %v579, %v581
      %v583 = vrot.slane %v232, 7
      %v584 = vsel %vm309, %v581, %v583
      %v585 = vrot.slane %v233, 7
      %v586 = vsel %vm309, %v583, %v585
      %v587 = vrot.slane %v234, 7
      %v588 = vsel %vm309, %v585, %v587
      %v589 = vrot.slane %v235, 7
      %v590 = vsel %vm309, %v587, %v589
      %v591 = vrot.slane %v236, 7
      %v592 = vsel %vm309, %v589, %v591
      %v593 = vrot.slane %v237, 7
      %v594 = vsel %vm309, %v591, %v593
      %v595 = vrot.slane %v238, 7
      %v596 = vsel %vm309, %v593, %v595
      %v597 = vrot.slane %v239, 7
      %v598 = vsel %vm309, %v595, %v597
      %v629 = vsel %vm309, 0.0, %v540
      %v630 = vadd.s32 %v178, 4294967295
      %v631 = vadd.s32 %v179, 4294967295
      %v632 = vadd.s32 %v180, 4294967295
      %v633 = vadd.s32 %v181, 4294967295
      %v634 = vadd.s32 %v182, 4294967295
      %v635 = vadd.s32 %v183, 4294967295
      %v636 = vadd.s32 %v184, 4294967295
      %v637 = vadd.s32 %v185, 4294967295
      %v638 = vadd.s32 %v186, 4294967295
      %v639 = vadd.s32 %v187, 4294967295
      %v640 = vadd.s32 %v188, 4294967295
      %v641 = vadd.s32 %v189, 4294967295
      %v642 = vadd.s32 %v190, 4294967295
      %v643 = vadd.s32 %v191, 4294967295
      %v644 = vadd.s32 %v192, 4294967295
      %v645 = vadd.s32 %v193, 4294967295
      %v646 = vadd.s32 %v194, 4294967295
      %v647 = vadd.s32 %v195, 4294967295
      %v648 = vadd.s32 %v196, 4294967295
      %v649 = vadd.s32 %v197, 4294967295
      %v650 = vadd.s32 %v198, 4294967295
      %v651 = vadd.s32 %v199, 4294967295
      %v652 = vadd.s32 %v200, 4294967295
      %v653 = vadd.s32 %v201, 4294967295
      %v654 = vadd.s32 %v202, 4294967295
      %v655 = vadd.s32 %v203, 4294967295
      %v656 = vadd.s32 %v204, 4294967295
      %v657 = vadd.s32 %v205, 4294967295
      %v658 = vadd.s32 %v206, 4294967295
      %v659 = vadd.s32 %v207, 4294967295
      %v660 = vadd.s32 %v208, 4294967295
      %v661 = vadd.s32 %v209, 4294967295
      %vm662 = vcmp.ge.s32.totalorder %v630, 0
      %vm663 = vcmp.ge.s32.totalorder %v631, 0
      %vm664 = vcmp.ge.s32.totalorder %v632, 0
      %vm665 = vcmp.ge.s32.totalorder %v633, 0
      %vm666 = vcmp.ge.s32.totalorder %v634, 0
      %vm667 = vcmp.ge.s32.totalorder %v635, 0
      %vm668 = vcmp.ge.s32.totalorder %v636, 0
      %vm669 = vcmp.ge.s32.totalorder %v637, 0
      %vm670 = vcmp.ge.s32.totalorder %v638, 0
      %vm671 = vcmp.ge.s32.totalorder %v639, 0
      %vm672 = vcmp.ge.s32.totalorder %v640, 0
      %vm673 = vcmp.ge.s32.totalorder %v641, 0
      %vm674 = vcmp.ge.s32.totalorder %v642, 0
      %vm675 = vcmp.ge.s32.totalorder %v643, 0
      %vm676 = vcmp.ge.s32.totalorder %v644, 0
      %vm677 = vcmp.ge.s32.totalorder %v645, 0
      %vm678 = vcmp.ge.s32.totalorder %v646, 0
      %vm679 = vcmp.ge.s32.totalorder %v647, 0
      %vm680 = vcmp.ge.s32.totalorder %v648, 0
      %vm681 = vcmp.ge.s32.totalorder %v649, 0
      %vm682 = vcmp.ge.s32.totalorder %v650, 0
      %vm683 = vcmp.ge.s32.totalorder %v651, 0
      %vm684 = vcmp.ge.s32.totalorder %v652, 0
      %vm685 = vcmp.ge.s32.totalorder %v653, 0
      %vm686 = vcmp.ge.s32.totalorder %v654, 0
      %vm687 = vcmp.ge.s32.totalorder %v655, 0
      %vm688 = vcmp.ge.s32.totalorder %v656, 0
      %vm689 = vcmp.ge.s32.totalorder %v657, 0
      %vm690 = vcmp.ge.s32.totalorder %v658, 0
      %vm691 = vcmp.ge.s32.totalorder %v659, 0
      %vm692 = vcmp.ge.s32.totalorder %v660, 0
      %vm693 = vcmp.ge.s32.totalorder %v661, 0
      %vm694 = vcmp.lt.s32.totalorder %v630, 16
      %vm695 = vcmp.lt.s32.totalorder %v631, 16
      %vm696 = vcmp.lt.s32.totalorder %v632, 16
      %vm697 = vcmp.lt.s32.totalorder %v633, 16
      %vm698 = vcmp.lt.s32.totalorder %v634, 16
      %vm699 = vcmp.lt.s32.totalorder %v635, 16
      %vm700 = vcmp.lt.s32.totalorder %v636, 16
      %vm701 = vcmp.lt.s32.totalorder %v637, 16
      %vm702 = vcmp.lt.s32.totalorder %v638, 16
      %vm703 = vcmp.lt.s32.totalorder %v639, 16
      %vm704 = vcmp.lt.s32.totalorder %v640, 16
      %vm705 = vcmp.lt.s32.totalorder %v641, 16
      %vm706 = vcmp.lt.s32.totalorder %v642, 16
      %vm707 = vcmp.lt.s32.totalorder %v643, 16
      %vm708 = vcmp.lt.s32.totalorder %v644, 16
      %vm709 = vcmp.lt.s32.totalorder %v645, 16
      %vm710 = vcmp.lt.s32.totalorder %v646, 16
      %vm711 = vcmp.lt.s32.totalorder %v647, 16
      %vm712 = vcmp.lt.s32.totalorder %v648, 16
      %vm713 = vcmp.lt.s32.totalorder %v649, 16
      %vm714 = vcmp.lt.s32.totalorder %v650, 16
      %vm715 = vcmp.lt.s32.totalorder %v651, 16
      %vm716 = vcmp.lt.s32.totalorder %v652, 16
      %vm717 = vcmp.lt.s32.totalorder %v653, 16
      %vm718 = vcmp.lt.s32.totalorder %v654, 16
      %vm719 = vcmp.lt.s32.totalorder %v655, 16
      %vm720 = vcmp.lt.s32.totalorder %v656, 16
      %vm721 = vcmp.lt.s32.totalorder %v657, 16
      %vm722 = vcmp.lt.s32.totalorder %v658, 16
      %vm723 = vcmp.lt.s32.totalorder %v659, 16
      %vm724 = vcmp.lt.s32.totalorder %v660, 16
      %vm725 = vcmp.lt.s32.totalorder %v661, 16
      %vm726 = vmand %vm662, %vm694
      %vm727 = vmand %vm663, %vm695
      %vm728 = vmand %vm664, %vm696
      %vm729 = vmand %vm665, %vm697
      %vm730 = vmand %vm666, %vm698
      %vm731 = vmand %vm667, %vm699
      %vm732 = vmand %vm668, %vm700
      %vm733 = vmand %vm669, %vm701
      %vm734 = vmand %vm670, %vm702
      %vm735 = vmand %vm671, %vm703
      %vm736 = vmand %vm672, %vm704
      %vm737 = vmand %vm673, %vm705
      %vm738 = vmand %vm674, %vm706
      %vm739 = vmand %vm675, %vm707
      %vm740 = vmand %vm676, %vm708
      %vm741 = vmand %vm677, %vm709
      %vm742 = vmand %vm678, %vm710
      %vm743 = vmand %vm679, %vm711
      %vm744 = vmand %vm680, %vm712
      %vm745 = vmand %vm681, %vm713
      %vm746 = vmand %vm682, %vm714
      %vm747 = vmand %vm683, %vm715
      %vm748 = vmand %vm684, %vm716
      %vm749 = vmand %vm685, %vm717
      %vm750 = vmand %vm686, %vm718
      %vm751 = vmand %vm687, %vm719
      %vm752 = vmand %vm688, %vm720
      %vm753 = vmand %vm689, %vm721
      %vm754 = vmand %vm690, %vm722
      %vm755 = vmand %vm691, %vm723
      %vm756 = vmand %vm692, %vm724
      %vm757 = vmand %vm693, %vm725
      %v758 = vsel %vm726, 1, 0
      %v759 = vsel %vm727, 1, 0
      %v760 = vsel %vm728, 1, 0
      %v761 = vsel %vm729, 1, 0
      %v762 = vsel %vm730, 1, 0
      %v763 = vsel %vm731, 1, 0
      %v764 = vsel %vm732, 1, 0
      %v765 = vsel %vm733, 1, 0
      %v766 = vsel %vm734, 1, 0
      %v767 = vsel %vm735, 1, 0
      %v768 = vsel %vm736, 1, 0
      %v769 = vsel %vm737, 1, 0
      %v770 = vsel %vm738, 1, 0
      %v771 = vsel %vm739, 1, 0
      %v772 = vsel %vm740, 1, 0
      %v773 = vsel %vm741, 1, 0
      %v774 = vsel %vm742, 1, 0
      %v775 = vsel %vm743, 1, 0
      %v776 = vsel %vm744, 1, 0
      %v777 = vsel %vm745, 1, 0
      %v778 = vsel %vm746, 1, 0
      %v779 = vsel %vm747, 1, 0
      %v780 = vsel %vm748, 1, 0
      %v781 = vsel %vm749, 1, 0
      %v782 = vsel %vm750, 1, 0
      %v783 = vsel %vm751, 1, 0
      %v784 = vsel %vm752, 1, 0
      %v785 = vsel %vm753, 1, 0
      %v786 = vsel %vm754, 1, 0
      %v787 = vsel %vm755, 1, 0
      %v788 = vsel %vm756, 1, 0
      %v789 = vsel %vm757, 1, 0
      %vm790 = vcmp.eq.s32.totalorder %v758, 1
      %vm791 = vcmp.eq.s32.totalorder %v759, 1
      %vm792 = vcmp.eq.s32.totalorder %v760, 1
      %vm793 = vcmp.eq.s32.totalorder %v761, 1
      %vm794 = vcmp.eq.s32.totalorder %v762, 1
      %vm795 = vcmp.eq.s32.totalorder %v763, 1
      %vm796 = vcmp.eq.s32.totalorder %v764, 1
      %vm797 = vcmp.eq.s32.totalorder %v765, 1
      %vm798 = vcmp.eq.s32.totalorder %v766, 1
      %vm799 = vcmp.eq.s32.totalorder %v767, 1
      %vm800 = vcmp.eq.s32.totalorder %v768, 1
      %vm801 = vcmp.eq.s32.totalorder %v769, 1
      %vm802 = vcmp.eq.s32.totalorder %v770, 1
      %vm803 = vcmp.eq.s32.totalorder %v771, 1
      %vm804 = vcmp.eq.s32.totalorder %v772, 1
      %vm805 = vcmp.eq.s32.totalorder %v773, 1
      %vm806 = vcmp.eq.s32.totalorder %v774, 1
      %vm807 = vcmp.eq.s32.totalorder %v775, 1
      %vm808 = vcmp.eq.s32.totalorder %v776, 1
      %vm809 = vcmp.eq.s32.totalorder %v777, 1
      %vm810 = vcmp.eq.s32.totalorder %v778, 1
      %vm811 = vcmp.eq.s32.totalorder %v779, 1
      %vm812 = vcmp.eq.s32.totalorder %v780, 1
      %vm813 = vcmp.eq.s32.totalorder %v781, 1
      %vm814 = vcmp.eq.s32.totalorder %v782, 1
      %vm815 = vcmp.eq.s32.totalorder %v783, 1
      %vm816 = vcmp.eq.s32.totalorder %v784, 1
      %vm817 = vcmp.eq.s32.totalorder %v785, 1
      %vm818 = vcmp.eq.s32.totalorder %v786, 1
      %vm819 = vcmp.eq.s32.totalorder %v787, 1
      %vm820 = vcmp.eq.s32.totalorder %v788, 1
      %vm821 = vcmp.eq.s32.totalorder %v789, 1
      %v822 = vsel %vm792, %v629, 0.0
      %v823 = vsel %vm793, %v542, 0.0
      %v824 = vsel %vm794, %v544, 0.0
      %v825 = vsel %vm795, %v546, 0.0
      %v826 = vsel %vm796, %v548, 0.0
      %v827 = vsel %vm797, %v550, 0.0
      %v828 = vsel %vm798, %v552, 0.0
      %v829 = vsel %vm799, %v554, 0.0
      %v830 = vsel %vm800, %v556, 0.0
      %v831 = vsel %vm801, %v558, 0.0
      %v832 = vsel %vm802, %v560, 0.0
      %v833 = vsel %vm803, %v562, 0.0
      %v834 = vsel %vm804, %v564, 0.0
      %v835 = vsel %vm805, %v566, 0.0
      %v836 = vsel %vm806, %v568, 0.0
      %v837 = vsel %vm807, %v570, 0.0
      %v838 = vsel %vm808, %v572, 0.0
      %v839 = vsel %vm809, %v574, 0.0
      %v840 = vsel %vm810, %v576, 0.0
      %v841 = vsel %vm811, %v578, 0.0
      %v842 = vsel %vm812, %v580, 0.0
      %v843 = vsel %vm813, %v582, 0.0
      %v844 = vsel %vm814, %v584, 0.0
      %v845 = vsel %vm815, %v586, 0.0
      %v846 = vsel %vm816, %v588, 0.0
      %v847 = vsel %vm817, %v590, 0.0
      %v848 = vsel %vm818, %v592, 0.0
      %v849 = vsel %vm819, %v594, 0.0
      %v850 = vsel %vm820, %v596, 0.0
      %v851 = vsel %vm821, %v598, 0.0
      %v852 = vld [vmem:[#allocation2] sm:$0xff]
      %v853 = vld [vmem:[#allocation2 + $0x8] sm:$0xff]
      %v854 = vld [vmem:[#allocation2 + $0x10] sm:$0xff]
      %v855 = vld [vmem:[#allocation2 + $0x18] sm:$0xff]
      %v856 = vld [vmem:[#allocation2 + $0x20] sm:$0xff]
      %v857 = vld [vmem:[#allocation2 + $0x28] sm:$0xff]
      %v858 = vld [vmem:[#allocation2 + $0x30] sm:$0xff]
      %v859 = vld [vmem:[#allocation2 + $0x38] sm:$0xff]
      %v860 = vld [vmem:[#allocation2 + $0x40] sm:$0xff]
      %v861 = vld [vmem:[#allocation2 + $0x48] sm:$0xff]
      %v862 = vld [vmem:[#allocation2 + $0x50] sm:$0xff]
      %v863 = vld [vmem:[#allocation2 + $0x58] sm:$0xff]
      %v864 = vld [vmem:[#allocation2 + $0x60] sm:$0xff]
      %v865 = vld [vmem:[#allocation2 + $0x68] sm:$0xff]
      %v866 = vld [vmem:[#allocation2 + $0x70] sm:$0xff]
      %v867 = vld [vmem:[#allocation2 + $0x78] sm:$0xff]
      %v868 = vld [vmem:[#allocation2 + $0x80] sm:$0xff]
      %v869 = vld [vmem:[#allocation2 + $0x88] sm:$0xff]
      %v870 = vld [vmem:[#allocation2 + $0x90] sm:$0xff]
      %v871 = vld [vmem:[#allocation2 + $0x98] sm:$0xff]
      %v872 = vld [vmem:[#allocation2 + $0xa0] sm:$0xff]
      %v873 = vld [vmem:[#allocation2 + $0xa8] sm:$0xff]
      %v874 = vld [vmem:[#allocation2 + $0xb0] sm:$0xff]
      %v875 = vld [vmem:[#allocation2 + $0xb8] sm:$0xff]
      %v876 = vld [vmem:[#allocation2 + $0xc0] sm:$0xff]
      %v877 = vld [vmem:[#allocation2 + $0xc8] sm:$0xff]
      %v878 = vld [vmem:[#allocation2 + $0xd0] sm:$0xff]
      %v879 = vld [vmem:[#allocation2 + $0xd8] sm:$0xff]
      %v880 = vld [vmem:[#allocation2 + $0xe0] sm:$0xff]
      %v881 = vld [vmem:[#allocation2 + $0xe8] sm:$0xff]
      %v882 = vld [vmem:[#allocation2 + $0xf0] sm:$0xff]
      %v883 = vld [vmem:[#allocation2 + $0xf8] sm:$0xff]
      %v884 = vpack.c.bf16 0.0, 0.0
      %v885 = vpack.c.bf16 %v823, %v822
      %v886 = vpack.c.bf16 %v825, %v824
      %v887 = vpack.c.bf16 %v827, %v826
      %v888 = vpack.c.bf16 %v829, %v828
      %v889 = vpack.c.bf16 %v831, %v830
      %v890 = vpack.c.bf16 %v833, %v832
      %v891 = vpack.c.bf16 %v835, %v834
      %v892 = vpack.c.bf16 %v837, %v836
      %v893 = vpack.c.bf16 %v839, %v838
      %v894 = vpack.c.bf16 %v841, %v840
      %v895 = vpack.c.bf16 %v843, %v842
      %v896 = vpack.c.bf16 %v845, %v844
      %v897 = vpack.c.bf16 %v847, %v846
      %v898 = vpack.c.bf16 %v849, %v848
      %v899 = vpack.c.bf16 %v851, %v850
      %v900 = vld [vmem:[%s1] sm:$0x3]
      %v902 = vsel %vm260, %v884, 0
      %v905 = vsel %vm260, %v885, 0
      %v908 = vsel %vm260, %v886, 0
      %v911 = vsel %vm260, %v887, 0
      %v914 = vsel %vm260, %v888, 0
      %v917 = vsel %vm260, %v889, 0
      %v920 = vsel %vm260, %v890, 0
      %v923 = vsel %vm260, %v891, 0
      %v926 = vsel %vm260, %v892, 0
      %v929 = vsel %vm260, %v893, 0
      %v932 = vsel %vm260, %v894, 0
      %v935 = vsel %vm260, %v895, 0
      %v938 = vsel %vm260, %v896, 0
      %v941 = vsel %vm260, %v897, 0
      %v944 = vsel %vm260, %v898, 0
      %v947 = vsel %vm260, %v899, 0
      %v950 = vand.u32 %v900, %v312
      %952 = vmatprep.subr.bf16.mxu0 0
      %953 = vmatpush1.bf16.msra.mxu0 %v950
      %954 = vmatprep.subr.bf16.mxu0 0
      %955 = vmatpush1.bf16.msra.mxu0 0
      %956 = vmatprep.subr.bf16.mxu0 0
      %957 = vmatpush1.bf16.msra.mxu0 0
      %958 = vmatprep.subr.bf16.mxu0 0
      %959 = vmatpush1.bf16.msra.mxu0 0
      %960 = vmatprep.subr.bf16.mxu0 0
      %961 = vmatpush1.bf16.msra.mxu0 0
      %962 = vmatprep.subr.bf16.mxu0 0
      %963 = vmatpush1.bf16.msra.mxu0 0
      %964 = vmatprep.subr.bf16.mxu0 0
      %965 = vmatpush1.bf16.msra.mxu0 0
      %966 = vmatprep.subr.bf16.mxu0 0
      %967 = vmatpush1.bf16.msra.mxu0 0
      %968 = vmatprep.subr.bf16.mxu0 0
      %969 = vmatpush1.bf16.msra.mxu0 0
      %970 = vmatprep.subr.bf16.mxu0 0
      %971 = vmatpush1.bf16.msra.mxu0 0
      %972 = vmatprep.subr.bf16.mxu0 0
      %973 = vmatpush1.bf16.msra.mxu0 0
      %974 = vmatprep.subr.bf16.mxu0 0
      %975 = vmatpush1.bf16.msra.mxu0 0
      %976 = vmatprep.subr.bf16.mxu0 0
      %977 = vmatpush1.bf16.msra.mxu0 0
      %978 = vmatprep.subr.bf16.mxu0 0
      %979 = vmatpush1.bf16.msra.mxu0 0
      %980 = vmatprep.subr.bf16.mxu0 0
      %981 = vmatpush1.bf16.msra.mxu0 0
      %982 = vmatprep.subr.bf16.mxu0 0
      %983 = vmatpush1.bf16.msra.mxu0 0
      %984 = vmatprep.mubr.bf16.mxu0 0
      %985 = vmatmul.mubr.bf16.gmra.mrb[0].mxu0 %v902
      %v986 = vpop.f32.mrb[0].mxu0
      %v987 = vadd.f32 0.0, %v986
      %v988 = vpop.f32.mrb[0].mxu0
      %v989 = vpop.f32.mrb[0].mxu0
      %v990 = vadd.f32 0.0, %v989
      %v991 = vpop.f32.mrb[0].mxu0
      %992 = vmatprep.mubr.bf16.mxu0 0
      %993 = vmatmul.mubr.bf16.gmra.mrb[0].mxu0 %v905
      %v994 = vpop.f32.mrb[0].mxu0
      %v995 = vadd.f32 0.0, %v994
      %v996 = vpop.f32.mrb[0].mxu0
      %v997 = vpop.f32.mrb[0].mxu0
      %v998 = vadd.f32 0.0, %v997
      %v999 = vpop.f32.mrb[0].mxu0
      %1000 = vmatprep.mubr.bf16.mxu0 0
      %1001 = vmatmul.mubr.bf16.gmra.mrb[0].mxu0 %v908
      %v1002 = vpop.f32.mrb[0].mxu0
      %v1003 = vadd.f32 0.0, %v1002
      %v1004 = vpop.f32.mrb[0].mxu0
      %v1005 = vpop.f32.mrb[0].mxu0
      %v1006 = vadd.f32 0.0, %v1005
      %v1007 = vpop.f32.mrb[0].mxu0
      %1008 = vmatprep.mubr.bf16.mxu0 0
      %1009 = vmatmul.mubr.bf16.gmra.mrb[0].mxu0 %v911
      %v1010 = vpop.f32.mrb[0].mxu0
      %v1011 = vadd.f32 0.0, %v1010
      %v1012 = vpop.f32.mrb[0].mxu0
      %v1013 = vpop.f32.mrb[0].mxu0
      %v1014 = vadd.f32 0.0, %v1013
      %v1015 = vpop.f32.mrb[0].mxu0
      %1016 = vmatprep.mubr.bf16.mxu0 0
      %1017 = vmatmul.mubr.bf16.gmra.mrb[0].mxu0 %v914
      %v1018 = vpop.f32.mrb[0].mxu0
      %v1019 = vadd.f32 0.0, %v1018
      %v1020 = vpop.f32.mrb[0].mxu0
      %v1021 = vpop.f32.mrb[0].mxu0
      %v1022 = vadd.f32 0.0, %v1021
      %v1023 = vpop.f32.mrb[0].mxu0
      %1024 = vmatprep.mubr.bf16.mxu0 0
      %1025 = vmatmul.mubr.bf16.gmra.mrb[0].mxu0 %v917
      %v1026 = vpop.f32.mrb[0].mxu0
      %v1027 = vadd.f32 0.0, %v1026
      %v1028 = vpop.f32.mrb[0].mxu0
      %v1029 = vpop.f32.mrb[0].mxu0
      %v1030 = vadd.f32 0.0, %v1029
      %v1031 = vpop.f32.mrb[0].mxu0
      %1032 = vmatprep.mubr.bf16.mxu0 0
      %1033 = vmatmul.mubr.bf16.gmra.mrb[0].mxu0 %v920
      %v1034 = vpop.f32.mrb[0].mxu0
      %v1035 = vadd.f32 0.0, %v1034
      %v1036 = vpop.f32.mrb[0].mxu0
      %v1037 = vpop.f32.mrb[0].mxu0
      %v1038 = vadd.f32 0.0, %v1037
      %v1039 = vpop.f32.mrb[0].mxu0
      %1040 = vmatprep.mubr.bf16.mxu0 0
      %1041 = vmatmul.mubr.bf16.gmra.mrb[0].mxu0 %v923
      %v1042 = vpop.f32.mrb[0].mxu0
      %v1043 = vadd.f32 0.0, %v1042
      %v1044 = vpop.f32.mrb[0].mxu0
      %v1045 = vpop.f32.mrb[0].mxu0
      %v1046 = vadd.f32 0.0, %v1045
      %v1047 = vpop.f32.mrb[0].mxu0
      %1048 = vmatprep.mubr.bf16.mxu0 0
      %1049 = vmatmul.mubr.bf16.gmra.mrb[0].mxu0 %v926
      %v1050 = vpop.f32.mrb[0].mxu0
      %v1051 = vadd.f32 0.0, %v1050
      %v1052 = vpop.f32.mrb[0].mxu0
      %v1053 = vpop.f32.mrb[0].mxu0
      %v1054 = vadd.f32 0.0, %v1053
      %v1055 = vpop.f32.mrb[0].mxu0
      %1056 = vmatprep.mubr.bf16.mxu0 0
      %1057 = vmatmul.mubr.bf16.gmra.mrb[0].mxu0 %v929
      %v1058 = vpop.f32.mrb[0].mxu0
      %v1059 = vadd.f32 0.0, %v1058
      %v1060 = vpop.f32.mrb[0].mxu0
      %v1061 = vpop.f32.mrb[0].mxu0
      %v1062 = vadd.f32 0.0, %v1061
      %v1063 = vpop.f32.mrb[0].mxu0
      %1064 = vmatprep.mubr.bf16.mxu0 0
      %1065 = vmatmul.mubr.bf16.gmra.mrb[0].mxu0 %v932
      %v1066 = vpop.f32.mrb[0].mxu0
      %v1067 = vadd.f32 0.0, %v1066
      %v1068 = vpop.f32.mrb[0].mxu0
      %v1069 = vpop.f32.mrb[0].mxu0
      %v1070 = vadd.f32 0.0, %v1069
      %v1071 = vpop.f32.mrb[0].mxu0
      %1072 = vmatprep.mubr.bf16.mxu0 0
      %1073 = vmatmul.mubr.bf16.gmra.mrb[0].mxu0 %v935
      %v1074 = vpop.f32.mrb[0].mxu0
      %v1075 = vadd.f32 0.0, %v1074
      %v1076 = vpop.f32.mrb[0].mxu0
      %v1077 = vpop.f32.mrb[0].mxu0
      %v1078 = vadd.f32 0.0, %v1077
      %v1079 = vpop.f32.mrb[0].mxu0
      %1080 = vmatprep.mubr.bf16.mxu0 0
      %1081 = vmatmul.mubr.bf16.gmra.mrb[0].mxu0 %v938
      %v1082 = vpop.f32.mrb[0].mxu0
      %v1083 = vadd.f32 0.0, %v1082
      %v1084 = vpop.f32.mrb[0].mxu0
      %v1085 = vpop.f32.mrb[0].mxu0
      %v1086 = vadd.f32 0.0, %v1085
      %v1087 = vpop.f32.mrb[0].mxu0
      %1088 = vmatprep.mubr.bf16.mxu0 0
      %1089 = vmatmul.mubr.bf16.gmra.mrb[0].mxu0 %v941
      %v1090 = vpop.f32.mrb[0].mxu0
      %v1091 = vadd.f32 0.0, %v1090
      %v1092 = vpop.f32.mrb[0].mxu0
      %v1093 = vpop.f32.mrb[0].mxu0
      %v1094 = vadd.f32 0.0, %v1093
      %v1095 = vpop.f32.mrb[0].mxu0
      %1096 = vmatprep.mubr.bf16.mxu0 0
      %1097 = vmatmul.mubr.bf16.gmra.mrb[0].mxu0 %v944
      %v1098 = vpop.f32.mrb[0].mxu0
      %v1099 = vadd.f32 0.0, %v1098
      %v1100 = vpop.f32.mrb[0].mxu0
      %v1101 = vpop.f32.mrb[0].mxu0
      %v1102 = vadd.f32 0.0, %v1101
      %v1103 = vpop.f32.mrb[0].mxu0
      %1104 = vmatprep.mubr.bf16.mxu0 0
      %1105 = vmatmul.mubr.bf16.gmra.mrb[0].mxu0 %v947
      %v1106 = vpop.f32.mrb[0].mxu0
      %v1107 = vadd.f32 0.0, %v1106
      %v1108 = vpop.f32.mrb[0].mxu0
      %v1109 = vpop.f32.mrb[0].mxu0
      %v1110 = vadd.f32 0.0, %v1109
      %v1111 = vpop.f32.mrb[0].mxu0
      %1112 = vdwg.mxu0
      %v1113 = vadd.f32 %v852, %v987
      %v1114 = vadd.f32 %v853, %v990
      %v1115 = vadd.f32 %v854, %v995
      %v1116 = vadd.f32 %v855, %v998
      %v1117 = vadd.f32 %v856, %v1003
      %v1118 = vadd.f32 %v857, %v1006
      %v1119 = vadd.f32 %v858, %v1011
      %v1120 = vadd.f32 %v859, %v1014
      %v1121 = vadd.f32 %v860, %v1019
      %v1122 = vadd.f32 %v861, %v1022
      %v1123 = vadd.f32 %v862, %v1027
      %v1124 = vadd.f32 %v863, %v1030
      %v1125 = vadd.f32 %v864, %v1035
      %v1126 = vadd.f32 %v865, %v1038
      %v1127 = vadd.f32 %v866, %v1043
      %v1128 = vadd.f32 %v867, %v1046
      %v1129 = vadd.f32 %v868, %v1051
      %v1130 = vadd.f32 %v869, %v1054
      %v1131 = vadd.f32 %v870, %v1059
      %v1132 = vadd.f32 %v871, %v1062
      %v1133 = vadd.f32 %v872, %v1067
      %v1134 = vadd.f32 %v873, %v1070
      %v1135 = vadd.f32 %v874, %v1075
      %v1136 = vadd.f32 %v875, %v1078
      %v1137 = vadd.f32 %v876, %v1083
      %v1138 = vadd.f32 %v877, %v1086
      %v1139 = vadd.f32 %v878, %v1091
      %v1140 = vadd.f32 %v879, %v1094
      %v1141 = vadd.f32 %v880, %v1099
      %v1142 = vadd.f32 %v881, %v1102
      %v1143 = vadd.f32 %v882, %v1107
      %v1144 = vadd.f32 %v883, %v1110
      %1145 = vst.msk [vmem:[#allocation2] sm:$0xff] %vm477, %v1113
      %1146 = vst.msk [vmem:[#allocation2 + $0x8] sm:$0xff] %vm477, %v1114
      %1147 = vst.msk [vmem:[#allocation2 + $0x10] sm:$0xff] %vm477, %v1115
      %1148 = vst.msk [vmem:[#allocation2 + $0x18] sm:$0xff] %vm477, %v1116
      %1149 = vst.msk [vmem:[#allocation2 + $0x20] sm:$0xff] %vm477, %v1117
      %1150 = vst.msk [vmem:[#allocation2 + $0x28] sm:$0xff] %vm477, %v1118
      %1151 = vst.msk [vmem:[#allocation2 + $0x30] sm:$0xff] %vm477, %v1119
      %1152 = vst.msk [vmem:[#allocation2 + $0x38] sm:$0xff] %vm477, %v1120
      %1153 = vst.msk [vmem:[#allocation2 + $0x40] sm:$0xff] %vm477, %v1121
      %1154 = vst.msk [vmem:[#allocation2 + $0x48] sm:$0xff] %vm477, %v1122
      %1155 = vst.msk [vmem:[#allocation2 + $0x50] sm:$0xff] %vm477, %v1123
      %1156 = vst.msk [vmem:[#allocation2 + $0x58] sm:$0xff] %vm477, %v1124
      %1157 = vst.msk [vmem:[#allocation2 + $0x60] sm:$0xff] %vm477, %v1125
      %1158 = vst.msk [vmem:[#allocation2 + $0x68] sm:$0xff] %vm477, %v1126
      %1159 = vst.msk [vmem:[#allocation2 + $0x70] sm:$0xff] %vm477, %v1127
      %1160 = vst.msk [vmem:[#allocation2 + $0x78] sm:$0xff] %vm477, %v1128
      %1161 = vst.msk [vmem:[#allocation2 + $0x80] sm:$0xff] %vm477, %v1129
      %1162 = vst.msk [vmem:[#allocation2 + $0x88] sm:$0xff] %vm477, %v1130
      %1163 = vst.msk [vmem:[#allocation2 + $0x90] sm:$0xff] %vm477, %v1131
      %1164 = vst.msk [vmem:[#allocation2 + $0x98] sm:$0xff] %vm477, %v1132
      %1165 = vst.msk [vmem:[#allocation2 + $0xa0] sm:$0xff] %vm477, %v1133
      %1166 = vst.msk [vmem:[#allocation2 + $0xa8] sm:$0xff] %vm477, %v1134
      %1167 = vst.msk [vmem:[#allocation2 + $0xb0] sm:$0xff] %vm477, %v1135
      %1168 = vst.msk [vmem:[#allocation2 + $0xb8] sm:$0xff] %vm477, %v1136
      %1169 = vst.msk [vmem:[#allocation2 + $0xc0] sm:$0xff] %vm477, %v1137
      %1170 = vst.msk [vmem:[#allocation2 + $0xc8] sm:$0xff] %vm477, %v1138
      %1171 = vst.msk [vmem:[#allocation2 + $0xd0] sm:$0xff] %vm477, %v1139
      %1172 = vst.msk [vmem:[#allocation2 + $0xd8] sm:$0xff] %vm477, %v1140
      %1173 = vst.msk [vmem:[#allocation2 + $0xe0] sm:$0xff] %vm477, %v1141
      %1174 = vst.msk [vmem:[#allocation2 + $0xe8] sm:$0xff] %vm477, %v1142
      %1175 = vst.msk [vmem:[#allocation2 + $0xf0] sm:$0xff] %vm477, %v1143
      %1176 = vst.msk [vmem:[#allocation2 + $0xf8] sm:$0xff] %vm477, %v1144
      %v1177 = vld [vmem:[#allocation2] sm:$0xff]
      %v1178 = vld [vmem:[#allocation2 + $0x8] sm:$0xff]
      %v1179 = vld [vmem:[#allocation2 + $0x10] sm:$0xff]
      %v1180 = vld [vmem:[#allocation2 + $0x18] sm:$0xff]
      %v1181 = vld [vmem:[#allocation2 + $0x20] sm:$0xff]
      %v1182 = vld [vmem:[#allocation2 + $0x28] sm:$0xff]
      %v1183 = vld [vmem:[#allocation2 + $0x30] sm:$0xff]
      %v1184 = vld [vmem:[#allocation2 + $0x38] sm:$0xff]
      %v1185 = vld [vmem:[#allocation2 + $0x40] sm:$0xff]
      %v1186 = vld [vmem:[#allocation2 + $0x48] sm:$0xff]
      %v1187 = vld [vmem:[#allocation2 + $0x50] sm:$0xff]
      %v1188 = vld [vmem:[#allocation2 + $0x58] sm:$0xff]
      %v1189 = vld [vmem:[#allocation2 + $0x60] sm:$0xff]
      %v1190 = vld [vmem:[#allocation2 + $0x68] sm:$0xff]
      %v1191 = vld [vmem:[#allocation2 + $0x70] sm:$0xff]
      %v1192 = vld [vmem:[#allocation2 + $0x78] sm:$0xff]
      %v1193 = vld [vmem:[#allocation2 + $0x80] sm:$0xff]
      %v1194 = vld [vmem:[#allocation2 + $0x88] sm:$0xff]
      %v1195 = vld [vmem:[#allocation2 + $0x90] sm:$0xff]
      %v1196 = vld [vmem:[#allocation2 + $0x98] sm:$0xff]
      %v1197 = vld [vmem:[#allocation2 + $0xa0] sm:$0xff]
      %v1198 = vld [vmem:[#allocation2 + $0xa8] sm:$0xff]
      %v1199 = vld [vmem:[#allocation2 + $0xb0] sm:$0xff]
      %v1200 = vld [vmem:[#allocation2 + $0xb8] sm:$0xff]
      %v1201 = vld [vmem:[#allocation2 + $0xc0] sm:$0xff]
      %v1202 = vld [vmem:[#allocation2 + $0xc8] sm:$0xff]
      %v1203 = vld [vmem:[#allocation2 + $0xd0] sm:$0xff]
      %v1204 = vld [vmem:[#allocation2 + $0xd8] sm:$0xff]
      %v1205 = vld [vmem:[#allocation2 + $0xe0] sm:$0xff]
      %v1206 = vld [vmem:[#allocation2 + $0xe8] sm:$0xff]
      %v1207 = vld [vmem:[#allocation2 + $0xf0] sm:$0xff]
      %v1208 = vld [vmem:[#allocation2 + $0xf8] sm:$0xff]
      %s1209 = scalar_lea.vmem %s1, 2
      %v1210 = vld [vmem:[%s1209] sm:$0x3]
      %v1212 = vand.u32 %v1210, %v312
      %1214 = vmatprep.subr.bf16.mxu0 0
      %1215 = vmatpush1.bf16.msra.mxu0 %v1212
      %1216 = vmatprep.subr.bf16.mxu0 0
      %1217 = vmatpush1.bf16.msra.mxu0 0
      %1218 = vmatprep.subr.bf16.mxu0 0
      %1219 = vmatpush1.bf16.msra.mxu0 0
      %1220 = vmatprep.subr.bf16.mxu0 0
      %1221 = vmatpush1.bf16.msra.mxu0 0
      %1222 = vmatprep.subr.bf16.mxu0 0
      %1223 = vmatpush1.bf16.msra.mxu0 0
      %1224 = vmatprep.subr.bf16.mxu0 0
      %1225 = vmatpush1.bf16.msra.mxu0 0
      %1226 = vmatprep.subr.bf16.mxu0 0
      %1227 = vmatpush1.bf16.msra.mxu0 0
      %1228 = vmatprep.subr.bf16.mxu0 0
      %1229 = vmatpush1.bf16.msra.mxu0 0
      %1230 = vmatprep.subr.bf16.mxu0 0
      %1231 = vmatpush1.bf16.msra.mxu0 0
      %1232 = vmatprep.subr.bf16.mxu0 0
      %1233 = vmatpush1.bf16.msra.mxu0 0
      %1234 = vmatprep.subr.bf16.mxu0 0
      %1235 = vmatpush1.bf16.msra.mxu0 0
      %1236 = vmatprep.subr.bf16.mxu0 0
      %1237 = vmatpush1.bf16.msra.mxu0 0
      %1238 = vmatprep.subr.bf16.mxu0 0
      %1239 = vmatpush1.bf16.msra.mxu0 0
      %1240 = vmatprep.subr.bf16.mxu0 0
      %1241 = vmatpush1.bf16.msra.mxu0 0
      %1242 = vmatprep.subr.bf16.mxu0 0
      %1243 = vmatpush1.bf16.msra.mxu0 0
      %1244 = vmatprep.subr.bf16.mxu0 0
      %1245 = vmatpush1.bf16.msra.mxu0 0
      %1246 = vmatprep.mubr.bf16.mxu0 0
      %1247 = vmatmul.mubr.bf16.gmra.mrb[0].mxu0 %v902
      %v1248 = vpop.f32.mrb[0].mxu0
      %v1249 = vadd.f32 0.0, %v1248
      %v1250 = vpop.f32.mrb[0].mxu0
      %v1251 = vpop.f32.mrb[0].mxu0
      %v1252 = vadd.f32 0.0, %v1251
      %v1253 = vpop.f32.mrb[0].mxu0
      %1254 = vmatprep.mubr.bf16.mxu0 0
      %1255 = vmatmul.mubr.bf16.gmra.mrb[0].mxu0 %v262
      %v1256 = vpop.f32.mrb[0].mxu0
      %v1257 = vadd.f32 0.0, %v1256
      %v1258 = vpop.f32.mrb[0].mxu0
      %v1259 = vpop.f32.mrb[0].mxu0
      %v1260 = vadd.f32 0.0, %v1259
      %v1261 = vpop.f32.mrb[0].mxu0
      %1262 = vmatprep.mubr.bf16.mxu0 0
      %1263 = vmatmul.mubr.bf16.gmra.mrb[0].mxu0 %v265
      %v1264 = vpop.f32.mrb[0].mxu0
      %v1265 = vadd.f32 0.0, %v1264
      %v1266 = vpop.f32.mrb[0].mxu0
      %v1267 = vpop.f32.mrb[0].mxu0
      %v1268 = vadd.f32 0.0, %v1267
      %v1269 = vpop.f32.mrb[0].mxu0
      %1270 = vmatprep.mubr.bf16.mxu0 0
      %1271 = vmatmul.mubr.bf16.gmra.mrb[0].mxu0 %v268
      %v1272 = vpop.f32.mrb[0].mxu0
      %v1273 = vadd.f32 0.0, %v1272
      %v1274 = vpop.f32.mrb[0].mxu0
      %v1275 = vpop.f32.mrb[0].mxu0
      %v1276 = vadd.f32 0.0, %v1275
      %v1277 = vpop.f32.mrb[0].mxu0
      %1278 = vmatprep.mubr.bf16.mxu0 0
      %1279 = vmatmul.mubr.bf16.gmra.mrb[0].mxu0 %v271
      %v1280 = vpop.f32.mrb[0].mxu0
      %v1281 = vadd.f32 0.0, %v1280
      %v1282 = vpop.f32.mrb[0].mxu0
      %v1283 = vpop.f32.mrb[0].mxu0
      %v1284 = vadd.f32 0.0, %v1283
      %v1285 = vpop.f32.mrb[0].mxu0
      %1286 = vmatprep.mubr.bf16.mxu0 0
      %1287 = vmatmul.mubr.bf16.gmra.mrb[0].mxu0 %v274
      %v1288 = vpop.f32.mrb[0].mxu0
      %v1289 = vadd.f32 0.0, %v1288
      %v1290 = vpop.f32.mrb[0].mxu0
      %v1291 = vpop.f32.mrb[0].mxu0
      %v1292 = vadd.f32 0.0, %v1291
      %v1293 = vpop.f32.mrb[0].mxu0
      %1294 = vmatprep.mubr.bf16.mxu0 0
      %1295 = vmatmul.mubr.bf16.gmra.mrb[0].mxu0 %v277
      %v1296 = vpop.f32.mrb[0].mxu0
      %v1297 = vadd.f32 0.0, %v1296
      %v1298 = vpop.f32.mrb[0].mxu0
      %v1299 = vpop.f32.mrb[0].mxu0
      %v1300 = vadd.f32 0.0, %v1299
      %v1301 = vpop.f32.mrb[0].mxu0
      %1302 = vmatprep.mubr.bf16.mxu0 0
      %1303 = vmatmul.mubr.bf16.gmra.mrb[0].mxu0 %v280
      %v1304 = vpop.f32.mrb[0].mxu0
      %v1305 = vadd.f32 0.0, %v1304
      %v1306 = vpop.f32.mrb[0].mxu0
      %v1307 = vpop.f32.mrb[0].mxu0
      %v1308 = vadd.f32 0.0, %v1307
      %v1309 = vpop.f32.mrb[0].mxu0
      %1310 = vmatprep.mubr.bf16.mxu0 0
      %1311 = vmatmul.mubr.bf16.gmra.mrb[0].mxu0 %v283
      %v1312 = vpop.f32.mrb[0].mxu0
      %v1313 = vadd.f32 0.0, %v1312
      %v1314 = vpop.f32.mrb[0].mxu0
      %v1315 = vpop.f32.mrb[0].mxu0
      %v1316 = vadd.f32 0.0, %v1315
      %v1317 = vpop.f32.mrb[0].mxu0
      %1318 = vmatprep.mubr.bf16.mxu0 0
      %1319 = vmatmul.mubr.bf16.gmra.mrb[0].mxu0 %v286
      %v1320 = vpop.f32.mrb[0].mxu0
      %v1321 = vadd.f32 0.0, %v1320
      %v1322 = vpop.f32.mrb[0].mxu0
      %v1323 = vpop.f32.mrb[0].mxu0
      %v1324 = vadd.f32 0.0, %v1323
      %v1325 = vpop.f32.mrb[0].mxu0
      %1326 = vmatprep.mubr.bf16.mxu0 0
      %1327 = vmatmul.mubr.bf16.gmra.mrb[0].mxu0 %v289
      %v1328 = vpop.f32.mrb[0].mxu0
      %v1329 = vadd.f32 0.0, %v1328
      %v1330 = vpop.f32.mrb[0].mxu0
      %v1331 = vpop.f32.mrb[0].mxu0
      %v1332 = vadd.f32 0.0, %v1331
      %v1333 = vpop.f32.mrb[0].mxu0
      %1334 = vmatprep.mubr.bf16.mxu0 0
      %1335 = vmatmul.mubr.bf16.gmra.mrb[0].mxu0 %v292
      %v1336 = vpop.f32.mrb[0].mxu0
      %v1337 = vadd.f32 0.0, %v1336
      %v1338 = vpop.f32.mrb[0].mxu0
      %v1339 = vpop.f32.mrb[0].mxu0
      %v1340 = vadd.f32 0.0, %v1339
      %v1341 = vpop.f32.mrb[0].mxu0
      %1342 = vmatprep.mubr.bf16.mxu0 0
      %1343 = vmatmul.mubr.bf16.gmra.mrb[0].mxu0 %v295
      %v1344 = vpop.f32.mrb[0].mxu0
      %v1345 = vadd.f32 0.0, %v1344
      %v1346 = vpop.f32.mrb[0].mxu0
      %v1347 = vpop.f32.mrb[0].mxu0
      %v1348 = vadd.f32 0.0, %v1347
      %v1349 = vpop.f32.mrb[0].mxu0
      %1350 = vmatprep.mubr.bf16.mxu0 0
      %1351 = vmatmul.mubr.bf16.gmra.mrb[0].mxu0 %v298
      %v1352 = vpop.f32.mrb[0].mxu0
      %v1353 = vadd.f32 0.0, %v1352
      %v1354 = vpop.f32.mrb[0].mxu0
      %v1355 = vpop.f32.mrb[0].mxu0
      %v1356 = vadd.f32 0.0, %v1355
      %v1357 = vpop.f32.mrb[0].mxu0
      %1358 = vmatprep.mubr.bf16.mxu0 0
      %1359 = vmatmul.mubr.bf16.gmra.mrb[0].mxu0 %v301
      %v1360 = vpop.f32.mrb[0].mxu0
      %v1361 = vadd.f32 0.0, %v1360
      %v1362 = vpop.f32.mrb[0].mxu0
      %v1363 = vpop.f32.mrb[0].mxu0
      %v1364 = vadd.f32 0.0, %v1363
      %v1365 = vpop.f32.mrb[0].mxu0
      %1366 = vmatprep.mubr.bf16.mxu0 0
      %1367 = vmatmul.mubr.bf16.gmra.mrb[0].mxu0 %v304
      %v1368 = vpop.f32.mrb[0].mxu0
      %v1369 = vadd.f32 0.0, %v1368
      %v1370 = vpop.f32.mrb[0].mxu0
      %v1371 = vpop.f32.mrb[0].mxu0
      %v1372 = vadd.f32 0.0, %v1371
      %v1373 = vpop.f32.mrb[0].mxu0
      %1374 = vdwg.mxu0
      %v1375 = vadd.f32 %v1177, %v1249
      %v1376 = vadd.f32 %v1178, %v1252
      %v1377 = vadd.f32 %v1179, %v1257
      %v1378 = vadd.f32 %v1180, %v1260
      %v1379 = vadd.f32 %v1181, %v1265
      %v1380 = vadd.f32 %v1182, %v1268
      %v1381 = vadd.f32 %v1183, %v1273
      %v1382 = vadd.f32 %v1184, %v1276
      %v1383 = vadd.f32 %v1185, %v1281
      %v1384 = vadd.f32 %v1186, %v1284
      %v1385 = vadd.f32 %v1187, %v1289
      %v1386 = vadd.f32 %v1188, %v1292
      %v1387 = vadd.f32 %v1189, %v1297
      %v1388 = vadd.f32 %v1190, %v1300
      %v1389 = vadd.f32 %v1191, %v1305
      %v1390 = vadd.f32 %v1192, %v1308
      %v1391 = vadd.f32 %v1193, %v1313
      %v1392 = vadd.f32 %v1194, %v1316
      %v1393 = vadd.f32 %v1195, %v1321
      %v1394 = vadd.f32 %v1196, %v1324
      %v1395 = vadd.f32 %v1197, %v1329
      %v1396 = vadd.f32 %v1198, %v1332
      %v1397 = vadd.f32 %v1199, %v1337
      %v1398 = vadd.f32 %v1200, %v1340
      %v1399 = vadd.f32 %v1201, %v1345
      %v1400 = vadd.f32 %v1202, %v1348
      %v1401 = vadd.f32 %v1203, %v1353
      %v1402 = vadd.f32 %v1204, %v1356
      %v1403 = vadd.f32 %v1205, %v1361
      %v1404 = vadd.f32 %v1206, %v1364
      %v1405 = vadd.f32 %v1207, %v1369
      %v1406 = vadd.f32 %v1208, %v1372
      %1407 = vst.msk [vmem:[#allocation2] sm:$0xff] %vm477, %v1375
      %1408 = vst.msk [vmem:[#allocation2 + $0x8] sm:$0xff] %vm477, %v1376
      %1409 = vst.msk [vmem:[#allocation2 + $0x10] sm:$0xff] %vm477, %v1377
      %1410 = vst.msk [vmem:[#allocation2 + $0x18] sm:$0xff] %vm477, %v1378
      %1411 = vst.msk [vmem:[#allocation2 + $0x20] sm:$0xff] %vm477, %v1379
      %1412 = vst.msk [vmem:[#allocation2 + $0x28] sm:$0xff] %vm477, %v1380
      %1413 = vst.msk [vmem:[#allocation2 + $0x30] sm:$0xff] %vm477, %v1381
      %1414 = vst.msk [vmem:[#allocation2 + $0x38] sm:$0xff] %vm477, %v1382
      %1415 = vst.msk [vmem:[#allocation2 + $0x40] sm:$0xff] %vm477, %v1383
      %1416 = vst.msk [vmem:[#allocation2 + $0x48] sm:$0xff] %vm477, %v1384
      %1417 = vst.msk [vmem:[#allocation2 + $0x50] sm:$0xff] %vm477, %v1385
      %1418 = vst.msk [vmem:[#allocation2 + $0x58] sm:$0xff] %vm477, %v1386
      %1419 = vst.msk [vmem:[#allocation2 + $0x60] sm:$0xff] %vm477, %v1387
      %1420 = vst.msk [vmem:[#allocation2 + $0x68] sm:$0xff] %vm477, %v1388
      %1421 = vst.msk [vmem:[#allocation2 + $0x70] sm:$0xff] %vm477, %v1389
      %1422 = vst.msk [vmem:[#allocation2 + $0x78] sm:$0xff] %vm477, %v1390
      %1423 = vst.msk [vmem:[#allocation2 + $0x80] sm:$0xff] %vm477, %v1391
      %1424 = vst.msk [vmem:[#allocation2 + $0x88] sm:$0xff] %vm477, %v1392
      %1425 = vst.msk [vmem:[#allocation2 + $0x90] sm:$0xff] %vm477, %v1393
      %1426 = vst.msk [vmem:[#allocation2 + $0x98] sm:$0xff] %vm477, %v1394
      %1427 = vst.msk [vmem:[#allocation2 + $0xa0] sm:$0xff] %vm477, %v1395
      %1428 = vst.msk [vmem:[#allocation2 + $0xa8] sm:$0xff] %vm477, %v1396
      %1429 = vst.msk [vmem:[#allocation2 + $0xb0] sm:$0xff] %vm477, %v1397
      %1430 = vst.msk [vmem:[#allocation2 + $0xb8] sm:$0xff] %vm477, %v1398
      %1431 = vst.msk [vmem:[#allocation2 + $0xc0] sm:$0xff] %vm477, %v1399
      %1432 = vst.msk [vmem:[#allocation2 + $0xc8] sm:$0xff] %vm477, %v1400
      %1433 = vst.msk [vmem:[#allocation2 + $0xd0] sm:$0xff] %vm477, %v1401
      %1434 = vst.msk [vmem:[#allocation2 + $0xd8] sm:$0xff] %vm477, %v1402
      %1435 = vst.msk [vmem:[#allocation2 + $0xe0] sm:$0xff] %vm477, %v1403
      %1436 = vst.msk [vmem:[#allocation2 + $0xe8] sm:$0xff] %vm477, %v1404
      %1437 = vst.msk [vmem:[#allocation2 + $0xf0] sm:$0xff] %vm477, %v1405
      %1438 = vst.msk [vmem:[#allocation2 + $0xf8] sm:$0xff] %vm477, %v1406
      %vm1440 = vcmask 1046528
      %v1441 = vrot.slane %v210, 1
      %v1442 = vrot.slane %v211, 1
      %v1443 = vsel %vm1440, %v1441, %v1442
      %v1444 = vrot.slane %v212, 1
      %v1445 = vsel %vm1440, %v1442, %v1444
      %v1446 = vrot.slane %v213, 1
      %v1447 = vsel %vm1440, %v1444, %v1446
      %v1448 = vrot.slane %v214, 1
      %v1449 = vsel %vm1440, %v1446, %v1448
      %v1450 = vrot.slane %v215, 1
      %v1451 = vsel %vm1440, %v1448, %v1450
      %v1452 = vrot.slane %v216, 1
      %v1453 = vsel %vm1440, %v1450, %v1452
      %v1454 = vrot.slane %v217, 1
      %v1455 = vsel %vm1440, %v1452, %v1454
      %v1456 = vrot.slane %v218, 1
      %v1457 = vsel %vm1440, %v1454, %v1456
      %v1458 = vrot.slane %v219, 1
      %v1459 = vsel %vm1440, %v1456, %v1458
      %v1460 = vrot.slane %v220, 1
      %v1461 = vsel %vm1440, %v1458, %v1460
      %v1462 = vrot.slane %v221, 1
      %v1463 = vsel %vm1440, %v1460, %v1462
      %v1464 = vrot.slane %v222, 1
      %v1465 = vsel %vm1440, %v1462, %v1464
      %v1466 = vrot.slane %v223, 1
      %v1467 = vsel %vm1440, %v1464, %v1466
      %v1468 = vrot.slane %v224, 1
      %v1469 = vsel %vm1440, %v1466, %v1468
      %v1470 = vrot.slane %v225, 1
      %v1471 = vsel %vm1440, %v1468, %v1470
      %v1472 = vrot.slane %v226, 1
      %v1473 = vsel %vm1440, %v1470, %v1472
      %v1474 = vrot.slane %v227, 1
      %v1475 = vsel %vm1440, %v1472, %v1474
      %v1476 = vrot.slane %v228, 1
      %v1477 = vsel %vm1440, %v1474, %v1476
      %v1478 = vrot.slane %v229, 1
      %v1479 = vsel %vm1440, %v1476, %v1478
      %v1480 = vrot.slane %v230, 1
      %v1481 = vsel %vm1440, %v1478, %v1480
      %v1482 = vrot.slane %v231, 1
      %v1483 = vsel %vm1440, %v1480, %v1482
      %v1484 = vrot.slane %v232, 1
      %v1485 = vsel %vm1440, %v1482, %v1484
      %v1486 = vrot.slane %v233, 1
      %v1487 = vsel %vm1440, %v1484, %v1486
      %v1488 = vrot.slane %v234, 1
      %v1489 = vsel %vm1440, %v1486, %v1488
      %v1490 = vrot.slane %v235, 1
      %v1491 = vsel %vm1440, %v1488, %v1490
      %v1492 = vrot.slane %v236, 1
      %v1493 = vsel %vm1440, %v1490, %v1492
      %v1494 = vrot.slane %v237, 1
      %v1495 = vsel %vm1440, %v1492, %v1494
      %v1496 = vrot.slane %v238, 1
      %v1497 = vsel %vm1440, %v1494, %v1496
      %v1498 = vrot.slane %v239, 1
      %v1499 = vsel %vm1440, %v1496, %v1498
      %v1500 = vrot.slane %v240, 1
      %v1501 = vsel %vm1440, %v1498, %v1500
      %v1533 = vsel %vm1440, 0.0, %v1441
      %v1534 = vadd.s32 %v178, 1
      %v1535 = vadd.s32 %v179, 1
      %v1536 = vadd.s32 %v180, 1
      %v1537 = vadd.s32 %v181, 1
      %v1538 = vadd.s32 %v182, 1
      %v1539 = vadd.s32 %v183, 1
      %v1540 = vadd.s32 %v184, 1
      %v1541 = vadd.s32 %v185, 1
      %v1542 = vadd.s32 %v186, 1
      %v1543 = vadd.s32 %v187, 1
      %v1544 = vadd.s32 %v188, 1
      %v1545 = vadd.s32 %v189, 1
      %v1546 = vadd.s32 %v190, 1
      %v1547 = vadd.s32 %v191, 1
      %v1548 = vadd.s32 %v192, 1
      %v1549 = vadd.s32 %v193, 1
      %v1550 = vadd.s32 %v194, 1
      %v1551 = vadd.s32 %v195, 1
      %v1552 = vadd.s32 %v196, 1
      %v1553 = vadd.s32 %v197, 1
      %v1554 = vadd.s32 %v198, 1
      %v1555 = vadd.s32 %v199, 1
      %v1556 = vadd.s32 %v200, 1
      %v1557 = vadd.s32 %v201, 1
      %v1558 = vadd.s32 %v202, 1
      %v1559 = vadd.s32 %v203, 1
      %v1560 = vadd.s32 %v204, 1
      %v1561 = vadd.s32 %v205, 1
      %v1562 = vadd.s32 %v206, 1
      %v1563 = vadd.s32 %v207, 1
      %v1564 = vadd.s32 %v208, 1
      %v1565 = vadd.s32 %v209, 1
      %vm1566 = vcmp.ge.s32.totalorder %v1534, 0
      %vm1567 = vcmp.ge.s32.totalorder %v1535, 0
      %vm1568 = vcmp.ge.s32.totalorder %v1536, 0
      %vm1569 = vcmp.ge.s32.totalorder %v1537, 0
      %vm1570 = vcmp.ge.s32.totalorder %v1538, 0
      %vm1571 = vcmp.ge.s32.totalorder %v1539, 0
      %vm1572 = vcmp.ge.s32.totalorder %v1540, 0
      %vm1573 = vcmp.ge.s32.totalorder %v1541, 0
      %vm1574 = vcmp.ge.s32.totalorder %v1542, 0
      %vm1575 = vcmp.ge.s32.totalorder %v1543, 0
      %vm1576 = vcmp.ge.s32.totalorder %v1544, 0
      %vm1577 = vcmp.ge.s32.totalorder %v1545, 0
      %vm1578 = vcmp.ge.s32.totalorder %v1546, 0
      %vm1579 = vcmp.ge.s32.totalorder %v1547, 0
      %vm1580 = vcmp.ge.s32.totalorder %v1548, 0
      %vm1581 = vcmp.ge.s32.totalorder %v1549, 0
      %vm1582 = vcmp.ge.s32.totalorder %v1550, 0
      %vm1583 = vcmp.ge.s32.totalorder %v1551, 0
      %vm1584 = vcmp.ge.s32.totalorder %v1552, 0
      %vm1585 = vcmp.ge.s32.totalorder %v1553, 0
      %vm1586 = vcmp.ge.s32.totalorder %v1554, 0
      %vm1587 = vcmp.ge.s32.totalorder %v1555, 0
      %vm1588 = vcmp.ge.s32.totalorder %v1556, 0
      %vm1589 = vcmp.ge.s32.totalorder %v1557, 0
      %vm1590 = vcmp.ge.s32.totalorder %v1558, 0
      %vm1591 = vcmp.ge.s32.totalorder %v1559, 0
      %vm1592 = vcmp.ge.s32.totalorder %v1560, 0
      %vm1593 = vcmp.ge.s32.totalorder %v1561, 0
      %vm1594 = vcmp.ge.s32.totalorder %v1562, 0
      %vm1595 = vcmp.ge.s32.totalorder %v1563, 0
      %vm1596 = vcmp.ge.s32.totalorder %v1564, 0
      %vm1597 = vcmp.ge.s32.totalorder %v1565, 0
      %vm1598 = vcmp.lt.s32.totalorder %v1534, 16
      %vm1599 = vcmp.lt.s32.totalorder %v1535, 16
      %vm1600 = vcmp.lt.s32.totalorder %v1536, 16
      %vm1601 = vcmp.lt.s32.totalorder %v1537, 16
      %vm1602 = vcmp.lt.s32.totalorder %v1538, 16
      %vm1603 = vcmp.lt.s32.totalorder %v1539, 16
      %vm1604 = vcmp.lt.s32.totalorder %v1540, 16
      %vm1605 = vcmp.lt.s32.totalorder %v1541, 16
      %vm1606 = vcmp.lt.s32.totalorder %v1542, 16
      %vm1607 = vcmp.lt.s32.totalorder %v1543, 16
      %vm1608 = vcmp.lt.s32.totalorder %v1544, 16
      %vm1609 = vcmp.lt.s32.totalorder %v1545, 16
      %vm1610 = vcmp.lt.s32.totalorder %v1546, 16
      %vm1611 = vcmp.lt.s32.totalorder %v1547, 16
      %vm1612 = vcmp.lt.s32.totalorder %v1548, 16
      %vm1613 = vcmp.lt.s32.totalorder %v1549, 16
      %vm1614 = vcmp.lt.s32.totalorder %v1550, 16
      %vm1615 = vcmp.lt.s32.totalorder %v1551, 16
      %vm1616 = vcmp.lt.s32.totalorder %v1552, 16
      %vm1617 = vcmp.lt.s32.totalorder %v1553, 16
      %vm1618 = vcmp.lt.s32.totalorder %v1554, 16
      %vm1619 = vcmp.lt.s32.totalorder %v1555, 16
      %vm1620 = vcmp.lt.s32.totalorder %v1556, 16
      %vm1621 = vcmp.lt.s32.totalorder %v1557, 16
      %vm1622 = vcmp.lt.s32.totalorder %v1558, 16
      %vm1623 = vcmp.lt.s32.totalorder %v1559, 16
      %vm1624 = vcmp.lt.s32.totalorder %v1560, 16
      %vm1625 = vcmp.lt.s32.totalorder %v1561, 16
      %vm1626 = vcmp.lt.s32.totalorder %v1562, 16
      %vm1627 = vcmp.lt.s32.totalorder %v1563, 16
      %vm1628 = vcmp.lt.s32.totalorder %v1564, 16
      %vm1629 = vcmp.lt.s32.totalorder %v1565, 16
      %vm1630 = vmand %vm1566, %vm1598
      %vm1631 = vmand %vm1567, %vm1599
      %vm1632 = vmand %vm1568, %vm1600
      %vm1633 = vmand %vm1569, %vm1601
      %vm1634 = vmand %vm1570, %vm1602
      %vm1635 = vmand %vm1571, %vm1603
      %vm1636 = vmand %vm1572, %vm1604
      %vm1637 = vmand %vm1573, %vm1605
      %vm1638 = vmand %vm1574, %vm1606
      %vm1639 = vmand %vm1575, %vm1607
      %vm1640 = vmand %vm1576, %vm1608
      %vm1641 = vmand %vm1577, %vm1609
      %vm1642 = vmand %vm1578, %vm1610
      %vm1643 = vmand %vm1579, %vm1611
      %vm1644 = vmand %vm1580, %vm1612
      %vm1645 = vmand %vm1581, %vm1613
      %vm1646 = vmand %vm1582, %vm1614
      %vm1647 = vmand %vm1583, %vm1615
      %vm1648 = vmand %vm1584, %vm1616
      %vm1649 = vmand %vm1585, %vm1617
      %vm1650 = vmand %vm1586, %vm1618
      %vm1651 = vmand %vm1587, %vm1619
      %vm1652 = vmand %vm1588, %vm1620
      %vm1653 = vmand %vm1589, %vm1621
      %vm1654 = vmand %vm1590, %vm1622
      %vm1655 = vmand %vm1591, %vm1623
      %vm1656 = vmand %vm1592, %vm1624
      %vm1657 = vmand %vm1593, %vm1625
      %vm1658 = vmand %vm1594, %vm1626
      %vm1659 = vmand %vm1595, %vm1627
      %vm1660 = vmand %vm1596, %vm1628
      %vm1661 = vmand %vm1597, %vm1629
      %v1662 = vsel %vm1630, 1, 0
      %v1663 = vsel %vm1631, 1, 0
      %v1664 = vsel %vm1632, 1, 0
      %v1665 = vsel %vm1633, 1, 0
      %v1666 = vsel %vm1634, 1, 0
      %v1667 = vsel %vm1635, 1, 0
      %v1668 = vsel %vm1636, 1, 0
      %v1669 = vsel %vm1637, 1, 0
      %v1670 = vsel %vm1638, 1, 0
      %v1671 = vsel %vm1639, 1, 0
      %v1672 = vsel %vm1640, 1, 0
      %v1673 = vsel %vm1641, 1, 0
      %v1674 = vsel %vm1642, 1, 0
      %v1675 = vsel %vm1643, 1, 0
      %v1676 = vsel %vm1644, 1, 0
      %v1677 = vsel %vm1645, 1, 0
      %v1678 = vsel %vm1646, 1, 0
      %v1679 = vsel %vm1647, 1, 0
      %v1680 = vsel %vm1648, 1, 0
      %v1681 = vsel %vm1649, 1, 0
      %v1682 = vsel %vm1650, 1, 0
      %v1683 = vsel %vm1651, 1, 0
      %v1684 = vsel %vm1652, 1, 0
      %v1685 = vsel %vm1653, 1, 0
      %v1686 = vsel %vm1654, 1, 0
      %v1687 = vsel %vm1655, 1, 0
      %v1688 = vsel %vm1656, 1, 0
      %v1689 = vsel %vm1657, 1, 0
      %v1690 = vsel %vm1658, 1, 0
      %v1691 = vsel %vm1659, 1, 0
      %v1692 = vsel %vm1660, 1, 0
      %v1693 = vsel %vm1661, 1, 0
      %vm1694 = vcmp.eq.s32.totalorder %v1662, 1
      %vm1695 = vcmp.eq.s32.totalorder %v1663, 1
      %vm1696 = vcmp.eq.s32.totalorder %v1664, 1
      %vm1697 = vcmp.eq.s32.totalorder %v1665, 1
      %vm1698 = vcmp.eq.s32.totalorder %v1666, 1
      %vm1699 = vcmp.eq.s32.totalorder %v1667, 1
      %vm1700 = vcmp.eq.s32.totalorder %v1668, 1
      %vm1701 = vcmp.eq.s32.totalorder %v1669, 1
      %vm1702 = vcmp.eq.s32.totalorder %v1670, 1
      %vm1703 = vcmp.eq.s32.totalorder %v1671, 1
      %vm1704 = vcmp.eq.s32.totalorder %v1672, 1
      %vm1705 = vcmp.eq.s32.totalorder %v1673, 1
      %vm1706 = vcmp.eq.s32.totalorder %v1674, 1
      %vm1707 = vcmp.eq.s32.totalorder %v1675, 1
      %vm1708 = vcmp.eq.s32.totalorder %v1676, 1
      %vm1709 = vcmp.eq.s32.totalorder %v1677, 1
      %vm1710 = vcmp.eq.s32.totalorder %v1678, 1
      %vm1711 = vcmp.eq.s32.totalorder %v1679, 1
      %vm1712 = vcmp.eq.s32.totalorder %v1680, 1
      %vm1713 = vcmp.eq.s32.totalorder %v1681, 1
      %vm1714 = vcmp.eq.s32.totalorder %v1682, 1
      %vm1715 = vcmp.eq.s32.totalorder %v1683, 1
      %vm1716 = vcmp.eq.s32.totalorder %v1684, 1
      %vm1717 = vcmp.eq.s32.totalorder %v1685, 1
      %vm1718 = vcmp.eq.s32.totalorder %v1686, 1
      %vm1719 = vcmp.eq.s32.totalorder %v1687, 1
      %vm1720 = vcmp.eq.s32.totalorder %v1688, 1
      %vm1721 = vcmp.eq.s32.totalorder %v1689, 1
      %vm1722 = vcmp.eq.s32.totalorder %v1690, 1
      %vm1723 = vcmp.eq.s32.totalorder %v1691, 1
      %vm1724 = vcmp.eq.s32.totalorder %v1692, 1
      %vm1725 = vcmp.eq.s32.totalorder %v1693, 1
      %v1726 = vsel %vm1695, %v1533, 0.0
      %v1727 = vsel %vm1696, %v1443, 0.0
      %v1728 = vsel %vm1697, %v1445, 0.0
      %v1729 = vsel %vm1698, %v1447, 0.0
      %v1730 = vsel %vm1699, %v1449, 0.0
      %v1731 = vsel %vm1700, %v1451, 0.0
      %v1732 = vsel %vm1701, %v1453, 0.0
      %v1733 = vsel %vm1702, %v1455, 0.0
      %v1734 = vsel %vm1703, %v1457, 0.0
      %v1735 = vsel %vm1704, %v1459, 0.0
      %v1736 = vsel %vm1705, %v1461, 0.0
      %v1737 = vsel %vm1706, %v1463, 0.0
      %v1738 = vsel %vm1707, %v1465, 0.0
      %v1739 = vsel %vm1708, %v1467, 0.0
      %v1740 = vsel %vm1709, %v1469, 0.0
      %v1741 = vsel %vm1710, %v1471, 0.0
      %v1742 = vsel %vm1711, %v1473, 0.0
      %v1743 = vsel %vm1712, %v1475, 0.0
      %v1744 = vsel %vm1713, %v1477, 0.0
      %v1745 = vsel %vm1714, %v1479, 0.0
      %v1746 = vsel %vm1715, %v1481, 0.0
      %v1747 = vsel %vm1716, %v1483, 0.0
      %v1748 = vsel %vm1717, %v1485, 0.0
      %v1749 = vsel %vm1718, %v1487, 0.0
      %v1750 = vsel %vm1719, %v1489, 0.0
      %v1751 = vsel %vm1720, %v1491, 0.0
      %v1752 = vsel %vm1721, %v1493, 0.0
      %v1753 = vsel %vm1722, %v1495, 0.0
      %v1754 = vsel %vm1723, %v1497, 0.0
      %v1755 = vsel %vm1724, %v1499, 0.0
      %v1756 = vsel %vm1725, %v1501, 0.0
      %v1757 = vld [vmem:[#allocation2] sm:$0xff]
      %v1758 = vld [vmem:[#allocation2 + $0x8] sm:$0xff]
      %v1759 = vld [vmem:[#allocation2 + $0x10] sm:$0xff]
      %v1760 = vld [vmem:[#allocation2 + $0x18] sm:$0xff]
      %v1761 = vld [vmem:[#allocation2 + $0x20] sm:$0xff]
      %v1762 = vld [vmem:[#allocation2 + $0x28] sm:$0xff]
      %v1763 = vld [vmem:[#allocation2 + $0x30] sm:$0xff]
      %v1764 = vld [vmem:[#allocation2 + $0x38] sm:$0xff]
      %v1765 = vld [vmem:[#allocation2 + $0x40] sm:$0xff]
      %v1766 = vld [vmem:[#allocation2 + $0x48] sm:$0xff]
      %v1767 = vld [vmem:[#allocation2 + $0x50] sm:$0xff]
      %v1768 = vld [vmem:[#allocation2 + $0x58] sm:$0xff]
      %v1769 = vld [vmem:[#allocation2 + $0x60] sm:$0xff]
      %v1770 = vld [vmem:[#allocation2 + $0x68] sm:$0xff]
      %v1771 = vld [vmem:[#allocation2 + $0x70] sm:$0xff]
      %v1772 = vld [vmem:[#allocation2 + $0x78] sm:$0xff]
      %v1773 = vld [vmem:[#allocation2 + $0x80] sm:$0xff]
      %v1774 = vld [vmem:[#allocation2 + $0x88] sm:$0xff]
      %v1775 = vld [vmem:[#allocation2 + $0x90] sm:$0xff]
      %v1776 = vld [vmem:[#allocation2 + $0x98] sm:$0xff]
      %v1777 = vld [vmem:[#allocation2 + $0xa0] sm:$0xff]
      %v1778 = vld [vmem:[#allocation2 + $0xa8] sm:$0xff]
      %v1779 = vld [vmem:[#allocation2 + $0xb0] sm:$0xff]
      %v1780 = vld [vmem:[#allocation2 + $0xb8] sm:$0xff]
      %v1781 = vld [vmem:[#allocation2 + $0xc0] sm:$0xff]
      %v1782 = vld [vmem:[#allocation2 + $0xc8] sm:$0xff]
      %v1783 = vld [vmem:[#allocation2 + $0xd0] sm:$0xff]
      %v1784 = vld [vmem:[#allocation2 + $0xd8] sm:$0xff]
      %v1785 = vld [vmem:[#allocation2 + $0xe0] sm:$0xff]
      %v1786 = vld [vmem:[#allocation2 + $0xe8] sm:$0xff]
      %v1787 = vld [vmem:[#allocation2 + $0xf0] sm:$0xff]
      %v1788 = vld [vmem:[#allocation2 + $0xf8] sm:$0xff]
      %v1789 = vpack.c.bf16 %v1726, 0.0
      %v1790 = vpack.c.bf16 %v1728, %v1727
      %v1791 = vpack.c.bf16 %v1730, %v1729
      %v1792 = vpack.c.bf16 %v1732, %v1731
      %v1793 = vpack.c.bf16 %v1734, %v1733
      %v1794 = vpack.c.bf16 %v1736, %v1735
      %v1795 = vpack.c.bf16 %v1738, %v1737
      %v1796 = vpack.c.bf16 %v1740, %v1739
      %v1797 = vpack.c.bf16 %v1742, %v1741
      %v1798 = vpack.c.bf16 %v1744, %v1743
      %v1799 = vpack.c.bf16 %v1746, %v1745
      %v1800 = vpack.c.bf16 %v1748, %v1747
      %v1801 = vpack.c.bf16 %v1750, %v1749
      %v1802 = vpack.c.bf16 %v1752, %v1751
      %v1803 = vpack.c.bf16 %v1754, %v1753
      %v1804 = vpack.c.bf16 %v1756, %v1755
      %s1805 = scalar_lea.vmem %s1, 4
      %v1806 = vld [vmem:[%s1805] sm:$0x3]
      %v1808 = vsel %vm260, %v1789, 0
      %v1811 = vsel %vm260, %v1790, 0
      %v1814 = vsel %vm260, %v1791, 0
      %v1817 = vsel %vm260, %v1792, 0
      %v1820 = vsel %vm260, %v1793, 0
      %v1823 = vsel %vm260, %v1794, 0
      %v1826 = vsel %vm260, %v1795, 0
      %v1829 = vsel %vm260, %v1796, 0
      %v1832 = vsel %vm260, %v1797, 0
      %v1835 = vsel %vm260, %v1798, 0
      %v1838 = vsel %vm260, %v1799, 0
      %v1841 = vsel %vm260, %v1800, 0
      %v1844 = vsel %vm260, %v1801, 0
      %v1847 = vsel %vm260, %v1802, 0
      %v1850 = vsel %vm260, %v1803, 0
      %v1853 = vsel %vm260, %v1804, 0
      %v1856 = vand.u32 %v1806, %v312
      %1858 = vmatprep.subr.bf16.mxu0 0
      %1859 = vmatpush1.bf16.msra.mxu0 %v1856
      %1860 = vmatprep.subr.bf16.mxu0 0
      %1861 = vmatpush1.bf16.msra.mxu0 0
      %1862 = vmatprep.subr.bf16.mxu0 0
      %1863 = vmatpush1.bf16.msra.mxu0 0
      %1864 = vmatprep.subr.bf16.mxu0 0
      %1865 = vmatpush1.bf16.msra.mxu0 0
      %1866 = vmatprep.subr.bf16.mxu0 0
      %1867 = vmatpush1.bf16.msra.mxu0 0
      %1868 = vmatprep.subr.bf16.mxu0 0
      %1869 = vmatpush1.bf16.msra.mxu0 0
      %1870 = vmatprep.subr.bf16.mxu0 0
      %1871 = vmatpush1.bf16.msra.mxu0 0
      %1872 = vmatprep.subr.bf16.mxu0 0
      %1873 = vmatpush1.bf16.msra.mxu0 0
      %1874 = vmatprep.subr.bf16.mxu0 0
      %1875 = vmatpush1.bf16.msra.mxu0 0
      %1876 = vmatprep.subr.bf16.mxu0 0
      %1877 = vmatpush1.bf16.msra.mxu0 0
      %1878 = vmatprep.subr.bf16.mxu0 0
      %1879 = vmatpush1.bf16.msra.mxu0 0
      %1880 = vmatprep.subr.bf16.mxu0 0
      %1881 = vmatpush1.bf16.msra.mxu0 0
      %1882 = vmatprep.subr.bf16.mxu0 0
      %1883 = vmatpush1.bf16.msra.mxu0 0
      %1884 = vmatprep.subr.bf16.mxu0 0
      %1885 = vmatpush1.bf16.msra.mxu0 0
      %1886 = vmatprep.subr.bf16.mxu0 0
      %1887 = vmatpush1.bf16.msra.mxu0 0
      %1888 = vmatprep.subr.bf16.mxu0 0
      %1889 = vmatpush1.bf16.msra.mxu0 0
      %1890 = vmatprep.mubr.bf16.mxu0 0
      %1891 = vmatmul.mubr.bf16.gmra.mrb[0].mxu0 %v1808
      %v1892 = vpop.f32.mrb[0].mxu0
      %v1893 = vadd.f32 0.0, %v1892
      %v1894 = vpop.f32.mrb[0].mxu0
      %v1895 = vpop.f32.mrb[0].mxu0
      %v1896 = vadd.f32 0.0, %v1895
      %v1897 = vpop.f32.mrb[0].mxu0
      %1898 = vmatprep.mubr.bf16.mxu0 0
      %1899 = vmatmul.mubr.bf16.gmra.mrb[0].mxu0 %v1811
      %v1900 = vpop.f32.mrb[0].mxu0
      %v1901 = vadd.f32 0.0, %v1900
      %v1902 = vpop.f32.mrb[0].mxu0
      %v1903 = vpop.f32.mrb[0].mxu0
      %v1904 = vadd.f32 0.0, %v1903
      %v1905 = vpop.f32.mrb[0].mxu0
      %1906 = vmatprep.mubr.bf16.mxu0 0
      %1907 = vmatmul.mubr.bf16.gmra.mrb[0].mxu0 %v1814
      %v1908 = vpop.f32.mrb[0].mxu0
      %v1909 = vadd.f32 0.0, %v1908
      %v1910 = vpop.f32.mrb[0].mxu0
      %v1911 = vpop.f32.mrb[0].mxu0
      %v1912 = vadd.f32 0.0, %v1911
      %v1913 = vpop.f32.mrb[0].mxu0
      %1914 = vmatprep.mubr.bf16.mxu0 0
      %1915 = vmatmul.mubr.bf16.gmra.mrb[0].mxu0 %v1817
      %v1916 = vpop.f32.mrb[0].mxu0
      %v1917 = vadd.f32 0.0, %v1916
      %v1918 = vpop.f32.mrb[0].mxu0
      %v1919 = vpop.f32.mrb[0].mxu0
      %v1920 = vadd.f32 0.0, %v1919
      %v1921 = vpop.f32.mrb[0].mxu0
      %1922 = vmatprep.mubr.bf16.mxu0 0
      %1923 = vmatmul.mubr.bf16.gmra.mrb[0].mxu0 %v1820
      %v1924 = vpop.f32.mrb[0].mxu0
      %v1925 = vadd.f32 0.0, %v1924
      %v1926 = vpop.f32.mrb[0].mxu0
      %v1927 = vpop.f32.mrb[0].mxu0
      %v1928 = vadd.f32 0.0, %v1927
      %v1929 = vpop.f32.mrb[0].mxu0
      %1930 = vmatprep.mubr.bf16.mxu0 0
      %1931 = vmatmul.mubr.bf16.gmra.mrb[0].mxu0 %v1823
      %v1932 = vpop.f32.mrb[0].mxu0
      %v1933 = vadd.f32 0.0, %v1932
      %v1934 = vpop.f32.mrb[0].mxu0
      %v1935 = vpop.f32.mrb[0].mxu0
      %v1936 = vadd.f32 0.0, %v1935
      %v1937 = vpop.f32.mrb[0].mxu0
      %1938 = vmatprep.mubr.bf16.mxu0 0
      %1939 = vmatmul.mubr.bf16.gmra.mrb[0].mxu0 %v1826
      %v1940 = vpop.f32.mrb[0].mxu0
      %v1941 = vadd.f32 0.0, %v1940
      %v1942 = vpop.f32.mrb[0].mxu0
      %v1943 = vpop.f32.mrb[0].mxu0
      %v1944 = vadd.f32 0.0, %v1943
      %v1945 = vpop.f32.mrb[0].mxu0
      %1946 = vmatprep.mubr.bf16.mxu0 0
      %1947 = vmatmul.mubr.bf16.gmra.mrb[0].mxu0 %v1829
      %v1948 = vpop.f32.mrb[0].mxu0
      %v1949 = vadd.f32 0.0, %v1948
      %v1950 = vpop.f32.mrb[0].mxu0
      %v1951 = vpop.f32.mrb[0].mxu0
      %v1952 = vadd.f32 0.0, %v1951
      %v1953 = vpop.f32.mrb[0].mxu0
      %1954 = vmatprep.mubr.bf16.mxu0 0
      %1955 = vmatmul.mubr.bf16.gmra.mrb[0].mxu0 %v1832
      %v1956 = vpop.f32.mrb[0].mxu0
      %v1957 = vadd.f32 0.0, %v1956
      %v1958 = vpop.f32.mrb[0].mxu0
      %v1959 = vpop.f32.mrb[0].mxu0
      %v1960 = vadd.f32 0.0, %v1959
      %v1961 = vpop.f32.mrb[0].mxu0
      %1962 = vmatprep.mubr.bf16.mxu0 0
      %1963 = vmatmul.mubr.bf16.gmra.mrb[0].mxu0 %v1835
      %v1964 = vpop.f32.mrb[0].mxu0
      %v1965 = vadd.f32 0.0, %v1964
      %v1966 = vpop.f32.mrb[0].mxu0
      %v1967 = vpop.f32.mrb[0].mxu0
      %v1968 = vadd.f32 0.0, %v1967
      %v1969 = vpop.f32.mrb[0].mxu0
      %1970 = vmatprep.mubr.bf16.mxu0 0
      %1971 = vmatmul.mubr.bf16.gmra.mrb[0].mxu0 %v1838
      %v1972 = vpop.f32.mrb[0].mxu0
      %v1973 = vadd.f32 0.0, %v1972
      %v1974 = vpop.f32.mrb[0].mxu0
      %v1975 = vpop.f32.mrb[0].mxu0
      %v1976 = vadd.f32 0.0, %v1975
      %v1977 = vpop.f32.mrb[0].mxu0
      %1978 = vmatprep.mubr.bf16.mxu0 0
      %1979 = vmatmul.mubr.bf16.gmra.mrb[0].mxu0 %v1841
      %v1980 = vpop.f32.mrb[0].mxu0
      %v1981 = vadd.f32 0.0, %v1980
      %v1982 = vpop.f32.mrb[0].mxu0
      %v1983 = vpop.f32.mrb[0].mxu0
      %v1984 = vadd.f32 0.0, %v1983
      %v1985 = vpop.f32.mrb[0].mxu0
      %1986 = vmatprep.mubr.bf16.mxu0 0
      %1987 = vmatmul.mubr.bf16.gmra.mrb[0].mxu0 %v1844
      %v1988 = vpop.f32.mrb[0].mxu0
      %v1989 = vadd.f32 0.0, %v1988
      %v1990 = vpop.f32.mrb[0].mxu0
      %v1991 = vpop.f32.mrb[0].mxu0
      %v1992 = vadd.f32 0.0, %v1991
      %v1993 = vpop.f32.mrb[0].mxu0
      %1994 = vmatprep.mubr.bf16.mxu0 0
      %1995 = vmatmul.mubr.bf16.gmra.mrb[0].mxu0 %v1847
      %v1996 = vpop.f32.mrb[0].mxu0
      %v1997 = vadd.f32 0.0, %v1996
      %v1998 = vpop.f32.mrb[0].mxu0
      %v1999 = vpop.f32.mrb[0].mxu0
      %v2000 = vadd.f32 0.0, %v1999
      %v2001 = vpop.f32.mrb[0].mxu0
      %2002 = vmatprep.mubr.bf16.mxu0 0
      %2003 = vmatmul.mubr.bf16.gmra.mrb[0].mxu0 %v1850
      %v2004 = vpop.f32.mrb[0].mxu0
      %v2005 = vadd.f32 0.0, %v2004
      %v2006 = vpop.f32.mrb[0].mxu0
      %v2007 = vpop.f32.mrb[0].mxu0
      %v2008 = vadd.f32 0.0, %v2007
      %v2009 = vpop.f32.mrb[0].mxu0
      %2010 = vmatprep.mubr.bf16.mxu0 0
      %2011 = vmatmul.mubr.bf16.gmra.mrb[0].mxu0 %v1853
      %v2012 = vpop.f32.mrb[0].mxu0
      %v2013 = vadd.f32 0.0, %v2012
      %v2014 = vpop.f32.mrb[0].mxu0
      %v2015 = vpop.f32.mrb[0].mxu0
      %v2016 = vadd.f32 0.0, %v2015
      %v2017 = vpop.f32.mrb[0].mxu0
      %2018 = vdwg.mxu0
      %v2019 = vadd.f32 %v1757, %v1893
      %v2020 = vadd.f32 %v1758, %v1896
      %v2021 = vadd.f32 %v1759, %v1901
      %v2022 = vadd.f32 %v1760, %v1904
      %v2023 = vadd.f32 %v1761, %v1909
      %v2024 = vadd.f32 %v1762, %v1912
      %v2025 = vadd.f32 %v1763, %v1917
      %v2026 = vadd.f32 %v1764, %v1920
      %v2027 = vadd.f32 %v1765, %v1925
      %v2028 = vadd.f32 %v1766, %v1928
      %v2029 = vadd.f32 %v1767, %v1933
      %v2030 = vadd.f32 %v1768, %v1936
      %v2031 = vadd.f32 %v1769, %v1941
      %v2032 = vadd.f32 %v1770, %v1944
      %v2033 = vadd.f32 %v1771, %v1949
      %v2034 = vadd.f32 %v1772, %v1952
      %v2035 = vadd.f32 %v1773, %v1957
      %v2036 = vadd.f32 %v1774, %v1960
      %v2037 = vadd.f32 %v1775, %v1965
      %v2038 = vadd.f32 %v1776, %v1968
      %v2039 = vadd.f32 %v1777, %v1973
      %v2040 = vadd.f32 %v1778, %v1976
      %v2041 = vadd.f32 %v1779, %v1981
      %v2042 = vadd.f32 %v1780, %v1984
      %v2043 = vadd.f32 %v1781, %v1989
      %v2044 = vadd.f32 %v1782, %v1992
      %v2045 = vadd.f32 %v1783, %v1997
      %v2046 = vadd.f32 %v1784, %v2000
      %v2047 = vadd.f32 %v1785, %v2005
      %v2048 = vadd.f32 %v1786, %v2008
      %v2049 = vadd.f32 %v1787, %v2013
      %v2050 = vadd.f32 %v1788, %v2016
      %2051 = vst.msk [vmem:[#allocation2] sm:$0xff] %vm477, %v2019
      %2052 = vst.msk [vmem:[#allocation2 + $0x8] sm:$0xff] %vm477, %v2020
      %2053 = vst.msk [vmem:[#allocation2 + $0x10] sm:$0xff] %vm477, %v2021
      %2054 = vst.msk [vmem:[#allocation2 + $0x18] sm:$0xff] %vm477, %v2022
      %2055 = vst.msk [vmem:[#allocation2 + $0x20] sm:$0xff] %vm477, %v2023
      %2056 = vst.msk [vmem:[#allocation2 + $0x28] sm:$0xff] %vm477, %v2024
      %2057 = vst.msk [vmem:[#allocation2 + $0x30] sm:$0xff] %vm477, %v2025
      %2058 = vst.msk [vmem:[#allocation2 + $0x38] sm:$0xff] %vm477, %v2026
      %2059 = vst.msk [vmem:[#allocation2 + $0x40] sm:$0xff] %vm477, %v2027
      %2060 = vst.msk [vmem:[#allocation2 + $0x48] sm:$0xff] %vm477, %v2028
      %2061 = vst.msk [vmem:[#allocation2 + $0x50] sm:$0xff] %vm477, %v2029
      %2062 = vst.msk [vmem:[#allocation2 + $0x58] sm:$0xff] %vm477, %v2030
      %2063 = vst.msk [vmem:[#allocation2 + $0x60] sm:$0xff] %vm477, %v2031
      %2064 = vst.msk [vmem:[#allocation2 + $0x68] sm:$0xff] %vm477, %v2032
      %2065 = vst.msk [vmem:[#allocation2 + $0x70] sm:$0xff] %vm477, %v2033
      %2066 = vst.msk [vmem:[#allocation2 + $0x78] sm:$0xff] %vm477, %v2034
      %2067 = vst.msk [vmem:[#allocation2 + $0x80] sm:$0xff] %vm477, %v2035
      %2068 = vst.msk [vmem:[#allocation2 + $0x88] sm:$0xff] %vm477, %v2036
      %2069 = vst.msk [vmem:[#allocation2 + $0x90] sm:$0xff] %vm477, %v2037
      %2070 = vst.msk [vmem:[#allocation2 + $0x98] sm:$0xff] %vm477, %v2038
      %2071 = vst.msk [vmem:[#allocation2 + $0xa0] sm:$0xff] %vm477, %v2039
      %2072 = vst.msk [vmem:[#allocation2 + $0xa8] sm:$0xff] %vm477, %v2040
      %2073 = vst.msk [vmem:[#allocation2 + $0xb0] sm:$0xff] %vm477, %v2041
      %2074 = vst.msk [vmem:[#allocation2 + $0xb8] sm:$0xff] %vm477, %v2042
      %2075 = vst.msk [vmem:[#allocation2 + $0xc0] sm:$0xff] %vm477, %v2043
      %2076 = vst.msk [vmem:[#allocation2 + $0xc8] sm:$0xff] %vm477, %v2044
      %2077 = vst.msk [vmem:[#allocation2 + $0xd0] sm:$0xff] %vm477, %v2045
      %2078 = vst.msk [vmem:[#allocation2 + $0xd8] sm:$0xff] %vm477, %v2046
      %2079 = vst.msk [vmem:[#allocation2 + $0xe0] sm:$0xff] %vm477, %v2047
      %2080 = vst.msk [vmem:[#allocation2 + $0xe8] sm:$0xff] %vm477, %v2048
      %2081 = vst.msk [vmem:[#allocation2 + $0xf0] sm:$0xff] %vm477, %v2049
      %2082 = vst.msk [vmem:[#allocation2 + $0xf8] sm:$0xff] %vm477, %v2050
      %v2084 = vrot.slane %v240, 7
      %v2085 = vsel %vm309, %v597, %v2084
      %v2086 = vrot.slane %v241, 7
      %v2087 = vsel %vm309, %v2084, %v2086
      %v2090 = vsel %vm790, %v629, 0.0
      %v2091 = vsel %vm791, %v542, 0.0
      %v2092 = vsel %vm792, %v544, 0.0
      %v2093 = vsel %vm793, %v546, 0.0
      %v2094 = vsel %vm794, %v548, 0.0
      %v2095 = vsel %vm795, %v550, 0.0
      %v2096 = vsel %vm796, %v552, 0.0
      %v2097 = vsel %vm797, %v554, 0.0
      %v2098 = vsel %vm798, %v556, 0.0
      %v2099 = vsel %vm799, %v558, 0.0
      %v2100 = vsel %vm800, %v560, 0.0
      %v2101 = vsel %vm801, %v562, 0.0
      %v2102 = vsel %vm802, %v564, 0.0
      %v2103 = vsel %vm803, %v566, 0.0
      %v2104 = vsel %vm804, %v568, 0.0
      %v2105 = vsel %vm805, %v570, 0.0
      %v2106 = vsel %vm806, %v572, 0.0
      %v2107 = vsel %vm807, %v574, 0.0
      %v2108 = vsel %vm808, %v576, 0.0
      %v2109 = vsel %vm809, %v578, 0.0
      %v2110 = vsel %vm810, %v580, 0.0
      %v2111 = vsel %vm811, %v582, 0.0
      %v2112 = vsel %vm812, %v584, 0.0
      %v2113 = vsel %vm813, %v586, 0.0
      %v2114 = vsel %vm814, %v588, 0.0
      %v2115 = vsel %vm815, %v590, 0.0
      %v2116 = vsel %vm816, %v592, 0.0
      %v2117 = vsel %vm817, %v594, 0.0
      %v2118 = vsel %vm818, %v596, 0.0
      %v2119 = vsel %vm819, %v598, 0.0
      %v2120 = vsel %vm820, %v2085, 0.0
      %v2121 = vsel %vm821, %v2087, 0.0
      %v2122 = vld [vmem:[#allocation2] sm:$0xff]
      %v2123 = vld [vmem:[#allocation2 + $0x8] sm:$0xff]
      %v2124 = vld [vmem:[#allocation2 + $0x10] sm:$0xff]
      %v2125 = vld [vmem:[#allocation2 + $0x18] sm:$0xff]
      %v2126 = vld [vmem:[#allocation2 + $0x20] sm:$0xff]
      %v2127 = vld [vmem:[#allocation2 + $0x28] sm:$0xff]
      %v2128 = vld [vmem:[#allocation2 + $0x30] sm:$0xff]
      %v2129 = vld [vmem:[#allocation2 + $0x38] sm:$0xff]
      %v2130 = vld [vmem:[#allocation2 + $0x40] sm:$0xff]
      %v2131 = vld [vmem:[#allocation2 + $0x48] sm:$0xff]
      %v2132 = vld [vmem:[#allocation2 + $0x50] sm:$0xff]
      %v2133 = vld [vmem:[#allocation2 + $0x58] sm:$0xff]
      %v2134 = vld [vmem:[#allocation2 + $0x60] sm:$0xff]
      %v2135 = vld [vmem:[#allocation2 + $0x68] sm:$0xff]
      %v2136 = vld [vmem:[#allocation2 + $0x70] sm:$0xff]
      %v2137 = vld [vmem:[#allocation2 + $0x78] sm:$0xff]
      %v2138 = vld [vmem:[#allocation2 + $0x80] sm:$0xff]
      %v2139 = vld [vmem:[#allocation2 + $0x88] sm:$0xff]
      %v2140 = vld [vmem:[#allocation2 + $0x90] sm:$0xff]
      %v2141 = vld [vmem:[#allocation2 + $0x98] sm:$0xff]
      %v2142 = vld [vmem:[#allocation2 + $0xa0] sm:$0xff]
      %v2143 = vld [vmem:[#allocation2 + $0xa8] sm:$0xff]
      %v2144 = vld [vmem:[#allocation2 + $0xb0] sm:$0xff]
      %v2145 = vld [vmem:[#allocation2 + $0xb8] sm:$0xff]
      %v2146 = vld [vmem:[#allocation2 + $0xc0] sm:$0xff]
      %v2147 = vld [vmem:[#allocation2 + $0xc8] sm:$0xff]
      %v2148 = vld [vmem:[#allocation2 + $0xd0] sm:$0xff]
      %v2149 = vld [vmem:[#allocation2 + $0xd8] sm:$0xff]
      %v2150 = vld [vmem:[#allocation2 + $0xe0] sm:$0xff]
      %v2151 = vld [vmem:[#allocation2 + $0xe8] sm:$0xff]
      %v2152 = vld [vmem:[#allocation2 + $0xf0] sm:$0xff]
      %v2153 = vld [vmem:[#allocation2 + $0xf8] sm:$0xff]
      %v2154 = vpack.c.bf16 %v2091, %v2090
      %v2155 = vpack.c.bf16 %v2093, %v2092
      %v2156 = vpack.c.bf16 %v2095, %v2094
      %v2157 = vpack.c.bf16 %v2097, %v2096
      %v2158 = vpack.c.bf16 %v2099, %v2098
      %v2159 = vpack.c.bf16 %v2101, %v2100
      %v2160 = vpack.c.bf16 %v2103, %v2102
      %v2161 = vpack.c.bf16 %v2105, %v2104
      %v2162 = vpack.c.bf16 %v2107, %v2106
      %v2163 = vpack.c.bf16 %v2109, %v2108
      %v2164 = vpack.c.bf16 %v2111, %v2110
      %v2165 = vpack.c.bf16 %v2113, %v2112
      %v2166 = vpack.c.bf16 %v2115, %v2114
      %v2167 = vpack.c.bf16 %v2117, %v2116
      %v2168 = vpack.c.bf16 %v2119, %v2118
      %v2169 = vpack.c.bf16 %v2121, %v2120
      %s2170 = scalar_lea.vmem %s1, 6
      %v2171 = vld [vmem:[%s2170] sm:$0x3]
      %v2173 = vsel %vm260, %v2154, 0
      %v2176 = vsel %vm260, %v2155, 0
      %v2179 = vsel %vm260, %v2156, 0
      %v2182 = vsel %vm260, %v2157, 0
      %v2185 = vsel %vm260, %v2158, 0
      %v2188 = vsel %vm260, %v2159, 0
      %v2191 = vsel %vm260, %v2160, 0
      %v2194 = vsel %vm260, %v2161, 0
      %v2197 = vsel %vm260, %v2162, 0
      %v2200 = vsel %vm260, %v2163, 0
      %v2203 = vsel %vm260, %v2164, 0
      %v2206 = vsel %vm260, %v2165, 0
      %v2209 = vsel %vm260, %v2166, 0
      %v2212 = vsel %vm260, %v2167, 0
      %v2215 = vsel %vm260, %v2168, 0
      %v2218 = vsel %vm260, %v2169, 0
      %v2221 = vand.u32 %v2171, %v312
      %2223 = vmatprep.subr.bf16.mxu0 0
      %2224 = vmatpush1.bf16.msra.mxu0 %v2221
      %2225 = vmatprep.subr.bf16.mxu0 0
      %2226 = vmatpush1.bf16.msra.mxu0 0
      %2227 = vmatprep.subr.bf16.mxu0 0
      %2228 = vmatpush1.bf16.msra.mxu0 0
      %2229 = vmatprep.subr.bf16.mxu0 0
      %2230 = vmatpush1.bf16.msra.mxu0 0
      %2231 = vmatprep.subr.bf16.mxu0 0
      %2232 = vmatpush1.bf16.msra.mxu0 0
      %2233 = vmatprep.subr.bf16.mxu0 0
      %2234 = vmatpush1.bf16.msra.mxu0 0
      %2235 = vmatprep.subr.bf16.mxu0 0
      %2236 = vmatpush1.bf16.msra.mxu0 0
      %2237 = vmatprep.subr.bf16.mxu0 0
      %2238 = vmatpush1.bf16.msra.mxu0 0
      %2239 = vmatprep.subr.bf16.mxu0 0
      %2240 = vmatpush1.bf16.msra.mxu0 0
      %2241 = vmatprep.subr.bf16.mxu0 0
      %2242 = vmatpush1.bf16.msra.mxu0 0
      %2243 = vmatprep.subr.bf16.mxu0 0
      %2244 = vmatpush1.bf16.msra.mxu0 0
      %2245 = vmatprep.subr.bf16.mxu0 0
      %2246 = vmatpush1.bf16.msra.mxu0 0
      %2247 = vmatprep.subr.bf16.mxu0 0
      %2248 = vmatpush1.bf16.msra.mxu0 0
      %2249 = vmatprep.subr.bf16.mxu0 0
      %2250 = vmatpush1.bf16.msra.mxu0 0
      %2251 = vmatprep.subr.bf16.mxu0 0
      %2252 = vmatpush1.bf16.msra.mxu0 0
      %2253 = vmatprep.subr.bf16.mxu0 0
      %2254 = vmatpush1.bf16.msra.mxu0 0
      %2255 = vmatprep.mubr.bf16.mxu0 0
      %2256 = vmatmul.mubr.bf16.gmra.mrb[0].mxu0 %v2173
      %v2257 = vpop.f32.mrb[0].mxu0
      %v2258 = vadd.f32 0.0, %v2257
      %v2259 = vpop.f32.mrb[0].mxu0
      %v2260 = vpop.f32.mrb[0].mxu0
      %v2261 = vadd.f32 0.0, %v2260
      %v2262 = vpop.f32.mrb[0].mxu0
      %2263 = vmatprep.mubr.bf16.mxu0 0
      %2264 = vmatmul.mubr.bf16.gmra.mrb[0].mxu0 %v2176
      %v2265 = vpop.f32.mrb[0].mxu0
      %v2266 = vadd.f32 0.0, %v2265
      %v2267 = vpop.f32.mrb[0].mxu0
      %v2268 = vpop.f32.mrb[0].mxu0
      %v2269 = vadd.f32 0.0, %v2268
      %v2270 = vpop.f32.mrb[0].mxu0
      %2271 = vmatprep.mubr.bf16.mxu0 0
      %2272 = vmatmul.mubr.bf16.gmra.mrb[0].mxu0 %v2179
      %v2273 = vpop.f32.mrb[0].mxu0
      %v2274 = vadd.f32 0.0, %v2273
      %v2275 = vpop.f32.mrb[0].mxu0
      %v2276 = vpop.f32.mrb[0].mxu0
      %v2277 = vadd.f32 0.0, %v2276
      %v2278 = vpop.f32.mrb[0].mxu0
      %2279 = vmatprep.mubr.bf16.mxu0 0
      %2280 = vmatmul.mubr.bf16.gmra.mrb[0].mxu0 %v2182
      %v2281 = vpop.f32.mrb[0].mxu0
      %v2282 = vadd.f32 0.0, %v2281
      %v2283 = vpop.f32.mrb[0].mxu0
      %v2284 = vpop.f32.mrb[0].mxu0
      %v2285 = vadd.f32 0.0, %v2284
      %v2286 = vpop.f32.mrb[0].mxu0
      %2287 = vmatprep.mubr.bf16.mxu0 0
      %2288 = vmatmul.mubr.bf16.gmra.mrb[0].mxu0 %v2185
      %v2289 = vpop.f32.mrb[0].mxu0
      %v2290 = vadd.f32 0.0, %v2289
      %v2291 = vpop.f32.mrb[0].mxu0
      %v2292 = vpop.f32.mrb[0].mxu0
      %v2293 = vadd.f32 0.0, %v2292
      %v2294 = vpop.f32.mrb[0].mxu0
      %2295 = vmatprep.mubr.bf16.mxu0 0
      %2296 = vmatmul.mubr.bf16.gmra.mrb[0].mxu0 %v2188
      %v2297 = vpop.f32.mrb[0].mxu0
      %v2298 = vadd.f32 0.0, %v2297
      %v2299 = vpop.f32.mrb[0].mxu0
      %v2300 = vpop.f32.mrb[0].mxu0
      %v2301 = vadd.f32 0.0, %v2300
      %v2302 = vpop.f32.mrb[0].mxu0
      %2303 = vmatprep.mubr.bf16.mxu0 0
      %2304 = vmatmul.mubr.bf16.gmra.mrb[0].mxu0 %v2191
      %v2305 = vpop.f32.mrb[0].mxu0
      %v2306 = vadd.f32 0.0, %v2305
      %v2307 = vpop.f32.mrb[0].mxu0
      %v2308 = vpop.f32.mrb[0].mxu0
      %v2309 = vadd.f32 0.0, %v2308
      %v2310 = vpop.f32.mrb[0].mxu0
      %2311 = vmatprep.mubr.bf16.mxu0 0
      %2312 = vmatmul.mubr.bf16.gmra.mrb[0].mxu0 %v2194
      %v2313 = vpop.f32.mrb[0].mxu0
      %v2314 = vadd.f32 0.0, %v2313
      %v2315 = vpop.f32.mrb[0].mxu0
      %v2316 = vpop.f32.mrb[0].mxu0
      %v2317 = vadd.f32 0.0, %v2316
      %v2318 = vpop.f32.mrb[0].mxu0
      %2319 = vmatprep.mubr.bf16.mxu0 0
      %2320 = vmatmul.mubr.bf16.gmra.mrb[0].mxu0 %v2197
      %v2321 = vpop.f32.mrb[0].mxu0
      %v2322 = vadd.f32 0.0, %v2321
      %v2323 = vpop.f32.mrb[0].mxu0
      %v2324 = vpop.f32.mrb[0].mxu0
      %v2325 = vadd.f32 0.0, %v2324
      %v2326 = vpop.f32.mrb[0].mxu0
      %2327 = vmatprep.mubr.bf16.mxu0 0
      %2328 = vmatmul.mubr.bf16.gmra.mrb[0].mxu0 %v2200
      %v2329 = vpop.f32.mrb[0].mxu0
      %v2330 = vadd.f32 0.0, %v2329
      %v2331 = vpop.f32.mrb[0].mxu0
      %v2332 = vpop.f32.mrb[0].mxu0
      %v2333 = vadd.f32 0.0, %v2332
      %v2334 = vpop.f32.mrb[0].mxu0
      %2335 = vmatprep.mubr.bf16.mxu0 0
      %2336 = vmatmul.mubr.bf16.gmra.mrb[0].mxu0 %v2203
      %v2337 = vpop.f32.mrb[0].mxu0
      %v2338 = vadd.f32 0.0, %v2337
      %v2339 = vpop.f32.mrb[0].mxu0
      %v2340 = vpop.f32.mrb[0].mxu0
      %v2341 = vadd.f32 0.0, %v2340
      %v2342 = vpop.f32.mrb[0].mxu0
      %2343 = vmatprep.mubr.bf16.mxu0 0
      %2344 = vmatmul.mubr.bf16.gmra.mrb[0].mxu0 %v2206
      %v2345 = vpop.f32.mrb[0].mxu0
      %v2346 = vadd.f32 0.0, %v2345
      %v2347 = vpop.f32.mrb[0].mxu0
      %v2348 = vpop.f32.mrb[0].mxu0
      %v2349 = vadd.f32 0.0, %v2348
      %v2350 = vpop.f32.mrb[0].mxu0
      %2351 = vmatprep.mubr.bf16.mxu0 0
      %2352 = vmatmul.mubr.bf16.gmra.mrb[0].mxu0 %v2209
      %v2353 = vpop.f32.mrb[0].mxu0
      %v2354 = vadd.f32 0.0, %v2353
      %v2355 = vpop.f32.mrb[0].mxu0
      %v2356 = vpop.f32.mrb[0].mxu0
      %v2357 = vadd.f32 0.0, %v2356
      %v2358 = vpop.f32.mrb[0].mxu0
      %2359 = vmatprep.mubr.bf16.mxu0 0
      %2360 = vmatmul.mubr.bf16.gmra.mrb[0].mxu0 %v2212
      %v2361 = vpop.f32.mrb[0].mxu0
      %v2362 = vadd.f32 0.0, %v2361
      %v2363 = vpop.f32.mrb[0].mxu0
      %v2364 = vpop.f32.mrb[0].mxu0
      %v2365 = vadd.f32 0.0, %v2364
      %v2366 = vpop.f32.mrb[0].mxu0
      %2367 = vmatprep.mubr.bf16.mxu0 0
      %2368 = vmatmul.mubr.bf16.gmra.mrb[0].mxu0 %v2215
      %v2369 = vpop.f32.mrb[0].mxu0
      %v2370 = vadd.f32 0.0, %v2369
      %v2371 = vpop.f32.mrb[0].mxu0
      %v2372 = vpop.f32.mrb[0].mxu0
      %v2373 = vadd.f32 0.0, %v2372
      %v2374 = vpop.f32.mrb[0].mxu0
      %2375 = vmatprep.mubr.bf16.mxu0 0
      %2376 = vmatmul.mubr.bf16.gmra.mrb[0].mxu0 %v2218
      %v2377 = vpop.f32.mrb[0].mxu0
      %v2378 = vadd.f32 0.0, %v2377
      %v2379 = vpop.f32.mrb[0].mxu0
      %v2380 = vpop.f32.mrb[0].mxu0
      %v2381 = vadd.f32 0.0, %v2380
      %v2382 = vpop.f32.mrb[0].mxu0
      %2383 = vdwg.mxu0
      %v2384 = vadd.f32 %v2122, %v2258
      %v2385 = vadd.f32 %v2123, %v2261
      %v2386 = vadd.f32 %v2124, %v2266
      %v2387 = vadd.f32 %v2125, %v2269
      %v2388 = vadd.f32 %v2126, %v2274
      %v2389 = vadd.f32 %v2127, %v2277
      %v2390 = vadd.f32 %v2128, %v2282
      %v2391 = vadd.f32 %v2129, %v2285
      %v2392 = vadd.f32 %v2130, %v2290
      %v2393 = vadd.f32 %v2131, %v2293
      %v2394 = vadd.f32 %v2132, %v2298
      %v2395 = vadd.f32 %v2133, %v2301
      %v2396 = vadd.f32 %v2134, %v2306
      %v2397 = vadd.f32 %v2135, %v2309
      %v2398 = vadd.f32 %v2136, %v2314
      %v2399 = vadd.f32 %v2137, %v2317
      %v2400 = vadd.f32 %v2138, %v2322
      %v2401 = vadd.f32 %v2139, %v2325
      %v2402 = vadd.f32 %v2140, %v2330
      %v2403 = vadd.f32 %v2141, %v2333
      %v2404 = vadd.f32 %v2142, %v2338
      %v2405 = vadd.f32 %v2143, %v2341
      %v2406 = vadd.f32 %v2144, %v2346
      %v2407 = vadd.f32 %v2145, %v2349
      %v2408 = vadd.f32 %v2146, %v2354
      %v2409 = vadd.f32 %v2147, %v2357
      %v2410 = vadd.f32 %v2148, %v2362
      %v2411 = vadd.f32 %v2149, %v2365
      %v2412 = vadd.f32 %v2150, %v2370
      %v2413 = vadd.f32 %v2151, %v2373
      %v2414 = vadd.f32 %v2152, %v2378
      %v2415 = vadd.f32 %v2153, %v2381
      %2416 = vst.msk [vmem:[#allocation2] sm:$0xff] %vm477, %v2384
      %2417 = vst.msk [vmem:[#allocation2 + $0x8] sm:$0xff] %vm477, %v2385
      %2418 = vst.msk [vmem:[#allocation2 + $0x10] sm:$0xff] %vm477, %v2386
      %2419 = vst.msk [vmem:[#allocation2 + $0x18] sm:$0xff] %vm477, %v2387
      %2420 = vst.msk [vmem:[#allocation2 + $0x20] sm:$0xff] %vm477, %v2388
      %2421 = vst.msk [vmem:[#allocation2 + $0x28] sm:$0xff] %vm477, %v2389
      %2422 = vst.msk [vmem:[#allocation2 + $0x30] sm:$0xff] %vm477, %v2390
      %2423 = vst.msk [vmem:[#allocation2 + $0x38] sm:$0xff] %vm477, %v2391
      %2424 = vst.msk [vmem:[#allocation2 + $0x40] sm:$0xff] %vm477, %v2392
      %2425 = vst.msk [vmem:[#allocation2 + $0x48] sm:$0xff] %vm477, %v2393
      %2426 = vst.msk [vmem:[#allocation2 + $0x50] sm:$0xff] %vm477, %v2394
      %2427 = vst.msk [vmem:[#allocation2 + $0x58] sm:$0xff] %vm477, %v2395
      %2428 = vst.msk [vmem:[#allocation2 + $0x60] sm:$0xff] %vm477, %v2396
      %2429 = vst.msk [vmem:[#allocation2 + $0x68] sm:$0xff] %vm477, %v2397
      %2430 = vst.msk [vmem:[#allocation2 + $0x70] sm:$0xff] %vm477, %v2398
      %2431 = vst.msk [vmem:[#allocation2 + $0x78] sm:$0xff] %vm477, %v2399
      %2432 = vst.msk [vmem:[#allocation2 + $0x80] sm:$0xff] %vm477, %v2400
      %2433 = vst.msk [vmem:[#allocation2 + $0x88] sm:$0xff] %vm477, %v2401
      %2434 = vst.msk [vmem:[#allocation2 + $0x90] sm:$0xff] %vm477, %v2402
      %2435 = vst.msk [vmem:[#allocation2 + $0x98] sm:$0xff] %vm477, %v2403
      %2436 = vst.msk [vmem:[#allocation2 + $0xa0] sm:$0xff] %vm477, %v2404
      %2437 = vst.msk [vmem:[#allocation2 + $0xa8] sm:$0xff] %vm477, %v2405
      %2438 = vst.msk [vmem:[#allocation2 + $0xb0] sm:$0xff] %vm477, %v2406
      %2439 = vst.msk [vmem:[#allocation2 + $0xb8] sm:$0xff] %vm477, %v2407
      %2440 = vst.msk [vmem:[#allocation2 + $0xc0] sm:$0xff] %vm477, %v2408
      %2441 = vst.msk [vmem:[#allocation2 + $0xc8] sm:$0xff] %vm477, %v2409
      %2442 = vst.msk [vmem:[#allocation2 + $0xd0] sm:$0xff] %vm477, %v2410
      %2443 = vst.msk [vmem:[#allocation2 + $0xd8] sm:$0xff] %vm477, %v2411
      %2444 = vst.msk [vmem:[#allocation2 + $0xe0] sm:$0xff] %vm477, %v2412
      %2445 = vst.msk [vmem:[#allocation2 + $0xe8] sm:$0xff] %vm477, %v2413
      %2446 = vst.msk [vmem:[#allocation2 + $0xf0] sm:$0xff] %vm477, %v2414
      %2447 = vst.msk [vmem:[#allocation2 + $0xf8] sm:$0xff] %vm477, %v2415
      %v2448 = vrot.slane %v241, 1
      %v2449 = vsel %vm1440, %v1500, %v2448
      %v2452 = vsel %vm1440, %v2448, 0.0
      %v2453 = vsel %vm1694, %v1443, 0.0
      %v2454 = vsel %vm1695, %v1445, 0.0
      %v2455 = vsel %vm1696, %v1447, 0.0
      %v2456 = vsel %vm1697, %v1449, 0.0
      %v2457 = vsel %vm1698, %v1451, 0.0
      %v2458 = vsel %vm1699, %v1453, 0.0
      %v2459 = vsel %vm1700, %v1455, 0.0
      %v2460 = vsel %vm1701, %v1457, 0.0
      %v2461 = vsel %vm1702, %v1459, 0.0
      %v2462 = vsel %vm1703, %v1461, 0.0
      %v2463 = vsel %vm1704, %v1463, 0.0
      %v2464 = vsel %vm1705, %v1465, 0.0
      %v2465 = vsel %vm1706, %v1467, 0.0
      %v2466 = vsel %vm1707, %v1469, 0.0
      %v2467 = vsel %vm1708, %v1471, 0.0
      %v2468 = vsel %vm1709, %v1473, 0.0
      %v2469 = vsel %vm1710, %v1475, 0.0
      %v2470 = vsel %vm1711, %v1477, 0.0
      %v2471 = vsel %vm1712, %v1479, 0.0
      %v2472 = vsel %vm1713, %v1481, 0.0
      %v2473 = vsel %vm1714, %v1483, 0.0
      %v2474 = vsel %vm1715, %v1485, 0.0
      %v2475 = vsel %vm1716, %v1487, 0.0
      %v2476 = vsel %vm1717, %v1489, 0.0
      %v2477 = vsel %vm1718, %v1491, 0.0
      %v2478 = vsel %vm1719, %v1493, 0.0
      %v2479 = vsel %vm1720, %v1495, 0.0
      %v2480 = vsel %vm1721, %v1497, 0.0
      %v2481 = vsel %vm1722, %v1499, 0.0
      %v2482 = vsel %vm1723, %v1501, 0.0
      %v2483 = vsel %vm1724, %v2449, 0.0
      %v2484 = vsel %vm1725, %v2452, 0.0
      %v2485 = vld [vmem:[#allocation2] sm:$0xff]
      %v2486 = vld [vmem:[#allocation2 + $0x8] sm:$0xff]
      %v2487 = vld [vmem:[#allocation2 + $0x10] sm:$0xff]
      %v2488 = vld [vmem:[#allocation2 + $0x18] sm:$0xff]
      %v2489 = vld [vmem:[#allocation2 + $0x20] sm:$0xff]
      %v2490 = vld [vmem:[#allocation2 + $0x28] sm:$0xff]
      %v2491 = vld [vmem:[#allocation2 + $0x30] sm:$0xff]
      %v2492 = vld [vmem:[#allocation2 + $0x38] sm:$0xff]
      %v2493 = vld [vmem:[#allocation2 + $0x40] sm:$0xff]
      %v2494 = vld [vmem:[#allocation2 + $0x48] sm:$0xff]
      %v2495 = vld [vmem:[#allocation2 + $0x50] sm:$0xff]
      %v2496 = vld [vmem:[#allocation2 + $0x58] sm:$0xff]
      %v2497 = vld [vmem:[#allocation2 + $0x60] sm:$0xff]
      %v2498 = vld [vmem:[#allocation2 + $0x68] sm:$0xff]
      %v2499 = vld [vmem:[#allocation2 + $0x70] sm:$0xff]
      %v2500 = vld [vmem:[#allocation2 + $0x78] sm:$0xff]
      %v2501 = vld [vmem:[#allocation2 + $0x80] sm:$0xff]
      %v2502 = vld [vmem:[#allocation2 + $0x88] sm:$0xff]
      %v2503 = vld [vmem:[#allocation2 + $0x90] sm:$0xff]
      %v2504 = vld [vmem:[#allocation2 + $0x98] sm:$0xff]
      %v2505 = vld [vmem:[#allocation2 + $0xa0] sm:$0xff]
      %v2506 = vld [vmem:[#allocation2 + $0xa8] sm:$0xff]
      %v2507 = vld [vmem:[#allocation2 + $0xb0] sm:$0xff]
      %v2508 = vld [vmem:[#allocation2 + $0xb8] sm:$0xff]
      %v2509 = vld [vmem:[#allocation2 + $0xc0] sm:$0xff]
      %v2510 = vld [vmem:[#allocation2 + $0xc8] sm:$0xff]
      %v2511 = vld [vmem:[#allocation2 + $0xd0] sm:$0xff]
      %v2512 = vld [vmem:[#allocation2 + $0xd8] sm:$0xff]
      %v2513 = vld [vmem:[#allocation2 + $0xe0] sm:$0xff]
      %v2514 = vld [vmem:[#allocation2 + $0xe8] sm:$0xff]
      %v2515 = vld [vmem:[#allocation2 + $0xf0] sm:$0xff]
      %v2516 = vld [vmem:[#allocation2 + $0xf8] sm:$0xff]
      %v2517 = vpack.c.bf16 %v2454, %v2453
      %v2518 = vpack.c.bf16 %v2456, %v2455
      %v2519 = vpack.c.bf16 %v2458, %v2457
      %v2520 = vpack.c.bf16 %v2460, %v2459
      %v2521 = vpack.c.bf16 %v2462, %v2461
      %v2522 = vpack.c.bf16 %v2464, %v2463
      %v2523 = vpack.c.bf16 %v2466, %v2465
      %v2524 = vpack.c.bf16 %v2468, %v2467
      %v2525 = vpack.c.bf16 %v2470, %v2469
      %v2526 = vpack.c.bf16 %v2472, %v2471
      %v2527 = vpack.c.bf16 %v2474, %v2473
      %v2528 = vpack.c.bf16 %v2476, %v2475
      %v2529 = vpack.c.bf16 %v2478, %v2477
      %v2530 = vpack.c.bf16 %v2480, %v2479
      %v2531 = vpack.c.bf16 %v2482, %v2481
      %v2532 = vpack.c.bf16 %v2484, %v2483
      %s2533 = scalar_lea.vmem %s1, 10
      %v2534 = vld [vmem:[%s2533] sm:$0x3]
      %v2536 = vsel %vm260, %v2517, 0
      %v2539 = vsel %vm260, %v2518, 0
      %v2542 = vsel %vm260, %v2519, 0
      %v2545 = vsel %vm260, %v2520, 0
      %v2548 = vsel %vm260, %v2521, 0
      %v2551 = vsel %vm260, %v2522, 0
      %v2554 = vsel %vm260, %v2523, 0
      %v2557 = vsel %vm260, %v2524, 0
      %v2560 = vsel %vm260, %v2525, 0
      %v2563 = vsel %vm260, %v2526, 0
      %v2566 = vsel %vm260, %v2527, 0
      %v2569 = vsel %vm260, %v2528, 0
      %v2572 = vsel %vm260, %v2529, 0
      %v2575 = vsel %vm260, %v2530, 0
      %v2578 = vsel %vm260, %v2531, 0
      %v2581 = vsel %vm260, %v2532, 0
      %v2584 = vand.u32 %v2534, %v312
      %2586 = vmatprep.subr.bf16.mxu0 0
      %2587 = vmatpush1.bf16.msra.mxu0 %v2584
      %2588 = vmatprep.subr.bf16.mxu0 0
      %2589 = vmatpush1.bf16.msra.mxu0 0
      %2590 = vmatprep.subr.bf16.mxu0 0
      %2591 = vmatpush1.bf16.msra.mxu0 0
      %2592 = vmatprep.subr.bf16.mxu0 0
      %2593 = vmatpush1.bf16.msra.mxu0 0
      %2594 = vmatprep.subr.bf16.mxu0 0
      %2595 = vmatpush1.bf16.msra.mxu0 0
      %2596 = vmatprep.subr.bf16.mxu0 0
      %2597 = vmatpush1.bf16.msra.mxu0 0
      %2598 = vmatprep.subr.bf16.mxu0 0
      %2599 = vmatpush1.bf16.msra.mxu0 0
      %2600 = vmatprep.subr.bf16.mxu0 0
      %2601 = vmatpush1.bf16.msra.mxu0 0
      %2602 = vmatprep.subr.bf16.mxu0 0
      %2603 = vmatpush1.bf16.msra.mxu0 0
      %2604 = vmatprep.subr.bf16.mxu0 0
      %2605 = vmatpush1.bf16.msra.mxu0 0
      %2606 = vmatprep.subr.bf16.mxu0 0
      %2607 = vmatpush1.bf16.msra.mxu0 0
      %2608 = vmatprep.subr.bf16.mxu0 0
      %2609 = vmatpush1.bf16.msra.mxu0 0
      %2610 = vmatprep.subr.bf16.mxu0 0
      %2611 = vmatpush1.bf16.msra.mxu0 0
      %2612 = vmatprep.subr.bf16.mxu0 0
      %2613 = vmatpush1.bf16.msra.mxu0 0
      %2614 = vmatprep.subr.bf16.mxu0 0
      %2615 = vmatpush1.bf16.msra.mxu0 0
      %2616 = vmatprep.subr.bf16.mxu0 0
      %2617 = vmatpush1.bf16.msra.mxu0 0
      %2618 = vmatprep.mubr.bf16.mxu0 0
      %2619 = vmatmul.mubr.bf16.gmra.mrb[0].mxu0 %v2536
      %v2620 = vpop.f32.mrb[0].mxu0
      %v2621 = vadd.f32 0.0, %v2620
      %v2622 = vpop.f32.mrb[0].mxu0
      %v2623 = vpop.f32.mrb[0].mxu0
      %v2624 = vadd.f32 0.0, %v2623
      %v2625 = vpop.f32.mrb[0].mxu0
      %2626 = vmatprep.mubr.bf16.mxu0 0
      %2627 = vmatmul.mubr.bf16.gmra.mrb[0].mxu0 %v2539
      %v2628 = vpop.f32.mrb[0].mxu0
      %v2629 = vadd.f32 0.0, %v2628
      %v2630 = vpop.f32.mrb[0].mxu0
      %v2631 = vpop.f32.mrb[0].mxu0
      %v2632 = vadd.f32 0.0, %v2631
      %v2633 = vpop.f32.mrb[0].mxu0
      %2634 = vmatprep.mubr.bf16.mxu0 0
      %2635 = vmatmul.mubr.bf16.gmra.mrb[0].mxu0 %v2542
      %v2636 = vpop.f32.mrb[0].mxu0
      %v2637 = vadd.f32 0.0, %v2636
      %v2638 = vpop.f32.mrb[0].mxu0
      %v2639 = vpop.f32.mrb[0].mxu0
      %v2640 = vadd.f32 0.0, %v2639
      %v2641 = vpop.f32.mrb[0].mxu0
      %2642 = vmatprep.mubr.bf16.mxu0 0
      %2643 = vmatmul.mubr.bf16.gmra.mrb[0].mxu0 %v2545
      %v2644 = vpop.f32.mrb[0].mxu0
      %v2645 = vadd.f32 0.0, %v2644
      %v2646 = vpop.f32.mrb[0].mxu0
      %v2647 = vpop.f32.mrb[0].mxu0
      %v2648 = vadd.f32 0.0, %v2647
      %v2649 = vpop.f32.mrb[0].mxu0
      %2650 = vmatprep.mubr.bf16.mxu0 0
      %2651 = vmatmul.mubr.bf16.gmra.mrb[0].mxu0 %v2548
      %v2652 = vpop.f32.mrb[0].mxu0
      %v2653 = vadd.f32 0.0, %v2652
      %v2654 = vpop.f32.mrb[0].mxu0
      %v2655 = vpop.f32.mrb[0].mxu0
      %v2656 = vadd.f32 0.0, %v2655
      %v2657 = vpop.f32.mrb[0].mxu0
      %2658 = vmatprep.mubr.bf16.mxu0 0
      %2659 = vmatmul.mubr.bf16.gmra.mrb[0].mxu0 %v2551
      %v2660 = vpop.f32.mrb[0].mxu0
      %v2661 = vadd.f32 0.0, %v2660
      %v2662 = vpop.f32.mrb[0].mxu0
      %v2663 = vpop.f32.mrb[0].mxu0
      %v2664 = vadd.f32 0.0, %v2663
      %v2665 = vpop.f32.mrb[0].mxu0
      %2666 = vmatprep.mubr.bf16.mxu0 0
      %2667 = vmatmul.mubr.bf16.gmra.mrb[0].mxu0 %v2554
      %v2668 = vpop.f32.mrb[0].mxu0
      %v2669 = vadd.f32 0.0, %v2668
      %v2670 = vpop.f32.mrb[0].mxu0
      %v2671 = vpop.f32.mrb[0].mxu0
      %v2672 = vadd.f32 0.0, %v2671
      %v2673 = vpop.f32.mrb[0].mxu0
      %2674 = vmatprep.mubr.bf16.mxu0 0
      %2675 = vmatmul.mubr.bf16.gmra.mrb[0].mxu0 %v2557
      %v2676 = vpop.f32.mrb[0].mxu0
      %v2677 = vadd.f32 0.0, %v2676
      %v2678 = vpop.f32.mrb[0].mxu0
      %v2679 = vpop.f32.mrb[0].mxu0
      %v2680 = vadd.f32 0.0, %v2679
      %v2681 = vpop.f32.mrb[0].mxu0
      %2682 = vmatprep.mubr.bf16.mxu0 0
      %2683 = vmatmul.mubr.bf16.gmra.mrb[0].mxu0 %v2560
      %v2684 = vpop.f32.mrb[0].mxu0
      %v2685 = vadd.f32 0.0, %v2684
      %v2686 = vpop.f32.mrb[0].mxu0
      %v2687 = vpop.f32.mrb[0].mxu0
      %v2688 = vadd.f32 0.0, %v2687
      %v2689 = vpop.f32.mrb[0].mxu0
      %2690 = vmatprep.mubr.bf16.mxu0 0
      %2691 = vmatmul.mubr.bf16.gmra.mrb[0].mxu0 %v2563
      %v2692 = vpop.f32.mrb[0].mxu0
      %v2693 = vadd.f32 0.0, %v2692
      %v2694 = vpop.f32.mrb[0].mxu0
      %v2695 = vpop.f32.mrb[0].mxu0
      %v2696 = vadd.f32 0.0, %v2695
      %v2697 = vpop.f32.mrb[0].mxu0
      %2698 = vmatprep.mubr.bf16.mxu0 0
      %2699 = vmatmul.mubr.bf16.gmra.mrb[0].mxu0 %v2566
      %v2700 = vpop.f32.mrb[0].mxu0
      %v2701 = vadd.f32 0.0, %v2700
      %v2702 = vpop.f32.mrb[0].mxu0
      %v2703 = vpop.f32.mrb[0].mxu0
      %v2704 = vadd.f32 0.0, %v2703
      %v2705 = vpop.f32.mrb[0].mxu0
      %2706 = vmatprep.mubr.bf16.mxu0 0
      %2707 = vmatmul.mubr.bf16.gmra.mrb[0].mxu0 %v2569
      %v2708 = vpop.f32.mrb[0].mxu0
      %v2709 = vadd.f32 0.0, %v2708
      %v2710 = vpop.f32.mrb[0].mxu0
      %v2711 = vpop.f32.mrb[0].mxu0
      %v2712 = vadd.f32 0.0, %v2711
      %v2713 = vpop.f32.mrb[0].mxu0
      %2714 = vmatprep.mubr.bf16.mxu0 0
      %2715 = vmatmul.mubr.bf16.gmra.mrb[0].mxu0 %v2572
      %v2716 = vpop.f32.mrb[0].mxu0
      %v2717 = vadd.f32 0.0, %v2716
      %v2718 = vpop.f32.mrb[0].mxu0
      %v2719 = vpop.f32.mrb[0].mxu0
      %v2720 = vadd.f32 0.0, %v2719
      %v2721 = vpop.f32.mrb[0].mxu0
      %2722 = vmatprep.mubr.bf16.mxu0 0
      %2723 = vmatmul.mubr.bf16.gmra.mrb[0].mxu0 %v2575
      %v2724 = vpop.f32.mrb[0].mxu0
      %v2725 = vadd.f32 0.0, %v2724
      %v2726 = vpop.f32.mrb[0].mxu0
      %v2727 = vpop.f32.mrb[0].mxu0
      %v2728 = vadd.f32 0.0, %v2727
      %v2729 = vpop.f32.mrb[0].mxu0
      %2730 = vmatprep.mubr.bf16.mxu0 0
      %2731 = vmatmul.mubr.bf16.gmra.mrb[0].mxu0 %v2578
      %v2732 = vpop.f32.mrb[0].mxu0
      %v2733 = vadd.f32 0.0, %v2732
      %v2734 = vpop.f32.mrb[0].mxu0
      %v2735 = vpop.f32.mrb[0].mxu0
      %v2736 = vadd.f32 0.0, %v2735
      %v2737 = vpop.f32.mrb[0].mxu0
      %2738 = vmatprep.mubr.bf16.mxu0 0
      %2739 = vmatmul.mubr.bf16.gmra.mrb[0].mxu0 %v2581
      %v2740 = vpop.f32.mrb[0].mxu0
      %v2741 = vadd.f32 0.0, %v2740
      %v2742 = vpop.f32.mrb[0].mxu0
      %v2743 = vpop.f32.mrb[0].mxu0
      %v2744 = vadd.f32 0.0, %v2743
      %v2745 = vpop.f32.mrb[0].mxu0
      %2746 = vdwg.mxu0
      %v2747 = vadd.f32 %v2485, %v2621
      %v2748 = vadd.f32 %v2486, %v2624
      %v2749 = vadd.f32 %v2487, %v2629
      %v2750 = vadd.f32 %v2488, %v2632
      %v2751 = vadd.f32 %v2489, %v2637
      %v2752 = vadd.f32 %v2490, %v2640
      %v2753 = vadd.f32 %v2491, %v2645
      %v2754 = vadd.f32 %v2492, %v2648
      %v2755 = vadd.f32 %v2493, %v2653
      %v2756 = vadd.f32 %v2494, %v2656
      %v2757 = vadd.f32 %v2495, %v2661
      %v2758 = vadd.f32 %v2496, %v2664
      %v2759 = vadd.f32 %v2497, %v2669
      %v2760 = vadd.f32 %v2498, %v2672
      %v2761 = vadd.f32 %v2499, %v2677
      %v2762 = vadd.f32 %v2500, %v2680
      %v2763 = vadd.f32 %v2501, %v2685
      %v2764 = vadd.f32 %v2502, %v2688
      %v2765 = vadd.f32 %v2503, %v2693
      %v2766 = vadd.f32 %v2504, %v2696
      %v2767 = vadd.f32 %v2505, %v2701
      %v2768 = vadd.f32 %v2506, %v2704
      %v2769 = vadd.f32 %v2507, %v2709
      %v2770 = vadd.f32 %v2508, %v2712
      %v2771 = vadd.f32 %v2509, %v2717
      %v2772 = vadd.f32 %v2510, %v2720
      %v2773 = vadd.f32 %v2511, %v2725
      %v2774 = vadd.f32 %v2512, %v2728
      %v2775 = vadd.f32 %v2513, %v2733
      %v2776 = vadd.f32 %v2514, %v2736
      %v2777 = vadd.f32 %v2515, %v2741
      %v2778 = vadd.f32 %v2516, %v2744
      %2779 = vst.msk [vmem:[#allocation2] sm:$0xff] %vm477, %v2747
      %2780 = vst.msk [vmem:[#allocation2 + $0x8] sm:$0xff] %vm477, %v2748
      %2781 = vst.msk [vmem:[#allocation2 + $0x10] sm:$0xff] %vm477, %v2749
      %2782 = vst.msk [vmem:[#allocation2 + $0x18] sm:$0xff] %vm477, %v2750
      %2783 = vst.msk [vmem:[#allocation2 + $0x20] sm:$0xff] %vm477, %v2751
      %2784 = vst.msk [vmem:[#allocation2 + $0x28] sm:$0xff] %vm477, %v2752
      %2785 = vst.msk [vmem:[#allocation2 + $0x30] sm:$0xff] %vm477, %v2753
      %2786 = vst.msk [vmem:[#allocation2 + $0x38] sm:$0xff] %vm477, %v2754
      %2787 = vst.msk [vmem:[#allocation2 + $0x40] sm:$0xff] %vm477, %v2755
      %2788 = vst.msk [vmem:[#allocation2 + $0x48] sm:$0xff] %vm477, %v2756
      %2789 = vst.msk [vmem:[#allocation2 + $0x50] sm:$0xff] %vm477, %v2757
      %2790 = vst.msk [vmem:[#allocation2 + $0x58] sm:$0xff] %vm477, %v2758
      %2791 = vst.msk [vmem:[#allocation2 + $0x60] sm:$0xff] %vm477, %v2759
      %2792 = vst.msk [vmem:[#allocation2 + $0x68] sm:$0xff] %vm477, %v2760
      %2793 = vst.msk [vmem:[#allocation2 + $0x70] sm:$0xff] %vm477, %v2761
      %2794 = vst.msk [vmem:[#allocation2 + $0x78] sm:$0xff] %vm477, %v2762
      %2795 = vst.msk [vmem:[#allocation2 + $0x80] sm:$0xff] %vm477, %v2763
      %2796 = vst.msk [vmem:[#allocation2 + $0x88] sm:$0xff] %vm477, %v2764
      %2797 = vst.msk [vmem:[#allocation2 + $0x90] sm:$0xff] %vm477, %v2765
      %2798 = vst.msk [vmem:[#allocation2 + $0x98] sm:$0xff] %vm477, %v2766
      %2799 = vst.msk [vmem:[#allocation2 + $0xa0] sm:$0xff] %vm477, %v2767
      %2800 = vst.msk [vmem:[#allocation2 + $0xa8] sm:$0xff] %vm477, %v2768
      %2801 = vst.msk [vmem:[#allocation2 + $0xb0] sm:$0xff] %vm477, %v2769
      %2802 = vst.msk [vmem:[#allocation2 + $0xb8] sm:$0xff] %vm477, %v2770
      %2803 = vst.msk [vmem:[#allocation2 + $0xc0] sm:$0xff] %vm477, %v2771
      %2804 = vst.msk [vmem:[#allocation2 + $0xc8] sm:$0xff] %vm477, %v2772
      %2805 = vst.msk [vmem:[#allocation2 + $0xd0] sm:$0xff] %vm477, %v2773
      %2806 = vst.msk [vmem:[#allocation2 + $0xd8] sm:$0xff] %vm477, %v2774
      %2807 = vst.msk [vmem:[#allocation2 + $0xe0] sm:$0xff] %vm477, %v2775
      %2808 = vst.msk [vmem:[#allocation2 + $0xe8] sm:$0xff] %vm477, %v2776
      %2809 = vst.msk [vmem:[#allocation2 + $0xf0] sm:$0xff] %vm477, %v2777
      %2810 = vst.msk [vmem:[#allocation2 + $0xf8] sm:$0xff] %vm477, %v2778
      %v2812 = vsel %vm309, %v2086, 0.0
      %v2813 = vsel %vm790, %v544, 0.0
      %v2814 = vsel %vm791, %v546, 0.0
      %v2815 = vsel %vm792, %v548, 0.0
      %v2816 = vsel %vm793, %v550, 0.0
      %v2817 = vsel %vm794, %v552, 0.0
      %v2818 = vsel %vm795, %v554, 0.0
      %v2819 = vsel %vm796, %v556, 0.0
      %v2820 = vsel %vm797, %v558, 0.0
      %v2821 = vsel %vm798, %v560, 0.0
      %v2822 = vsel %vm799, %v562, 0.0
      %v2823 = vsel %vm800, %v564, 0.0
      %v2824 = vsel %vm801, %v566, 0.0
      %v2825 = vsel %vm802, %v568, 0.0
      %v2826 = vsel %vm803, %v570, 0.0
      %v2827 = vsel %vm804, %v572, 0.0
      %v2828 = vsel %vm805, %v574, 0.0
      %v2829 = vsel %vm806, %v576, 0.0
      %v2830 = vsel %vm807, %v578, 0.0
      %v2831 = vsel %vm808, %v580, 0.0
      %v2832 = vsel %vm809, %v582, 0.0
      %v2833 = vsel %vm810, %v584, 0.0
      %v2834 = vsel %vm811, %v586, 0.0
      %v2835 = vsel %vm812, %v588, 0.0
      %v2836 = vsel %vm813, %v590, 0.0
      %v2837 = vsel %vm814, %v592, 0.0
      %v2838 = vsel %vm815, %v594, 0.0
      %v2839 = vsel %vm816, %v596, 0.0
      %v2840 = vsel %vm817, %v598, 0.0
      %v2841 = vsel %vm818, %v2085, 0.0
      %v2842 = vsel %vm819, %v2087, 0.0
      %v2843 = vsel %vm820, %v2812, 0.0
      %v2844 = vld [vmem:[#allocation2] sm:$0xff]
      %v2845 = vld [vmem:[#allocation2 + $0x8] sm:$0xff]
      %v2846 = vld [vmem:[#allocation2 + $0x10] sm:$0xff]
      %v2847 = vld [vmem:[#allocation2 + $0x18] sm:$0xff]
      %v2848 = vld [vmem:[#allocation2 + $0x20] sm:$0xff]
      %v2849 = vld [vmem:[#allocation2 + $0x28] sm:$0xff]
      %v2850 = vld [vmem:[#allocation2 + $0x30] sm:$0xff]
      %v2851 = vld [vmem:[#allocation2 + $0x38] sm:$0xff]
      %v2852 = vld [vmem:[#allocation2 + $0x40] sm:$0xff]
      %v2853 = vld [vmem:[#allocation2 + $0x48] sm:$0xff]
      %v2854 = vld [vmem:[#allocation2 + $0x50] sm:$0xff]
      %v2855 = vld [vmem:[#allocation2 + $0x58] sm:$0xff]
      %v2856 = vld [vmem:[#allocation2 + $0x60] sm:$0xff]
      %v2857 = vld [vmem:[#allocation2 + $0x68] sm:$0xff]
      %v2858 = vld [vmem:[#allocation2 + $0x70] sm:$0xff]
      %v2859 = vld [vmem:[#allocation2 + $0x78] sm:$0xff]
      %v2860 = vld [vmem:[#allocation2 + $0x80] sm:$0xff]
      %v2861 = vld [vmem:[#allocation2 + $0x88] sm:$0xff]
      %v2862 = vld [vmem:[#allocation2 + $0x90] sm:$0xff]
      %v2863 = vld [vmem:[#allocation2 + $0x98] sm:$0xff]
      %v2864 = vld [vmem:[#allocation2 + $0xa0] sm:$0xff]
      %v2865 = vld [vmem:[#allocation2 + $0xa8] sm:$0xff]
      %v2866 = vld [vmem:[#allocation2 + $0xb0] sm:$0xff]
      %v2867 = vld [vmem:[#allocation2 + $0xb8] sm:$0xff]
      %v2868 = vld [vmem:[#allocation2 + $0xc0] sm:$0xff]
      %v2869 = vld [vmem:[#allocation2 + $0xc8] sm:$0xff]
      %v2870 = vld [vmem:[#allocation2 + $0xd0] sm:$0xff]
      %v2871 = vld [vmem:[#allocation2 + $0xd8] sm:$0xff]
      %v2872 = vld [vmem:[#allocation2 + $0xe0] sm:$0xff]
      %v2873 = vld [vmem:[#allocation2 + $0xe8] sm:$0xff]
      %v2874 = vld [vmem:[#allocation2 + $0xf0] sm:$0xff]
      %v2875 = vld [vmem:[#allocation2 + $0xf8] sm:$0xff]
      %v2876 = vpack.c.bf16 %v2814, %v2813
      %v2877 = vpack.c.bf16 %v2816, %v2815
      %v2878 = vpack.c.bf16 %v2818, %v2817
      %v2879 = vpack.c.bf16 %v2820, %v2819
      %v2880 = vpack.c.bf16 %v2822, %v2821
      %v2881 = vpack.c.bf16 %v2824, %v2823
      %v2882 = vpack.c.bf16 %v2826, %v2825
      %v2883 = vpack.c.bf16 %v2828, %v2827
      %v2884 = vpack.c.bf16 %v2830, %v2829
      %v2885 = vpack.c.bf16 %v2832, %v2831
      %v2886 = vpack.c.bf16 %v2834, %v2833
      %v2887 = vpack.c.bf16 %v2836, %v2835
      %v2888 = vpack.c.bf16 %v2838, %v2837
      %v2889 = vpack.c.bf16 %v2840, %v2839
      %v2890 = vpack.c.bf16 %v2842, %v2841
      %v2891 = vpack.c.bf16 0.0, %v2843
      %s2892 = scalar_lea.vmem %s1, 12
      %v2893 = vld [vmem:[%s2892] sm:$0x3]
      %v2895 = vsel %vm260, %v2876, 0
      %v2898 = vsel %vm260, %v2877, 0
      %v2901 = vsel %vm260, %v2878, 0
      %v2904 = vsel %vm260, %v2879, 0
      %v2907 = vsel %vm260, %v2880, 0
      %v2910 = vsel %vm260, %v2881, 0
      %v2913 = vsel %vm260, %v2882, 0
      %v2916 = vsel %vm260, %v2883, 0
      %v2919 = vsel %vm260, %v2884, 0
      %v2922 = vsel %vm260, %v2885, 0
      %v2925 = vsel %vm260, %v2886, 0
      %v2928 = vsel %vm260, %v2887, 0
      %v2931 = vsel %vm260, %v2888, 0
      %v2934 = vsel %vm260, %v2889, 0
      %v2937 = vsel %vm260, %v2890, 0
      %v2940 = vsel %vm260, %v2891, 0
      %v2943 = vand.u32 %v2893, %v312
      %2945 = vmatprep.subr.bf16.mxu0 0
      %2946 = vmatpush1.bf16.msra.mxu0 %v2943
      %2947 = vmatprep.subr.bf16.mxu0 0
      %2948 = vmatpush1.bf16.msra.mxu0 0
      %2949 = vmatprep.subr.bf16.mxu0 0
      %2950 = vmatpush1.bf16.msra.mxu0 0
      %2951 = vmatprep.subr.bf16.mxu0 0
      %2952 = vmatpush1.bf16.msra.mxu0 0
      %2953 = vmatprep.subr.bf16.mxu0 0
      %2954 = vmatpush1.bf16.msra.mxu0 0
      %2955 = vmatprep.subr.bf16.mxu0 0
      %2956 = vmatpush1.bf16.msra.mxu0 0
      %2957 = vmatprep.subr.bf16.mxu0 0
      %2958 = vmatpush1.bf16.msra.mxu0 0
      %2959 = vmatprep.subr.bf16.mxu0 0
      %2960 = vmatpush1.bf16.msra.mxu0 0
      %2961 = vmatprep.subr.bf16.mxu0 0
      %2962 = vmatpush1.bf16.msra.mxu0 0
      %2963 = vmatprep.subr.bf16.mxu0 0
      %2964 = vmatpush1.bf16.msra.mxu0 0
      %2965 = vmatprep.subr.bf16.mxu0 0
      %2966 = vmatpush1.bf16.msra.mxu0 0
      %2967 = vmatprep.subr.bf16.mxu0 0
      %2968 = vmatpush1.bf16.msra.mxu0 0
      %2969 = vmatprep.subr.bf16.mxu0 0
      %2970 = vmatpush1.bf16.msra.mxu0 0
      %2971 = vmatprep.subr.bf16.mxu0 0
      %2972 = vmatpush1.bf16.msra.mxu0 0
      %2973 = vmatprep.subr.bf16.mxu0 0
      %2974 = vmatpush1.bf16.msra.mxu0 0
      %2975 = vmatprep.subr.bf16.mxu0 0
      %2976 = vmatpush1.bf16.msra.mxu0 0
      %2977 = vmatprep.mubr.bf16.mxu0 0
      %2978 = vmatmul.mubr.bf16.gmra.mrb[0].mxu0 %v2895
      %v2979 = vpop.f32.mrb[0].mxu0
      %v2980 = vadd.f32 0.0, %v2979
      %v2981 = vpop.f32.mrb[0].mxu0
      %v2982 = vpop.f32.mrb[0].mxu0
      %v2983 = vadd.f32 0.0, %v2982
      %v2984 = vpop.f32.mrb[0].mxu0
      %2985 = vmatprep.mubr.bf16.mxu0 0
      %2986 = vmatmul.mubr.bf16.gmra.mrb[0].mxu0 %v2898
      %v2987 = vpop.f32.mrb[0].mxu0
      %v2988 = vadd.f32 0.0, %v2987
      %v2989 = vpop.f32.mrb[0].mxu0
      %v2990 = vpop.f32.mrb[0].mxu0
      %v2991 = vadd.f32 0.0, %v2990
      %v2992 = vpop.f32.mrb[0].mxu0
      %2993 = vmatprep.mubr.bf16.mxu0 0
      %2994 = vmatmul.mubr.bf16.gmra.mrb[0].mxu0 %v2901
      %v2995 = vpop.f32.mrb[0].mxu0
      %v2996 = vadd.f32 0.0, %v2995
      %v2997 = vpop.f32.mrb[0].mxu0
      %v2998 = vpop.f32.mrb[0].mxu0
      %v2999 = vadd.f32 0.0, %v2998
      %v3000 = vpop.f32.mrb[0].mxu0
      %3001 = vmatprep.mubr.bf16.mxu0 0
      %3002 = vmatmul.mubr.bf16.gmra.mrb[0].mxu0 %v2904
      %v3003 = vpop.f32.mrb[0].mxu0
      %v3004 = vadd.f32 0.0, %v3003
      %v3005 = vpop.f32.mrb[0].mxu0
      %v3006 = vpop.f32.mrb[0].mxu0
      %v3007 = vadd.f32 0.0, %v3006
      %v3008 = vpop.f32.mrb[0].mxu0
      %3009 = vmatprep.mubr.bf16.mxu0 0
      %3010 = vmatmul.mubr.bf16.gmra.mrb[0].mxu0 %v2907
      %v3011 = vpop.f32.mrb[0].mxu0
      %v3012 = vadd.f32 0.0, %v3011
      %v3013 = vpop.f32.mrb[0].mxu0
      %v3014 = vpop.f32.mrb[0].mxu0
      %v3015 = vadd.f32 0.0, %v3014
      %v3016 = vpop.f32.mrb[0].mxu0
      %3017 = vmatprep.mubr.bf16.mxu0 0
      %3018 = vmatmul.mubr.bf16.gmra.mrb[0].mxu0 %v2910
      %v3019 = vpop.f32.mrb[0].mxu0
      %v3020 = vadd.f32 0.0, %v3019
      %v3021 = vpop.f32.mrb[0].mxu0
      %v3022 = vpop.f32.mrb[0].mxu0
      %v3023 = vadd.f32 0.0, %v3022
      %v3024 = vpop.f32.mrb[0].mxu0
      %3025 = vmatprep.mubr.bf16.mxu0 0
      %3026 = vmatmul.mubr.bf16.gmra.mrb[0].mxu0 %v2913
      %v3027 = vpop.f32.mrb[0].mxu0
      %v3028 = vadd.f32 0.0, %v3027
      %v3029 = vpop.f32.mrb[0].mxu0
      %v3030 = vpop.f32.mrb[0].mxu0
      %v3031 = vadd.f32 0.0, %v3030
      %v3032 = vpop.f32.mrb[0].mxu0
      %3033 = vmatprep.mubr.bf16.mxu0 0
      %3034 = vmatmul.mubr.bf16.gmra.mrb[0].mxu0 %v2916
      %v3035 = vpop.f32.mrb[0].mxu0
      %v3036 = vadd.f32 0.0, %v3035
      %v3037 = vpop.f32.mrb[0].mxu0
      %v3038 = vpop.f32.mrb[0].mxu0
      %v3039 = vadd.f32 0.0, %v3038
      %v3040 = vpop.f32.mrb[0].mxu0
      %3041 = vmatprep.mubr.bf16.mxu0 0
      %3042 = vmatmul.mubr.bf16.gmra.mrb[0].mxu0 %v2919
      %v3043 = vpop.f32.mrb[0].mxu0
      %v3044 = vadd.f32 0.0, %v3043
      %v3045 = vpop.f32.mrb[0].mxu0
      %v3046 = vpop.f32.mrb[0].mxu0
      %v3047 = vadd.f32 0.0, %v3046
      %v3048 = vpop.f32.mrb[0].mxu0
      %3049 = vmatprep.mubr.bf16.mxu0 0
      %3050 = vmatmul.mubr.bf16.gmra.mrb[0].mxu0 %v2922
      %v3051 = vpop.f32.mrb[0].mxu0
      %v3052 = vadd.f32 0.0, %v3051
      %v3053 = vpop.f32.mrb[0].mxu0
      %v3054 = vpop.f32.mrb[0].mxu0
      %v3055 = vadd.f32 0.0, %v3054
      %v3056 = vpop.f32.mrb[0].mxu0
      %3057 = vmatprep.mubr.bf16.mxu0 0
      %3058 = vmatmul.mubr.bf16.gmra.mrb[0].mxu0 %v2925
      %v3059 = vpop.f32.mrb[0].mxu0
      %v3060 = vadd.f32 0.0, %v3059
      %v3061 = vpop.f32.mrb[0].mxu0
      %v3062 = vpop.f32.mrb[0].mxu0
      %v3063 = vadd.f32 0.0, %v3062
      %v3064 = vpop.f32.mrb[0].mxu0
      %3065 = vmatprep.mubr.bf16.mxu0 0
      %3066 = vmatmul.mubr.bf16.gmra.mrb[0].mxu0 %v2928
      %v3067 = vpop.f32.mrb[0].mxu0
      %v3068 = vadd.f32 0.0, %v3067
      %v3069 = vpop.f32.mrb[0].mxu0
      %v3070 = vpop.f32.mrb[0].mxu0
      %v3071 = vadd.f32 0.0, %v3070
      %v3072 = vpop.f32.mrb[0].mxu0
      %3073 = vmatprep.mubr.bf16.mxu0 0
      %3074 = vmatmul.mubr.bf16.gmra.mrb[0].mxu0 %v2931
      %v3075 = vpop.f32.mrb[0].mxu0
      %v3076 = vadd.f32 0.0, %v3075
      %v3077 = vpop.f32.mrb[0].mxu0
      %v3078 = vpop.f32.mrb[0].mxu0
      %v3079 = vadd.f32 0.0, %v3078
      %v3080 = vpop.f32.mrb[0].mxu0
      %3081 = vmatprep.mubr.bf16.mxu0 0
      %3082 = vmatmul.mubr.bf16.gmra.mrb[0].mxu0 %v2934
      %v3083 = vpop.f32.mrb[0].mxu0
      %v3084 = vadd.f32 0.0, %v3083
      %v3085 = vpop.f32.mrb[0].mxu0
      %v3086 = vpop.f32.mrb[0].mxu0
      %v3087 = vadd.f32 0.0, %v3086
      %v3088 = vpop.f32.mrb[0].mxu0
      %3089 = vmatprep.mubr.bf16.mxu0 0
      %3090 = vmatmul.mubr.bf16.gmra.mrb[0].mxu0 %v2937
      %v3091 = vpop.f32.mrb[0].mxu0
      %v3092 = vadd.f32 0.0, %v3091
      %v3093 = vpop.f32.mrb[0].mxu0
      %v3094 = vpop.f32.mrb[0].mxu0
      %v3095 = vadd.f32 0.0, %v3094
      %v3096 = vpop.f32.mrb[0].mxu0
      %3097 = vmatprep.mubr.bf16.mxu0 0
      %3098 = vmatmul.mubr.bf16.gmra.mrb[0].mxu0 %v2940
      %v3099 = vpop.f32.mrb[0].mxu0
      %v3100 = vadd.f32 0.0, %v3099
      %v3101 = vpop.f32.mrb[0].mxu0
      %v3102 = vpop.f32.mrb[0].mxu0
      %v3103 = vadd.f32 0.0, %v3102
      %v3104 = vpop.f32.mrb[0].mxu0
      %3105 = vdwg.mxu0
      %v3106 = vadd.f32 %v2844, %v2980
      %v3107 = vadd.f32 %v2845, %v2983
      %v3108 = vadd.f32 %v2846, %v2988
      %v3109 = vadd.f32 %v2847, %v2991
      %v3110 = vadd.f32 %v2848, %v2996
      %v3111 = vadd.f32 %v2849, %v2999
      %v3112 = vadd.f32 %v2850, %v3004
      %v3113 = vadd.f32 %v2851, %v3007
      %v3114 = vadd.f32 %v2852, %v3012
      %v3115 = vadd.f32 %v2853, %v3015
      %v3116 = vadd.f32 %v2854, %v3020
      %v3117 = vadd.f32 %v2855, %v3023
      %v3118 = vadd.f32 %v2856, %v3028
      %v3119 = vadd.f32 %v2857, %v3031
      %v3120 = vadd.f32 %v2858, %v3036
      %v3121 = vadd.f32 %v2859, %v3039
      %v3122 = vadd.f32 %v2860, %v3044
      %v3123 = vadd.f32 %v2861, %v3047
      %v3124 = vadd.f32 %v2862, %v3052
      %v3125 = vadd.f32 %v2863, %v3055
      %v3126 = vadd.f32 %v2864, %v3060
      %v3127 = vadd.f32 %v2865, %v3063
      %v3128 = vadd.f32 %v2866, %v3068
      %v3129 = vadd.f32 %v2867, %v3071
      %v3130 = vadd.f32 %v2868, %v3076
      %v3131 = vadd.f32 %v2869, %v3079
      %v3132 = vadd.f32 %v2870, %v3084
      %v3133 = vadd.f32 %v2871, %v3087
      %v3134 = vadd.f32 %v2872, %v3092
      %v3135 = vadd.f32 %v2873, %v3095
      %v3136 = vadd.f32 %v2874, %v3100
      %v3137 = vadd.f32 %v2875, %v3103
      %3138 = vst.msk [vmem:[#allocation2] sm:$0xff] %vm477, %v3106
      %3139 = vst.msk [vmem:[#allocation2 + $0x8] sm:$0xff] %vm477, %v3107
      %3140 = vst.msk [vmem:[#allocation2 + $0x10] sm:$0xff] %vm477, %v3108
      %3141 = vst.msk [vmem:[#allocation2 + $0x18] sm:$0xff] %vm477, %v3109
      %3142 = vst.msk [vmem:[#allocation2 + $0x20] sm:$0xff] %vm477, %v3110
      %3143 = vst.msk [vmem:[#allocation2 + $0x28] sm:$0xff] %vm477, %v3111
      %3144 = vst.msk [vmem:[#allocation2 + $0x30] sm:$0xff] %vm477, %v3112
      %3145 = vst.msk [vmem:[#allocation2 + $0x38] sm:$0xff] %vm477, %v3113
      %3146 = vst.msk [vmem:[#allocation2 + $0x40] sm:$0xff] %vm477, %v3114
      %3147 = vst.msk [vmem:[#allocation2 + $0x48] sm:$0xff] %vm477, %v3115
      %3148 = vst.msk [vmem:[#allocation2 + $0x50] sm:$0xff] %vm477, %v3116
      %3149 = vst.msk [vmem:[#allocation2 + $0x58] sm:$0xff] %vm477, %v3117
      %3150 = vst.msk [vmem:[#allocation2 + $0x60] sm:$0xff] %vm477, %v3118
      %3151 = vst.msk [vmem:[#allocation2 + $0x68] sm:$0xff] %vm477, %v3119
      %3152 = vst.msk [vmem:[#allocation2 + $0x70] sm:$0xff] %vm477, %v3120
      %3153 = vst.msk [vmem:[#allocation2 + $0x78] sm:$0xff] %vm477, %v3121
      %3154 = vst.msk [vmem:[#allocation2 + $0x80] sm:$0xff] %vm477, %v3122
      %3155 = vst.msk [vmem:[#allocation2 + $0x88] sm:$0xff] %vm477, %v3123
      %3156 = vst.msk [vmem:[#allocation2 + $0x90] sm:$0xff] %vm477, %v3124
      %3157 = vst.msk [vmem:[#allocation2 + $0x98] sm:$0xff] %vm477, %v3125
      %3158 = vst.msk [vmem:[#allocation2 + $0xa0] sm:$0xff] %vm477, %v3126
      %3159 = vst.msk [vmem:[#allocation2 + $0xa8] sm:$0xff] %vm477, %v3127
      %3160 = vst.msk [vmem:[#allocation2 + $0xb0] sm:$0xff] %vm477, %v3128
      %3161 = vst.msk [vmem:[#allocation2 + $0xb8] sm:$0xff] %vm477, %v3129
      %3162 = vst.msk [vmem:[#allocation2 + $0xc0] sm:$0xff] %vm477, %v3130
      %3163 = vst.msk [vmem:[#allocation2 + $0xc8] sm:$0xff] %vm477, %v3131
      %3164 = vst.msk [vmem:[#allocation2 + $0xd0] sm:$0xff] %vm477, %v3132
      %3165 = vst.msk [vmem:[#allocation2 + $0xd8] sm:$0xff] %vm477, %v3133
      %3166 = vst.msk [vmem:[#allocation2 + $0xe0] sm:$0xff] %vm477, %v3134
      %3167 = vst.msk [vmem:[#allocation2 + $0xe8] sm:$0xff] %vm477, %v3135
      %3168 = vst.msk [vmem:[#allocation2 + $0xf0] sm:$0xff] %vm477, %v3136
      %3169 = vst.msk [vmem:[#allocation2 + $0xf8] sm:$0xff] %vm477, %v3137
      %v3170 = vld [vmem:[#allocation2] sm:$0xff]
      %v3171 = vld [vmem:[#allocation2 + $0x8] sm:$0xff]
      %v3172 = vld [vmem:[#allocation2 + $0x10] sm:$0xff]
      %v3173 = vld [vmem:[#allocation2 + $0x18] sm:$0xff]
      %v3174 = vld [vmem:[#allocation2 + $0x20] sm:$0xff]
      %v3175 = vld [vmem:[#allocation2 + $0x28] sm:$0xff]
      %v3176 = vld [vmem:[#allocation2 + $0x30] sm:$0xff]
      %v3177 = vld [vmem:[#allocation2 + $0x38] sm:$0xff]
      %v3178 = vld [vmem:[#allocation2 + $0x40] sm:$0xff]
      %v3179 = vld [vmem:[#allocation2 + $0x48] sm:$0xff]
      %v3180 = vld [vmem:[#allocation2 + $0x50] sm:$0xff]
      %v3181 = vld [vmem:[#allocation2 + $0x58] sm:$0xff]
      %v3182 = vld [vmem:[#allocation2 + $0x60] sm:$0xff]
      %v3183 = vld [vmem:[#allocation2 + $0x68] sm:$0xff]
      %v3184 = vld [vmem:[#allocation2 + $0x70] sm:$0xff]
      %v3185 = vld [vmem:[#allocation2 + $0x78] sm:$0xff]
      %v3186 = vld [vmem:[#allocation2 + $0x80] sm:$0xff]
      %v3187 = vld [vmem:[#allocation2 + $0x88] sm:$0xff]
      %v3188 = vld [vmem:[#allocation2 + $0x90] sm:$0xff]
      %v3189 = vld [vmem:[#allocation2 + $0x98] sm:$0xff]
      %v3190 = vld [vmem:[#allocation2 + $0xa0] sm:$0xff]
      %v3191 = vld [vmem:[#allocation2 + $0xa8] sm:$0xff]
      %v3192 = vld [vmem:[#allocation2 + $0xb0] sm:$0xff]
      %v3193 = vld [vmem:[#allocation2 + $0xb8] sm:$0xff]
      %v3194 = vld [vmem:[#allocation2 + $0xc0] sm:$0xff]
      %v3195 = vld [vmem:[#allocation2 + $0xc8] sm:$0xff]
      %v3196 = vld [vmem:[#allocation2 + $0xd0] sm:$0xff]
      %v3197 = vld [vmem:[#allocation2 + $0xd8] sm:$0xff]
      %v3198 = vld [vmem:[#allocation2 + $0xe0] sm:$0xff]
      %v3199 = vld [vmem:[#allocation2 + $0xe8] sm:$0xff]
      %v3200 = vld [vmem:[#allocation2 + $0xf0] sm:$0xff]
      %v3201 = vld [vmem:[#allocation2 + $0xf8] sm:$0xff]
      %s3202 = scalar_lea.vmem %s1, 14
      %v3203 = vld [vmem:[%s3202] sm:$0x3]
      %v3205 = vand.u32 %v3203, %v312
      %3207 = vmatprep.subr.bf16.mxu0 0
      %3208 = vmatpush1.bf16.msra.mxu0 %v3205
      %3209 = vmatprep.subr.bf16.mxu0 0
      %3210 = vmatpush1.bf16.msra.mxu0 0
      %3211 = vmatprep.subr.bf16.mxu0 0
      %3212 = vmatpush1.bf16.msra.mxu0 0
      %3213 = vmatprep.subr.bf16.mxu0 0
      %3214 = vmatpush1.bf16.msra.mxu0 0
      %3215 = vmatprep.subr.bf16.mxu0 0
      %3216 = vmatpush1.bf16.msra.mxu0 0
      %3217 = vmatprep.subr.bf16.mxu0 0
      %3218 = vmatpush1.bf16.msra.mxu0 0
      %3219 = vmatprep.subr.bf16.mxu0 0
      %3220 = vmatpush1.bf16.msra.mxu0 0
      %3221 = vmatprep.subr.bf16.mxu0 0
      %3222 = vmatpush1.bf16.msra.mxu0 0
      %3223 = vmatprep.subr.bf16.mxu0 0
      %3224 = vmatpush1.bf16.msra.mxu0 0
      %3225 = vmatprep.subr.bf16.mxu0 0
      %3226 = vmatpush1.bf16.msra.mxu0 0
      %3227 = vmatprep.subr.bf16.mxu0 0
      %3228 = vmatpush1.bf16.msra.mxu0 0
      %3229 = vmatprep.subr.bf16.mxu0 0
      %3230 = vmatpush1.bf16.msra.mxu0 0
      %3231 = vmatprep.subr.bf16.mxu0 0
      %3232 = vmatpush1.bf16.msra.mxu0 0
      %3233 = vmatprep.subr.bf16.mxu0 0
      %3234 = vmatpush1.bf16.msra.mxu0 0
      %3235 = vmatprep.subr.bf16.mxu0 0
      %3236 = vmatpush1.bf16.msra.mxu0 0
      %3237 = vmatprep.subr.bf16.mxu0 0
      %3238 = vmatpush1.bf16.msra.mxu0 0
      %3239 = vmatprep.mubr.bf16.mxu0 0
      %3240 = vmatmul.mubr.bf16.gmra.mrb[0].mxu0 %v265
      %v3241 = vpop.f32.mrb[0].mxu0
      %v3242 = vadd.f32 0.0, %v3241
      %v3243 = vpop.f32.mrb[0].mxu0
      %v3244 = vpop.f32.mrb[0].mxu0
      %v3245 = vadd.f32 0.0, %v3244
      %v3246 = vpop.f32.mrb[0].mxu0
      %3247 = vmatprep.mubr.bf16.mxu0 0
      %3248 = vmatmul.mubr.bf16.gmra.mrb[0].mxu0 %v268
      %v3249 = vpop.f32.mrb[0].mxu0
      %v3250 = vadd.f32 0.0, %v3249
      %v3251 = vpop.f32.mrb[0].mxu0
      %v3252 = vpop.f32.mrb[0].mxu0
      %v3253 = vadd.f32 0.0, %v3252
      %v3254 = vpop.f32.mrb[0].mxu0
      %3255 = vmatprep.mubr.bf16.mxu0 0
      %3256 = vmatmul.mubr.bf16.gmra.mrb[0].mxu0 %v271
      %v3257 = vpop.f32.mrb[0].mxu0
      %v3258 = vadd.f32 0.0, %v3257
      %v3259 = vpop.f32.mrb[0].mxu0
      %v3260 = vpop.f32.mrb[0].mxu0
      %v3261 = vadd.f32 0.0, %v3260
      %v3262 = vpop.f32.mrb[0].mxu0
      %3263 = vmatprep.mubr.bf16.mxu0 0
      %3264 = vmatmul.mubr.bf16.gmra.mrb[0].mxu0 %v274
      %v3265 = vpop.f32.mrb[0].mxu0
      %v3266 = vadd.f32 0.0, %v3265
      %v3267 = vpop.f32.mrb[0].mxu0
      %v3268 = vpop.f32.mrb[0].mxu0
      %v3269 = vadd.f32 0.0, %v3268
      %v3270 = vpop.f32.mrb[0].mxu0
      %3271 = vmatprep.mubr.bf16.mxu0 0
      %3272 = vmatmul.mubr.bf16.gmra.mrb[0].mxu0 %v277
      %v3273 = vpop.f32.mrb[0].mxu0
      %v3274 = vadd.f32 0.0, %v3273
      %v3275 = vpop.f32.mrb[0].mxu0
      %v3276 = vpop.f32.mrb[0].mxu0
      %v3277 = vadd.f32 0.0, %v3276
      %v3278 = vpop.f32.mrb[0].mxu0
      %3279 = vmatprep.mubr.bf16.mxu0 0
      %3280 = vmatmul.mubr.bf16.gmra.mrb[0].mxu0 %v280
      %v3281 = vpop.f32.mrb[0].mxu0
      %v3282 = vadd.f32 0.0, %v3281
      %v3283 = vpop.f32.mrb[0].mxu0
      %v3284 = vpop.f32.mrb[0].mxu0
      %v3285 = vadd.f32 0.0, %v3284
      %v3286 = vpop.f32.mrb[0].mxu0
      %3287 = vmatprep.mubr.bf16.mxu0 0
      %3288 = vmatmul.mubr.bf16.gmra.mrb[0].mxu0 %v283
      %v3289 = vpop.f32.mrb[0].mxu0
      %v3290 = vadd.f32 0.0, %v3289
      %v3291 = vpop.f32.mrb[0].mxu0
      %v3292 = vpop.f32.mrb[0].mxu0
      %v3293 = vadd.f32 0.0, %v3292
      %v3294 = vpop.f32.mrb[0].mxu0
      %3295 = vmatprep.mubr.bf16.mxu0 0
      %3296 = vmatmul.mubr.bf16.gmra.mrb[0].mxu0 %v286
      %v3297 = vpop.f32.mrb[0].mxu0
      %v3298 = vadd.f32 0.0, %v3297
      %v3299 = vpop.f32.mrb[0].mxu0
      %v3300 = vpop.f32.mrb[0].mxu0
      %v3301 = vadd.f32 0.0, %v3300
      %v3302 = vpop.f32.mrb[0].mxu0
      %3303 = vmatprep.mubr.bf16.mxu0 0
      %3304 = vmatmul.mubr.bf16.gmra.mrb[0].mxu0 %v289
      %v3305 = vpop.f32.mrb[0].mxu0
      %v3306 = vadd.f32 0.0, %v3305
      %v3307 = vpop.f32.mrb[0].mxu0
      %v3308 = vpop.f32.mrb[0].mxu0
      %v3309 = vadd.f32 0.0, %v3308
      %v3310 = vpop.f32.mrb[0].mxu0
      %3311 = vmatprep.mubr.bf16.mxu0 0
      %3312 = vmatmul.mubr.bf16.gmra.mrb[0].mxu0 %v292
      %v3313 = vpop.f32.mrb[0].mxu0
      %v3314 = vadd.f32 0.0, %v3313
      %v3315 = vpop.f32.mrb[0].mxu0
      %v3316 = vpop.f32.mrb[0].mxu0
      %v3317 = vadd.f32 0.0, %v3316
      %v3318 = vpop.f32.mrb[0].mxu0
      %3319 = vmatprep.mubr.bf16.mxu0 0
      %3320 = vmatmul.mubr.bf16.gmra.mrb[0].mxu0 %v295
      %v3321 = vpop.f32.mrb[0].mxu0
      %v3322 = vadd.f32 0.0, %v3321
      %v3323 = vpop.f32.mrb[0].mxu0
      %v3324 = vpop.f32.mrb[0].mxu0
      %v3325 = vadd.f32 0.0, %v3324
      %v3326 = vpop.f32.mrb[0].mxu0
      %3327 = vmatprep.mubr.bf16.mxu0 0
      %3328 = vmatmul.mubr.bf16.gmra.mrb[0].mxu0 %v298
      %v3329 = vpop.f32.mrb[0].mxu0
      %v3330 = vadd.f32 0.0, %v3329
      %v3331 = vpop.f32.mrb[0].mxu0
      %v3332 = vpop.f32.mrb[0].mxu0
      %v3333 = vadd.f32 0.0, %v3332
      %v3334 = vpop.f32.mrb[0].mxu0
      %3335 = vmatprep.mubr.bf16.mxu0 0
      %3336 = vmatmul.mubr.bf16.gmra.mrb[0].mxu0 %v301
      %v3337 = vpop.f32.mrb[0].mxu0
      %v3338 = vadd.f32 0.0, %v3337
      %v3339 = vpop.f32.mrb[0].mxu0
      %v3340 = vpop.f32.mrb[0].mxu0
      %v3341 = vadd.f32 0.0, %v3340
      %v3342 = vpop.f32.mrb[0].mxu0
      %3343 = vmatprep.mubr.bf16.mxu0 0
      %3344 = vmatmul.mubr.bf16.gmra.mrb[0].mxu0 %v304
      %v3345 = vpop.f32.mrb[0].mxu0
      %v3346 = vadd.f32 0.0, %v3345
      %v3347 = vpop.f32.mrb[0].mxu0
      %v3348 = vpop.f32.mrb[0].mxu0
      %v3349 = vadd.f32 0.0, %v3348
      %v3350 = vpop.f32.mrb[0].mxu0
      %3351 = vmatprep.mubr.bf16.mxu0 0
      %3352 = vmatmul.mubr.bf16.gmra.mrb[0].mxu0 %v307
      %v3353 = vpop.f32.mrb[0].mxu0
      %v3354 = vadd.f32 0.0, %v3353
      %v3355 = vpop.f32.mrb[0].mxu0
      %v3356 = vpop.f32.mrb[0].mxu0
      %v3357 = vadd.f32 0.0, %v3356
      %v3358 = vpop.f32.mrb[0].mxu0
      %3359 = vmatprep.mubr.bf16.mxu0 0
      %3360 = vmatmul.mubr.bf16.gmra.mrb[0].mxu0 %v902
      %v3361 = vpop.f32.mrb[0].mxu0
      %v3362 = vadd.f32 0.0, %v3361
      %v3363 = vpop.f32.mrb[0].mxu0
      %v3364 = vpop.f32.mrb[0].mxu0
      %v3365 = vadd.f32 0.0, %v3364
      %v3366 = vpop.f32.mrb[0].mxu0
      %3367 = vdwg.mxu0
      %v3368 = vadd.f32 %v3170, %v3242
      %v3369 = vadd.f32 %v3171, %v3245
      %v3370 = vadd.f32 %v3172, %v3250
      %v3371 = vadd.f32 %v3173, %v3253
      %v3372 = vadd.f32 %v3174, %v3258
      %v3373 = vadd.f32 %v3175, %v3261
      %v3374 = vadd.f32 %v3176, %v3266
      %v3375 = vadd.f32 %v3177, %v3269
      %v3376 = vadd.f32 %v3178, %v3274
      %v3377 = vadd.f32 %v3179, %v3277
      %v3378 = vadd.f32 %v3180, %v3282
      %v3379 = vadd.f32 %v3181, %v3285
      %v3380 = vadd.f32 %v3182, %v3290
      %v3381 = vadd.f32 %v3183, %v3293
      %v3382 = vadd.f32 %v3184, %v3298
      %v3383 = vadd.f32 %v3185, %v3301
      %v3384 = vadd.f32 %v3186, %v3306
      %v3385 = vadd.f32 %v3187, %v3309
      %v3386 = vadd.f32 %v3188, %v3314
      %v3387 = vadd.f32 %v3189, %v3317
      %v3388 = vadd.f32 %v3190, %v3322
      %v3389 = vadd.f32 %v3191, %v3325
      %v3390 = vadd.f32 %v3192, %v3330
      %v3391 = vadd.f32 %v3193, %v3333
      %v3392 = vadd.f32 %v3194, %v3338
      %v3393 = vadd.f32 %v3195, %v3341
      %v3394 = vadd.f32 %v3196, %v3346
      %v3395 = vadd.f32 %v3197, %v3349
      %v3396 = vadd.f32 %v3198, %v3354
      %v3397 = vadd.f32 %v3199, %v3357
      %v3398 = vadd.f32 %v3200, %v3362
      %v3399 = vadd.f32 %v3201, %v3365
      %3400 = vst.msk [vmem:[#allocation2] sm:$0xff] %vm477, %v3368
      %3401 = vst.msk [vmem:[#allocation2 + $0x8] sm:$0xff] %vm477, %v3369
      %3402 = vst.msk [vmem:[#allocation2 + $0x10] sm:$0xff] %vm477, %v3370
      %3403 = vst.msk [vmem:[#allocation2 + $0x18] sm:$0xff] %vm477, %v3371
      %3404 = vst.msk [vmem:[#allocation2 + $0x20] sm:$0xff] %vm477, %v3372
      %3405 = vst.msk [vmem:[#allocation2 + $0x28] sm:$0xff] %vm477, %v3373
      %3406 = vst.msk [vmem:[#allocation2 + $0x30] sm:$0xff] %vm477, %v3374
      %3407 = vst.msk [vmem:[#allocation2 + $0x38] sm:$0xff] %vm477, %v3375
      %3408 = vst.msk [vmem:[#allocation2 + $0x40] sm:$0xff] %vm477, %v3376
      %3409 = vst.msk [vmem:[#allocation2 + $0x48] sm:$0xff] %vm477, %v3377
      %3410 = vst.msk [vmem:[#allocation2 + $0x50] sm:$0xff] %vm477, %v3378
      %3411 = vst.msk [vmem:[#allocation2 + $0x58] sm:$0xff] %vm477, %v3379
      %3412 = vst.msk [vmem:[#allocation2 + $0x60] sm:$0xff] %vm477, %v3380
      %3413 = vst.msk [vmem:[#allocation2 + $0x68] sm:$0xff] %vm477, %v3381
      %3414 = vst.msk [vmem:[#allocation2 + $0x70] sm:$0xff] %vm477, %v3382
      %3415 = vst.msk [vmem:[#allocation2 + $0x78] sm:$0xff] %vm477, %v3383
      %3416 = vst.msk [vmem:[#allocation2 + $0x80] sm:$0xff] %vm477, %v3384
      %3417 = vst.msk [vmem:[#allocation2 + $0x88] sm:$0xff] %vm477, %v3385
      %3418 = vst.msk [vmem:[#allocation2 + $0x90] sm:$0xff] %vm477, %v3386
      %3419 = vst.msk [vmem:[#allocation2 + $0x98] sm:$0xff] %vm477, %v3387
      %3420 = vst.msk [vmem:[#allocation2 + $0xa0] sm:$0xff] %vm477, %v3388
      %3421 = vst.msk [vmem:[#allocation2 + $0xa8] sm:$0xff] %vm477, %v3389
      %3422 = vst.msk [vmem:[#allocation2 + $0xb0] sm:$0xff] %vm477, %v3390
      %3423 = vst.msk [vmem:[#allocation2 + $0xb8] sm:$0xff] %vm477, %v3391
      %3424 = vst.msk [vmem:[#allocation2 + $0xc0] sm:$0xff] %vm477, %v3392
      %3425 = vst.msk [vmem:[#allocation2 + $0xc8] sm:$0xff] %vm477, %v3393
      %3426 = vst.msk [vmem:[#allocation2 + $0xd0] sm:$0xff] %vm477, %v3394
      %3427 = vst.msk [vmem:[#allocation2 + $0xd8] sm:$0xff] %vm477, %v3395
      %3428 = vst.msk [vmem:[#allocation2 + $0xe0] sm:$0xff] %vm477, %v3396
      %3429 = vst.msk [vmem:[#allocation2 + $0xe8] sm:$0xff] %vm477, %v3397
      %3430 = vst.msk [vmem:[#allocation2 + $0xf0] sm:$0xff] %vm477, %v3398
      %3431 = vst.msk [vmem:[#allocation2 + $0xf8] sm:$0xff] %vm477, %v3399
      %v3432 = vsel %vm1694, %v1447, 0.0
      %v3433 = vsel %vm1695, %v1449, 0.0
      %v3434 = vsel %vm1696, %v1451, 0.0
      %v3435 = vsel %vm1697, %v1453, 0.0
      %v3436 = vsel %vm1698, %v1455, 0.0
      %v3437 = vsel %vm1699, %v1457, 0.0
      %v3438 = vsel %vm1700, %v1459, 0.0
      %v3439 = vsel %vm1701, %v1461, 0.0
      %v3440 = vsel %vm1702, %v1463, 0.0
      %v3441 = vsel %vm1703, %v1465, 0.0
      %v3442 = vsel %vm1704, %v1467, 0.0
      %v3443 = vsel %vm1705, %v1469, 0.0
      %v3444 = vsel %vm1706, %v1471, 0.0
      %v3445 = vsel %vm1707, %v1473, 0.0
      %v3446 = vsel %vm1708, %v1475, 0.0
      %v3447 = vsel %vm1709, %v1477, 0.0
      %v3448 = vsel %vm1710, %v1479, 0.0
      %v3449 = vsel %vm1711, %v1481, 0.0
      %v3450 = vsel %vm1712, %v1483, 0.0
      %v3451 = vsel %vm1713, %v1485, 0.0
      %v3452 = vsel %vm1714, %v1487, 0.0
      %v3453 = vsel %vm1715, %v1489, 0.0
      %v3454 = vsel %vm1716, %v1491, 0.0
      %v3455 = vsel %vm1717, %v1493, 0.0
      %v3456 = vsel %vm1718, %v1495, 0.0
      %v3457 = vsel %vm1719, %v1497, 0.0
      %v3458 = vsel %vm1720, %v1499, 0.0
      %v3459 = vsel %vm1721, %v1501, 0.0
      %v3460 = vsel %vm1722, %v2449, 0.0
      %v3461 = vsel %vm1723, %v2452, 0.0
      %v3462 = vld [vmem:[#allocation2] sm:$0xff]
      %v3463 = vld [vmem:[#allocation2 + $0x8] sm:$0xff]
      %v3464 = vld [vmem:[#allocation2 + $0x10] sm:$0xff]
      %v3465 = vld [vmem:[#allocation2 + $0x18] sm:$0xff]
      %v3466 = vld [vmem:[#allocation2 + $0x20] sm:$0xff]
      %v3467 = vld [vmem:[#allocation2 + $0x28] sm:$0xff]
      %v3468 = vld [vmem:[#allocation2 + $0x30] sm:$0xff]
      %v3469 = vld [vmem:[#allocation2 + $0x38] sm:$0xff]
      %v3470 = vld [vmem:[#allocation2 + $0x40] sm:$0xff]
      %v3471 = vld [vmem:[#allocation2 + $0x48] sm:$0xff]
      %v3472 = vld [vmem:[#allocation2 + $0x50] sm:$0xff]
      %v3473 = vld [vmem:[#allocation2 + $0x58] sm:$0xff]
      %v3474 = vld [vmem:[#allocation2 + $0x60] sm:$0xff]
      %v3475 = vld [vmem:[#allocation2 + $0x68] sm:$0xff]
      %v3476 = vld [vmem:[#allocation2 + $0x70] sm:$0xff]
      %v3477 = vld [vmem:[#allocation2 + $0x78] sm:$0xff]
      %v3478 = vld [vmem:[#allocation2 + $0x80] sm:$0xff]
      %v3479 = vld [vmem:[#allocation2 + $0x88] sm:$0xff]
      %v3480 = vld [vmem:[#allocation2 + $0x90] sm:$0xff]
      %v3481 = vld [vmem:[#allocation2 + $0x98] sm:$0xff]
      %v3482 = vld [vmem:[#allocation2 + $0xa0] sm:$0xff]
      %v3483 = vld [vmem:[#allocation2 + $0xa8] sm:$0xff]
      %v3484 = vld [vmem:[#allocation2 + $0xb0] sm:$0xff]
      %v3485 = vld [vmem:[#allocation2 + $0xb8] sm:$0xff]
      %v3486 = vld [vmem:[#allocation2 + $0xc0] sm:$0xff]
      %v3487 = vld [vmem:[#allocation2 + $0xc8] sm:$0xff]
      %v3488 = vld [vmem:[#allocation2 + $0xd0] sm:$0xff]
      %v3489 = vld [vmem:[#allocation2 + $0xd8] sm:$0xff]
      %v3490 = vld [vmem:[#allocation2 + $0xe0] sm:$0xff]
      %v3491 = vld [vmem:[#allocation2 + $0xe8] sm:$0xff]
      %v3492 = vld [vmem:[#allocation2 + $0xf0] sm:$0xff]
      %v3493 = vld [vmem:[#allocation2 + $0xf8] sm:$0xff]
      %v3494 = vpack.c.bf16 %v3433, %v3432
      %v3495 = vpack.c.bf16 %v3435, %v3434
      %v3496 = vpack.c.bf16 %v3437, %v3436
      %v3497 = vpack.c.bf16 %v3439, %v3438
      %v3498 = vpack.c.bf16 %v3441, %v3440
      %v3499 = vpack.c.bf16 %v3443, %v3442
      %v3500 = vpack.c.bf16 %v3445, %v3444
      %v3501 = vpack.c.bf16 %v3447, %v3446
      %v3502 = vpack.c.bf16 %v3449, %v3448
      %v3503 = vpack.c.bf16 %v3451, %v3450
      %v3504 = vpack.c.bf16 %v3453, %v3452
      %v3505 = vpack.c.bf16 %v3455, %v3454
      %v3506 = vpack.c.bf16 %v3457, %v3456
      %v3507 = vpack.c.bf16 %v3459, %v3458
      %v3508 = vpack.c.bf16 %v3461, %v3460
      %s3509 = scalar_lea.vmem %s1, 16
      %v3510 = vld [vmem:[%s3509] sm:$0x3]
      %v3512 = vsel %vm260, %v3494, 0
      %v3515 = vsel %vm260, %v3495, 0
      %v3518 = vsel %vm260, %v3496, 0
      %v3521 = vsel %vm260, %v3497, 0
      %v3524 = vsel %vm260, %v3498, 0
      %v3527 = vsel %vm260, %v3499, 0
      %v3530 = vsel %vm260, %v3500, 0
      %v3533 = vsel %vm260, %v3501, 0
      %v3536 = vsel %vm260, %v3502, 0
      %v3539 = vsel %vm260, %v3503, 0
      %v3542 = vsel %vm260, %v3504, 0
      %v3545 = vsel %vm260, %v3505, 0
      %v3548 = vsel %vm260, %v3506, 0
      %v3551 = vsel %vm260, %v3507, 0
      %v3554 = vsel %vm260, %v3508, 0
      %v3557 = vand.u32 %v3510, %v312
      %3559 = vmatprep.subr.bf16.mxu0 0
      %3560 = vmatpush1.bf16.msra.mxu0 %v3557
      %3561 = vmatprep.subr.bf16.mxu0 0
      %3562 = vmatpush1.bf16.msra.mxu0 0
      %3563 = vmatprep.subr.bf16.mxu0 0
      %3564 = vmatpush1.bf16.msra.mxu0 0
      %3565 = vmatprep.subr.bf16.mxu0 0
      %3566 = vmatpush1.bf16.msra.mxu0 0
      %3567 = vmatprep.subr.bf16.mxu0 0
      %3568 = vmatpush1.bf16.msra.mxu0 0
      %3569 = vmatprep.subr.bf16.mxu0 0
      %3570 = vmatpush1.bf16.msra.mxu0 0
      %3571 = vmatprep.subr.bf16.mxu0 0
      %3572 = vmatpush1.bf16.msra.mxu0 0
      %3573 = vmatprep.subr.bf16.mxu0 0
      %3574 = vmatpush1.bf16.msra.mxu0 0
      %3575 = vmatprep.subr.bf16.mxu0 0
      %3576 = vmatpush1.bf16.msra.mxu0 0
      %3577 = vmatprep.subr.bf16.mxu0 0
      %3578 = vmatpush1.bf16.msra.mxu0 0
      %3579 = vmatprep.subr.bf16.mxu0 0
      %3580 = vmatpush1.bf16.msra.mxu0 0
      %3581 = vmatprep.subr.bf16.mxu0 0
      %3582 = vmatpush1.bf16.msra.mxu0 0
      %3583 = vmatprep.subr.bf16.mxu0 0
      %3584 = vmatpush1.bf16.msra.mxu0 0
      %3585 = vmatprep.subr.bf16.mxu0 0
      %3586 = vmatpush1.bf16.msra.mxu0 0
      %3587 = vmatprep.subr.bf16.mxu0 0
      %3588 = vmatpush1.bf16.msra.mxu0 0
      %3589 = vmatprep.subr.bf16.mxu0 0
      %3590 = vmatpush1.bf16.msra.mxu0 0
      %3591 = vmatprep.mubr.bf16.mxu0 0
      %3592 = vmatmul.mubr.bf16.gmra.mrb[0].mxu0 %v3512
      %v3593 = vpop.f32.mrb[0].mxu0
      %v3594 = vadd.f32 0.0, %v3593
      %v3595 = vpop.f32.mrb[0].mxu0
      %v3596 = vpop.f32.mrb[0].mxu0
      %v3597 = vadd.f32 0.0, %v3596
      %v3598 = vpop.f32.mrb[0].mxu0
      %3599 = vmatprep.mubr.bf16.mxu0 0
      %3600 = vmatmul.mubr.bf16.gmra.mrb[0].mxu0 %v3515
      %v3601 = vpop.f32.mrb[0].mxu0
      %v3602 = vadd.f32 0.0, %v3601
      %v3603 = vpop.f32.mrb[0].mxu0
      %v3604 = vpop.f32.mrb[0].mxu0
      %v3605 = vadd.f32 0.0, %v3604
      %v3606 = vpop.f32.mrb[0].mxu0
      %3607 = vmatprep.mubr.bf16.mxu0 0
      %3608 = vmatmul.mubr.bf16.gmra.mrb[0].mxu0 %v3518
      %v3609 = vpop.f32.mrb[0].mxu0
      %v3610 = vadd.f32 0.0, %v3609
      %v3611 = vpop.f32.mrb[0].mxu0
      %v3612 = vpop.f32.mrb[0].mxu0
      %v3613 = vadd.f32 0.0, %v3612
      %v3614 = vpop.f32.mrb[0].mxu0
      %3615 = vmatprep.mubr.bf16.mxu0 0
      %3616 = vmatmul.mubr.bf16.gmra.mrb[0].mxu0 %v3521
      %v3617 = vpop.f32.mrb[0].mxu0
      %v3618 = vadd.f32 0.0, %v3617
      %v3619 = vpop.f32.mrb[0].mxu0
      %v3620 = vpop.f32.mrb[0].mxu0
      %v3621 = vadd.f32 0.0, %v3620
      %v3622 = vpop.f32.mrb[0].mxu0
      %3623 = vmatprep.mubr.bf16.mxu0 0
      %3624 = vmatmul.mubr.bf16.gmra.mrb[0].mxu0 %v3524
      %v3625 = vpop.f32.mrb[0].mxu0
      %v3626 = vadd.f32 0.0, %v3625
      %v3627 = vpop.f32.mrb[0].mxu0
      %v3628 = vpop.f32.mrb[0].mxu0
      %v3629 = vadd.f32 0.0, %v3628
      %v3630 = vpop.f32.mrb[0].mxu0
      %3631 = vmatprep.mubr.bf16.mxu0 0
      %3632 = vmatmul.mubr.bf16.gmra.mrb[0].mxu0 %v3527
      %v3633 = vpop.f32.mrb[0].mxu0
      %v3634 = vadd.f32 0.0, %v3633
      %v3635 = vpop.f32.mrb[0].mxu0
      %v3636 = vpop.f32.mrb[0].mxu0
      %v3637 = vadd.f32 0.0, %v3636
      %v3638 = vpop.f32.mrb[0].mxu0
      %3639 = vmatprep.mubr.bf16.mxu0 0
      %3640 = vmatmul.mubr.bf16.gmra.mrb[0].mxu0 %v3530
      %v3641 = vpop.f32.mrb[0].mxu0
      %v3642 = vadd.f32 0.0, %v3641
      %v3643 = vpop.f32.mrb[0].mxu0
      %v3644 = vpop.f32.mrb[0].mxu0
      %v3645 = vadd.f32 0.0, %v3644
      %v3646 = vpop.f32.mrb[0].mxu0
      %3647 = vmatprep.mubr.bf16.mxu0 0
      %3648 = vmatmul.mubr.bf16.gmra.mrb[0].mxu0 %v3533
      %v3649 = vpop.f32.mrb[0].mxu0
      %v3650 = vadd.f32 0.0, %v3649
      %v3651 = vpop.f32.mrb[0].mxu0
      %v3652 = vpop.f32.mrb[0].mxu0
      %v3653 = vadd.f32 0.0, %v3652
      %v3654 = vpop.f32.mrb[0].mxu0
      %3655 = vmatprep.mubr.bf16.mxu0 0
      %3656 = vmatmul.mubr.bf16.gmra.mrb[0].mxu0 %v3536
      %v3657 = vpop.f32.mrb[0].mxu0
      %v3658 = vadd.f32 0.0, %v3657
      %v3659 = vpop.f32.mrb[0].mxu0
      %v3660 = vpop.f32.mrb[0].mxu0
      %v3661 = vadd.f32 0.0, %v3660
      %v3662 = vpop.f32.mrb[0].mxu0
      %3663 = vmatprep.mubr.bf16.mxu0 0
      %3664 = vmatmul.mubr.bf16.gmra.mrb[0].mxu0 %v3539
      %v3665 = vpop.f32.mrb[0].mxu0
      %v3666 = vadd.f32 0.0, %v3665
      %v3667 = vpop.f32.mrb[0].mxu0
      %v3668 = vpop.f32.mrb[0].mxu0
      %v3669 = vadd.f32 0.0, %v3668
      %v3670 = vpop.f32.mrb[0].mxu0
      %3671 = vmatprep.mubr.bf16.mxu0 0
      %3672 = vmatmul.mubr.bf16.gmra.mrb[0].mxu0 %v3542
      %v3673 = vpop.f32.mrb[0].mxu0
      %v3674 = vadd.f32 0.0, %v3673
      %v3675 = vpop.f32.mrb[0].mxu0
      %v3676 = vpop.f32.mrb[0].mxu0
      %v3677 = vadd.f32 0.0, %v3676
      %v3678 = vpop.f32.mrb[0].mxu0
      %3679 = vmatprep.mubr.bf16.mxu0 0
      %3680 = vmatmul.mubr.bf16.gmra.mrb[0].mxu0 %v3545
      %v3681 = vpop.f32.mrb[0].mxu0
      %v3682 = vadd.f32 0.0, %v3681
      %v3683 = vpop.f32.mrb[0].mxu0
      %v3684 = vpop.f32.mrb[0].mxu0
      %v3685 = vadd.f32 0.0, %v3684
      %v3686 = vpop.f32.mrb[0].mxu0
      %3687 = vmatprep.mubr.bf16.mxu0 0
      %3688 = vmatmul.mubr.bf16.gmra.mrb[0].mxu0 %v3548
      %v3689 = vpop.f32.mrb[0].mxu0
      %v3690 = vadd.f32 0.0, %v3689
      %v3691 = vpop.f32.mrb[0].mxu0
      %v3692 = vpop.f32.mrb[0].mxu0
      %v3693 = vadd.f32 0.0, %v3692
      %v3694 = vpop.f32.mrb[0].mxu0
      %3695 = vmatprep.mubr.bf16.mxu0 0
      %3696 = vmatmul.mubr.bf16.gmra.mrb[0].mxu0 %v3551
      %v3697 = vpop.f32.mrb[0].mxu0
      %v3698 = vadd.f32 0.0, %v3697
      %v3699 = vpop.f32.mrb[0].mxu0
      %v3700 = vpop.f32.mrb[0].mxu0
      %v3701 = vadd.f32 0.0, %v3700
      %v3702 = vpop.f32.mrb[0].mxu0
      %3703 = vmatprep.mubr.bf16.mxu0 0
      %3704 = vmatmul.mubr.bf16.gmra.mrb[0].mxu0 %v3554
      %v3705 = vpop.f32.mrb[0].mxu0
      %v3706 = vadd.f32 0.0, %v3705
      %v3707 = vpop.f32.mrb[0].mxu0
      %v3708 = vpop.f32.mrb[0].mxu0
      %v3709 = vadd.f32 0.0, %v3708
      %v3710 = vpop.f32.mrb[0].mxu0
      %3711 = vmatprep.mubr.bf16.mxu0 0
      %3712 = vmatmul.mubr.bf16.gmra.mrb[0].mxu0 %v902
      %v3713 = vpop.f32.mrb[0].mxu0
      %v3714 = vadd.f32 0.0, %v3713
      %v3715 = vpop.f32.mrb[0].mxu0
      %v3716 = vpop.f32.mrb[0].mxu0
      %v3717 = vadd.f32 0.0, %v3716
      %v3718 = vpop.f32.mrb[0].mxu0
      %3719 = vdwg.mxu0
      %v3720 = vadd.f32 %v3462, %v3594
      %v3721 = vadd.f32 %v3463, %v3597
      %v3722 = vadd.f32 %v3464, %v3602
      %v3723 = vadd.f32 %v3465, %v3605
      %v3724 = vadd.f32 %v3466, %v3610
      %v3725 = vadd.f32 %v3467, %v3613
      %v3726 = vadd.f32 %v3468, %v3618
      %v3727 = vadd.f32 %v3469, %v3621
      %v3728 = vadd.f32 %v3470, %v3626
      %v3729 = vadd.f32 %v3471, %v3629
      %v3730 = vadd.f32 %v3472, %v3634
      %v3731 = vadd.f32 %v3473, %v3637
      %v3732 = vadd.f32 %v3474, %v3642
      %v3733 = vadd.f32 %v3475, %v3645
      %v3734 = vadd.f32 %v3476, %v3650
      %v3735 = vadd.f32 %v3477, %v3653
      %v3736 = vadd.f32 %v3478, %v3658
      %v3737 = vadd.f32 %v3479, %v3661
      %v3738 = vadd.f32 %v3480, %v3666
      %v3739 = vadd.f32 %v3481, %v3669
      %v3740 = vadd.f32 %v3482, %v3674
      %v3741 = vadd.f32 %v3483, %v3677
      %v3742 = vadd.f32 %v3484, %v3682
      %v3743 = vadd.f32 %v3485, %v3685
      %v3744 = vadd.f32 %v3486, %v3690
      %v3745 = vadd.f32 %v3487, %v3693
      %v3746 = vadd.f32 %v3488, %v3698
      %v3747 = vadd.f32 %v3489, %v3701
      %v3748 = vadd.f32 %v3490, %v3706
      %v3749 = vadd.f32 %v3491, %v3709
      %v3750 = vadd.f32 %v3492, %v3714
      %v3751 = vadd.f32 %v3493, %v3717
      %3752 = vst.msk [vmem:[#allocation2] sm:$0xff] %vm477, %v3720
      %3753 = vst.msk [vmem:[#allocation2 + $0x8] sm:$0xff] %vm477, %v3721
      %3754 = vst.msk [vmem:[#allocation2 + $0x10] sm:$0xff] %vm477, %v3722
      %3755 = vst.msk [vmem:[#allocation2 + $0x18] sm:$0xff] %vm477, %v3723
      %3756 = vst.msk [vmem:[#allocation2 + $0x20] sm:$0xff] %vm477, %v3724
      %3757 = vst.msk [vmem:[#allocation2 + $0x28] sm:$0xff] %vm477, %v3725
      %3758 = vst.msk [vmem:[#allocation2 + $0x30] sm:$0xff] %vm477, %v3726
      %3759 = vst.msk [vmem:[#allocation2 + $0x38] sm:$0xff] %vm477, %v3727
      %3760 = vst.msk [vmem:[#allocation2 + $0x40] sm:$0xff] %vm477, %v3728
      %3761 = vst.msk [vmem:[#allocation2 + $0x48] sm:$0xff] %vm477, %v3729
      %3762 = vst.msk [vmem:[#allocation2 + $0x50] sm:$0xff] %vm477, %v3730
      %3763 = vst.msk [vmem:[#allocation2 + $0x58] sm:$0xff] %vm477, %v3731
      %3764 = vst.msk [vmem:[#allocation2 + $0x60] sm:$0xff] %vm477, %v3732
      %3765 = vst.msk [vmem:[#allocation2 + $0x68] sm:$0xff] %vm477, %v3733
      %3766 = vst.msk [vmem:[#allocation2 + $0x70] sm:$0xff] %vm477, %v3734
      %3767 = vst.msk [vmem:[#allocation2 + $0x78] sm:$0xff] %vm477, %v3735
      %3768 = vst.msk [vmem:[#allocation2 + $0x80] sm:$0xff] %vm477, %v3736
      %3769 = vst.msk [vmem:[#allocation2 + $0x88] sm:$0xff] %vm477, %v3737
      %3770 = vst.msk [vmem:[#allocation2 + $0x90] sm:$0xff] %vm477, %v3738
      %3771 = vst.msk [vmem:[#allocation2 + $0x98] sm:$0xff] %vm477, %v3739
      %3772 = vst.msk [vmem:[#allocation2 + $0xa0] sm:$0xff] %vm477, %v3740
      %3773 = vst.msk [vmem:[#allocation2 + $0xa8] sm:$0xff] %vm477, %v3741
      %3774 = vst.msk [vmem:[#allocation2 + $0xb0] sm:$0xff] %vm477, %v3742
      %3775 = vst.msk [vmem:[#allocation2 + $0xb8] sm:$0xff] %vm477, %v3743
      %3776 = vst.msk [vmem:[#allocation2 + $0xc0] sm:$0xff] %vm477, %v3744
      %3777 = vst.msk [vmem:[#allocation2 + $0xc8] sm:$0xff] %vm477, %v3745
      %3778 = vst.msk [vmem:[#allocation2 + $0xd0] sm:$0xff] %vm477, %v3746
      %3779 = vst.msk [vmem:[#allocation2 + $0xd8] sm:$0xff] %vm477, %v3747
      %3780 = vst.msk [vmem:[#allocation2 + $0xe0] sm:$0xff] %vm477, %v3748
      %3781 = vst.msk [vmem:[#allocation2 + $0xe8] sm:$0xff] %vm477, %v3749
      %3782 = vst.msk [vmem:[#allocation2 + $0xf0] sm:$0xff] %vm477, %v3750
      %3783 = vst.msk [vmem:[#allocation2 + $0xf8] sm:$0xff] %vm477, %v3751
      %v3784 = vld [vmem:[#allocation2] sm:$0xff]
      %v3785 = vld [vmem:[#allocation2 + $0x8] sm:$0xff]
      %v3786 = vld [vmem:[#allocation2 + $0x10] sm:$0xff]
      %v3787 = vld [vmem:[#allocation2 + $0x18] sm:$0xff]
      %v3788 = vld [vmem:[#allocation2 + $0x20] sm:$0xff]
      %v3789 = vld [vmem:[#allocation2 + $0x28] sm:$0xff]
      %v3790 = vld [vmem:[#allocation2 + $0x30] sm:$0xff]
      %v3791 = vld [vmem:[#allocation2 + $0x38] sm:$0xff]
      %v3792 = vld [vmem:[#allocation2 + $0x40] sm:$0xff]
      %v3793 = vld [vmem:[#allocation2 + $0x48] sm:$0xff]
      %v3794 = vld [vmem:[#allocation2 + $0x50] sm:$0xff]
      %v3795 = vld [vmem:[#allocation2 + $0x58] sm:$0xff]
      %v3796 = vld [vmem:[#allocation2 + $0x60] sm:$0xff]
      %v3797 = vld [vmem:[#allocation2 + $0x68] sm:$0xff]
      %v3798 = vld [vmem:[#allocation2 + $0x70] sm:$0xff]
      %v3799 = vld [vmem:[#allocation2 + $0x78] sm:$0xff]
      %v3800 = vld [vmem:[#allocation2 + $0x80] sm:$0xff]
      %v3801 = vld [vmem:[#allocation2 + $0x88] sm:$0xff]
      %v3802 = vld [vmem:[#allocation2 + $0x90] sm:$0xff]
      %v3803 = vld [vmem:[#allocation2 + $0x98] sm:$0xff]
      %v3804 = vld [vmem:[#allocation2 + $0xa0] sm:$0xff]
      %v3805 = vld [vmem:[#allocation2 + $0xa8] sm:$0xff]
      %v3806 = vld [vmem:[#allocation2 + $0xb0] sm:$0xff]
      %v3807 = vld [vmem:[#allocation2 + $0xb8] sm:$0xff]
      %v3808 = vld [vmem:[#allocation2 + $0xc0] sm:$0xff]
      %v3809 = vld [vmem:[#allocation2 + $0xc8] sm:$0xff]
      %v3810 = vld [vmem:[#allocation2 + $0xd0] sm:$0xff]
      %v3811 = vld [vmem:[#allocation2 + $0xd8] sm:$0xff]
      %v3812 = vld [vmem:[#allocation2 + $0xe0] sm:$0xff]
      %v3813 = vld [vmem:[#allocation2 + $0xe8] sm:$0xff]
      %v3814 = vld [vmem:[#allocation2 + $0xf0] sm:$0xff]
      %v3815 = vld [vmem:[#allocation2 + $0xf8] sm:$0xff]
      %3816 = vst.msk [vmem:[%s143] sm:$0xff] %vm477, %v3784
      %3817 = vst.msk [vmem:[%s143 + $0x8] sm:$0xff] %vm477, %v3785
      %3818 = vst.msk [vmem:[%s143 + $0x10] sm:$0xff] %vm477, %v3786
      %3819 = vst.msk [vmem:[%s143 + $0x18] sm:$0xff] %vm477, %v3787
      %3820 = vst.msk [vmem:[%s143 + $0x20] sm:$0xff] %vm477, %v3788
      %3821 = vst.msk [vmem:[%s143 + $0x28] sm:$0xff] %vm477, %v3789
      %3822 = vst.msk [vmem:[%s143 + $0x30] sm:$0xff] %vm477, %v3790
      %3823 = vst.msk [vmem:[%s143 + $0x38] sm:$0xff] %vm477, %v3791
      %3824 = vst.msk [vmem:[%s143 + $0x40] sm:$0xff] %vm477, %v3792
      %3825 = vst.msk [vmem:[%s143 + $0x48] sm:$0xff] %vm477, %v3793
      %3826 = vst.msk [vmem:[%s143 + $0x50] sm:$0xff] %vm477, %v3794
      %3827 = vst.msk [vmem:[%s143 + $0x58] sm:$0xff] %vm477, %v3795
      %3828 = vst.msk [vmem:[%s143 + $0x60] sm:$0xff] %vm477, %v3796
      %3829 = vst.msk [vmem:[%s143 + $0x68] sm:$0xff] %vm477, %v3797
      %3830 = vst.msk [vmem:[%s143 + $0x70] sm:$0xff] %vm477, %v3798
      %3831 = vst.msk [vmem:[%s143 + $0x78] sm:$0xff] %vm477, %v3799
      %3832 = vst.msk [vmem:[%s143 + $0x80] sm:$0xff] %vm477, %v3800
      %3833 = vst.msk [vmem:[%s143 + $0x88] sm:$0xff] %vm477, %v3801
      %3834 = vst.msk [vmem:[%s143 + $0x90] sm:$0xff] %vm477, %v3802
      %3835 = vst.msk [vmem:[%s143 + $0x98] sm:$0xff] %vm477, %v3803
      %3836 = vst.msk [vmem:[%s143 + $0xa0] sm:$0xff] %vm477, %v3804
      %3837 = vst.msk [vmem:[%s143 + $0xa8] sm:$0xff] %vm477, %v3805
      %3838 = vst.msk [vmem:[%s143 + $0xb0] sm:$0xff] %vm477, %v3806
      %3839 = vst.msk [vmem:[%s143 + $0xb8] sm:$0xff] %vm477, %v3807
      %3840 = vst.msk [vmem:[%s143 + $0xc0] sm:$0xff] %vm477, %v3808
      %3841 = vst.msk [vmem:[%s143 + $0xc8] sm:$0xff] %vm477, %v3809
      %3842 = vst.msk [vmem:[%s143 + $0xd0] sm:$0xff] %vm477, %v3810
      %3843 = vst.msk [vmem:[%s143 + $0xd8] sm:$0xff] %vm477, %v3811
      %3844 = vst.msk [vmem:[%s143 + $0xe0] sm:$0xff] %vm477, %v3812
      %3845 = vst.msk [vmem:[%s143 + $0xe8] sm:$0xff] %vm477, %v3813
      %3846 = vst.msk [vmem:[%s143 + $0xf0] sm:$0xff] %vm477, %v3814
      %3847 = vst.msk [vmem:[%s143 + $0xf8] sm:$0xff] %vm477, %v3815
      %p3848 = scmp.lt.s32.totalorder %s13, 1
      %s3849 = scalar_select %p3848, %s13, 1
      %s3850 = smul.addr %s3849, 32
      %s3851 = smul.addr %s3850, 8
      %s3852 = scalar_lea.vmem %s2, %s3851
      // Predicated region
      $region29: #{tpu_custom_call.1} parent=27 // pred_check
        %p3853 = pneg %p78
      $region30: #{tpu_custom_call.1} parent=27 // pred_check_branch
        %3855 = sbr.rel (%p3853) target = $region32
      $region31: #{tpu_custom_call.1} parent=27 // pred_region
        _
      $region32: #{tpu_custom_call.1} parent=27 // pred_fallthru
        _
    $region28: #{tpu_custom_call.1} parent=5 // pred_fallthru
      _
    %p3856 = scmp.le.s32.totalorder 2, %s8
    // Predicated region
    $region33: #{tpu_custom_call.1} parent=5 // pred_check
      %p3857 = pneg %p3856
    $region34: #{tpu_custom_call.1} parent=5 // pred_check_branch
      %3859 = sbr.rel (%p3857) target = $region36
    $region35: #{tpu_custom_call.1} parent=5 // pred_region
      %s3860 = ssub.s32 %s8, 2
      // Predicated region
      $region37: #{tpu_custom_call.1} parent=35 // pred_check
        %p3861 = pneg %p84
      $region38: #{tpu_custom_call.1} parent=35 // pred_check_branch
        %3863 = sbr.rel (%p3861) target = $region40
      $region39: #{tpu_custom_call.1} parent=35 // pred_region
        %p3864 = scmp.lt.s32.totalorder %s14, 1
        %s3865 = scalar_select %p3864, %s14, 1
        %s3866 = smul.addr %s3865, 32
        %s3867 = smul.addr %s3866, 8
        %s3868 = scalar_lea.vmem %s2, %s3867
      $region40: #{tpu_custom_call.1} parent=35 // pred_fallthru
        _
    $region36: #{tpu_custom_call.1} parent=5 // pred_fallthru
      _
  $region6: #{tpu_custom_call.1} parent=0 // loop_footer
    %s12 = sadd.s32 1, %s8
  $region7: #{tpu_custom_call.1} parent=0 // loop_footer_branch
    %7 = sbr.rel target = $region3
  $region8: #{tpu_custom_call.1} parent=0 // loop_exit
    _

</llo_original>
